<compile_context>
chip_gen: v5e
topology: v5e:2x2
jax: 0.10.0
libtpu: 0.0.40
codegen_flags: <defaults>
</compile_context>

<pallas_src>
import functools

import jax
import jax.numpy as jnp
from jax.experimental import pallas as pl
from jax.experimental.pallas import tpu as pltpu


# ----------------------------- host-side helpers ------------------------------

def _round_up(x, m):
    return (x + m - 1) // m * m


def _pick_tile(dim, pref):
    return pref if (dim >= pref and dim % pref == 0) else dim


def _pick_chunk(T, max_chunk=32):
    tc = min(T, max_chunk)
    while T % tc:
        tc -= 1
    return tc


def _pad_gate_cols(w, H, H_p):
    """(..., 3*H) -> (..., 3*H_p): zero-pad each of the r/z/n gate blocks to H_p."""
    if H == H_p:
        return w
    pads = [(0, 0)] * (w.ndim - 1) + [(0, H_p - H)]
    parts = [jnp.pad(w[..., g * H:(g + 1) * H], pads) for g in range(3)]
    return jnp.concatenate(parts, axis=-1)


def _pad_rows(w, n, n_p):
    return w if n == n_p else jnp.pad(w, ((0, n_p - n), (0, 0)))


# ----------------------------- Pallas kernels ---------------------------------

def _matmul_bias_kernel(x_ref, w_ref, b_ref, o_ref):
    """o = x @ w + b  (one MXU-friendly tile per grid point, lane-dense output)."""
    o_ref[...] = (jnp.dot(x_ref[...], w_ref[...],
                          preferred_element_type=jnp.float32) + b_ref[...])


def _gru_enc_kernel(gx_ref, whh_ref, bhh_ref, h0_ref, state_ref, h_acc, *, tc):
    """GRU recurrence over one time-chunk; emits only the final hidden state.

    gx_ref already contains x_t @ W_ih + b_ih for every step of the chunk.
    """
    c = pl.program_id(0)
    Hp = h_acc.shape[-1]

    @pl.when(c == 0)
    def _():
        h_acc[...] = h0_ref[...]

    whh = whh_ref[...]
    bhh = bhh_ref[...]

    def step(t, h):
        gx = gx_ref[t]                                               # (Bp, 3*Hp)
        gh = jnp.dot(h, whh, preferred_element_type=jnp.float32) + bhh
        r = jax.nn.sigmoid(gx[:, 0 * Hp:1 * Hp] + gh[:, 0 * Hp:1 * Hp])
        z = jax.nn.sigmoid(gx[:, 1 * Hp:2 * Hp] + gh[:, 1 * Hp:2 * Hp])
        n = jnp.tanh(gx[:, 2 * Hp:3 * Hp] + r * gh[:, 2 * Hp:3 * Hp])
        return (1.0 - z) * n + z * h

    h_final = jax.lax.fori_loop(0, tc, step, h_acc[...], unroll=True)
    h_acc[...] = h_final

    @pl.when(c == pl.num_programs(0) - 1)
    def _():
        state_ref[...] = h_final


def _gru_dec_kernel(gx_ref, gb_ref, whh_ref, bhh_ref, h0_ref,
                    h_out_ref, state_ref, h_acc, *, tc):
    """Decoder GRU recurrence; the constant (context @ W_ih_ctx + b_ih) term comes in
    as a per-batch gate bias gb.  Emits per-step hidden states (for the hoisted
    vocab projection) and the final state."""
    c = pl.program_id(0)
    Hp = h_acc.shape[-1]

    @pl.when(c == 0)
    def _():
        h_acc[...] = h0_ref[...]

    gb = gb_ref[...]
    whh = whh_ref[...]
    bhh = bhh_ref[...]

    def step(t, h):
        gx = gx_ref[t] + gb
        gh = jnp.dot(h, whh, preferred_element_type=jnp.float32) + bhh
        r = jax.nn.sigmoid(gx[:, 0 * Hp:1 * Hp] + gh[:, 0 * Hp:1 * Hp])
        z = jax.nn.sigmoid(gx[:, 1 * Hp:2 * Hp] + gh[:, 1 * Hp:2 * Hp])
        n = jnp.tanh(gx[:, 2 * Hp:3 * Hp] + r * gh[:, 2 * Hp:3 * Hp])
        h_new = (1.0 - z) * n + z * h
        h_out_ref[t] = h_new                                         # lane-dense (Bp, Hp)
        return h_new

    h_final = jax.lax.fori_loop(0, tc, step, h_acc[...], unroll=True)
    h_acc[...] = h_final

    @pl.when(c == pl.num_programs(0) - 1)
    def _():
        state_ref[...] = h_final


# -------------------------------- wrappers ------------------------------------

def matmul_bias(x, w, b):
    """Tiled  (M, K) @ (K, N) + (1, N)  with full-K blocks and lane-dense output."""
    M, K = x.shape
    N = w.shape[1]
    tm = _pick_tile(M, 256)
    tn = _pick_tile(N, 512)
    return pl.pallas_call(
        _matmul_bias_kernel,
        out_shape=jax.ShapeDtypeStruct((M, N), jnp.float32),
        grid_spec=pltpu.PrefetchScalarGridSpec(
            num_scalar_prefetch=0,
            grid=(M // tm, N // tn),
            in_specs=[pl.BlockSpec((tm, K), lambda i, j: (i, 0)),
                      pl.BlockSpec((K, tn), lambda i, j: (0, j)),
                      pl.BlockSpec((1, tn), lambda i, j: (0, j))],
            out_specs=pl.BlockSpec((tm, tn), lambda i, j: (i, j))),
        compiler_params=pltpu.CompilerParams(
            dimension_semantics=("parallel", "parallel")),
    )(x, w, b)


def run_gru_encoder(gx, whh, bhh, h0):
    """gx: (T, Bp, 3*Hp) precomputed input gates (incl. b_ih).  Returns final (Bp, Hp)."""
    T, B_p, G = gx.shape
    H_p = whh.shape[0]
    Tc = _pick_chunk(T)
    return pl.pallas_call(
        functools.partial(_gru_enc_kernel, tc=Tc),
        out_shape=jax.ShapeDtypeStruct((B_p, H_p), jnp.float32),
        grid_spec=pltpu.PrefetchScalarGridSpec(
            num_scalar_prefetch=0,
            grid=(T // Tc,),
            in_specs=[pl.BlockSpec((Tc, B_p, G), lambda c: (c, 0, 0)),
                      pl.BlockSpec((H_p, G), lambda c: (0, 0)),
                      pl.BlockSpec((1, G), lambda c: (0, 0)),
                      pl.BlockSpec((B_p, H_p), lambda c: (0, 0))],
            out_specs=pl.BlockSpec((B_p, H_p), lambda c: (0, 0)),
            scratch_shapes=[pltpu.VMEM((B_p, H_p), jnp.float32)]),
        compiler_params=pltpu.CompilerParams(
            dimension_semantics=("arbitrary",)),   # time recurrence -> sequential
    )(gx, whh, bhh, h0)


def run_gru_decoder(gx, gb, whh, bhh, h0):
    """Returns (per-step hidden states (T, Bp, Hp), final state (Bp, Hp))."""
    T, B_p, G = gx.shape
    H_p = whh.shape[0]
    Tc = _pick_chunk(T)
    return pl.pallas_call(
        functools.partial(_gru_dec_kernel, tc=Tc),
        out_shape=(jax.ShapeDtypeStruct((T, B_p, H_p), jnp.float32),
                   jax.ShapeDtypeStruct((B_p, H_p), jnp.float32)),
        grid_spec=pltpu.PrefetchScalarGridSpec(
            num_scalar_prefetch=0,
            grid=(T // Tc,),
            in_specs=[pl.BlockSpec((Tc, B_p, G), lambda c: (c, 0, 0)),
                      pl.BlockSpec((B_p, G), lambda c: (0, 0)),
                      pl.BlockSpec((H_p, G), lambda c: (0, 0)),
                      pl.BlockSpec((1, G), lambda c: (0, 0)),
                      pl.BlockSpec((B_p, H_p), lambda c: (0, 0))],
            out_specs=(pl.BlockSpec((Tc, B_p, H_p), lambda c: (c, 0, 0)),
                       pl.BlockSpec((B_p, H_p), lambda c: (0, 0))),
            scratch_shapes=[pltpu.VMEM((B_p, H_p), jnp.float32)]),
        compiler_params=pltpu.CompilerParams(
            dimension_semantics=("arbitrary",)),
    )(gx, gb, whh, bhh, h0)


@jax.jit
def encoder_decoder_forward(enc_X, dec_X, params):
    """Mirrors EncoderDecoder.forward: enc -> decoder.init_state -> dec."""
    B, T_enc = enc_X.shape
    T_dec = dec_X.shape[1]
    E = params["enc_emb"].shape[1]
    H = params["enc_whh"].shape[0]
    V = params["dense_w"].shape[1]

    B_p = _round_up(B, 8)        # sublane
    H_p = _round_up(H, 128)      # lane
    V_p = _round_up(V, 128)      # lane
    G = 3 * H_p

    # ---- pad parameters to hardware tiles (per-gate column padding) ----
    enc_wih = _pad_gate_cols(params["enc_wih"], H, H_p)                      # (E, G)
    enc_whh = _pad_rows(_pad_gate_cols(params["enc_whh"], H, H_p), H, H_p)   # (Hp, G)
    enc_bih = _pad_gate_cols(params["enc_bih"], H, H_p)                      # (1, G)
    enc_bhh = _pad_gate_cols(params["enc_bhh"], H, H_p)
    dec_wih_x = _pad_gate_cols(params["dec_wih"][:E], H, H_p)                # (E, G)
    dec_wih_c = _pad_rows(_pad_gate_cols(params["dec_wih"][E:], H, H_p), H, H_p)
    dec_whh = _pad_rows(_pad_gate_cols(params["dec_whh"], H, H_p), H, H_p)
    dec_bih = _pad_gate_cols(params["dec_bih"], H, H_p)
    dec_bhh = _pad_gate_cols(params["dec_bhh"], H, H_p)
    dense_w = jnp.zeros((H_p, V_p), jnp.float32).at[:H, :V].set(params["dense_w"])
    dense_b = jnp.zeros((1, V_p), jnp.float32).at[:, :V].set(params["dense_b"])
    zeros_g = jnp.zeros((1, G), jnp.float32)

    # ---- encoder ----
    # gather embeddings directly time-major (no (B,T,E)->(T,B,E) transpose of activations)
    enc_emb = jnp.take(params["enc_emb"], enc_X.T, axis=0)                   # (T, B, E)
    enc_emb = jnp.pad(enc_emb, ((0, 0), (0, B_p - B), (0, 0)))               # (T, Bp, E)
    # input gates for all timesteps at once (bias folded in, off the serial path)
    gx_enc = matmul_bias(enc_emb.reshape(T_enc * B_p, E), enc_wih, enc_bih)
    gx_enc = gx_enc.reshape(T_enc, B_p, G)
    h0 = jnp.zeros((B_p, H_p), jnp.float32)
    enc_state = run_gru_encoder(gx_enc, enc_whh, enc_bhh, h0)                # (Bp, Hp)

    # ---- decoder.init_state(enc_outputs) ----
    dec_init_state = enc_state

    # ---- decoder ----
    dec_emb = jnp.take(params["dec_emb"], dec_X.T, axis=0)
    dec_emb = jnp.pad(dec_emb, ((0, 0), (0, B_p - B), (0, 0)))
    gx_dec = matmul_bias(dec_emb.reshape(T_dec * B_p, E), dec_wih_x, zeros_g)
    gx_dec = gx_dec.reshape(T_dec, B_p, G)
    # constant context contribution + b_ih folded into one per-batch gate bias
    dec_gbias = matmul_bias(enc_state, dec_wih_c, dec_bih)                   # (Bp, G)
    h_all, dec_state = run_gru_decoder(gx_dec, dec_gbias, dec_whh, dec_bhh,
                                       dec_init_state)

    # ---- vocab projection, hoisted out of the recurrence ----
    logits = matmul_bias(h_all.reshape(T_dec * B_p, H_p), dense_w, dense_b)
    logits = logits.reshape(T_dec, B_p, V_p)
    out = jnp.transpose(logits[:, :B, :V], (1, 0, 2))                        # (B, T, V)
    return out, dec_state[None, :B, :H]                                      # (1, B, H)


# -------------------------- pure-JAX reference --------------------------------

def _gru_ref(x_tm, h0, wih, whh, bih, bhh):
    H = h0.shape[-1]

    def step(h, x):
        gx = x @ wih + bih[0]
        gh = h @ whh + bhh[0]
        r = jax.nn.sigmoid(gx[:, :H] + gh[:, :H])
        z = jax.nn.sigmoid(gx[:, H:2 * H] + gh[:, H:2 * H])
        n = jnp.tanh(gx[:, 2 * H:] + r * gh[:, 2 * H:])
        h_new = (1.0 - z) * n + z * h
        return h_new, h_new

    h_final, outs = jax.lax.scan(step, h0, x_tm)
    return outs, h_final


def reference_forward(enc_X, dec_X, params):
    B = enc_X.shape[0]
    H = params["enc_whh"].shape[0]
    enc_emb = jnp.transpose(jnp.take(params["enc_emb"], enc_X, axis=0), (1, 0, 2))
    _, enc_state = _gru_ref(enc_emb, jnp.zeros((B, H), jnp.float32),
                            params["enc_wih"], params["enc_whh"],
                            params["enc_bih"], params["enc_bhh"])
    dec_emb = jnp.transpose(jnp.take(params["dec_emb"], dec_X, axis=0), (1, 0, 2))
    T = dec_emb.shape[0]
    ctx = jnp.broadcast_to(enc_state, (T, B, H))
    xc = jnp.concatenate([dec_emb, ctx], axis=-1)
    outs, dec_state = _gru_ref(xc, enc_state,
                               params["dec_wih"], params["dec_whh"],
                               params["dec_bih"], params["dec_bhh"])
    logits = outs @ params["dense_w"] + params["dense_b"][0]
    return jnp.transpose(logits, (1, 0, 2)), dec_state[None]


# --------------------------------- main ----------------------------------------

if __name__ == "__main__":
    B, T, VOCAB, E, H = 2, 8, 32, 16, 32
    V = VOCAB  # decoder vocab (dense output size)

    key = jax.random.PRNGKey(0)
    ks = jax.random.split(key, 12)
    sc = 0.1
    params = {
        "enc_emb": jax.random.normal(ks[0], (VOCAB, E), jnp.float32) * sc,
        "enc_wih": jax.random.normal(ks[1], (E, 3 * H), jnp.float32) * sc,
        "enc_whh": jax.random.normal(ks[2], (H, 3 * H), jnp.float32) * sc,
        "enc_bih": jax.random.normal(ks[3], (1, 3 * H), jnp.float32) * sc,
        "enc_bhh": jax.random.normal(ks[4], (1, 3 * H), jnp.float32) * sc,
        "dec_emb": jax.random.normal(ks[5], (VOCAB, E), jnp.float32) * sc,
        "dec_wih": jax.random.normal(ks[6], (E + H, 3 * H), jnp.float32) * sc,
        "dec_whh": jax.random.normal(ks[7], (H, 3 * H), jnp.float32) * sc,
        "dec_bih": jax.random.normal(ks[8], (1, 3 * H), jnp.float32) * sc,
        "dec_bhh": jax.random.normal(ks[9], (1, 3 * H), jnp.float32) * sc,
        "dense_w": jax.random.normal(ks[10], (H, V), jnp.float32) * sc,
        "dense_b": jax.random.normal(ks[11], (1, V), jnp.float32) * sc,
    }

    enc_X = jax.random.randint(jax.random.PRNGKey(1), (B, T), 0, VOCAB, jnp.int32)
    dec_X = jax.random.randint(jax.random.PRNGKey(2), (B, T), 0, VOCAB, jnp.int32)

    out, state = encoder_decoder_forward(enc_X, dec_X, params)
    out = jax.block_until_ready(out)
    state = jax.block_until_ready(state)

    ref_out, ref_state = reference_forward(enc_X, dec_X, params)
    assert out.shape == (B, T, V) and state.shape == (1, B, H)
    assert jnp.allclose(out, ref_out, atol=1e-5, rtol=1e-5)
    assert jnp.allclose(state, ref_state, atol=1e-5, rtol=1e-5)

    print("KERNEL_OK")
</pallas_src>

<mosaic_0001>
module attributes {stable_mosaic.version = 11 : i64} {
  func.func @_matmul_bias_kernel(%arg0: i32, %arg1: i32, %arg2: memref<64x16xf32, #tpu.memory_space<vmem>>, %arg3: memref<16x384xf32, #tpu.memory_space<vmem>>, %arg4: memref<1x384xf32, #tpu.memory_space<vmem>>, %arg5: memref<64x384xf32, #tpu.memory_space<vmem>>) attributes {dimension_semantics = [#tpu.dimension_semantics<parallel>, #tpu.dimension_semantics<parallel>], iteration_bounds = array<i64: 1, 1>, scalar_prefetch = 0 : i64, scratch_operands = 0 : i64, tpu.core_type = #tpu.core_type<tc>, window_params = [{transform_indices = @transform_0, window_bounds = array<i64: 64, 16>}, {transform_indices = @transform_1, window_bounds = array<i64: 16, 384>}, {transform_indices = @transform_2, window_bounds = array<i64: 1, 384>}, {transform_indices = @transform_3, window_bounds = array<i64: 64, 384>}]} {
    %c0 = arith.constant 0 : index
    %c0_0 = arith.constant 0 : index
    %0 = vector.load %arg2[%c0, %c0_0] : memref<64x16xf32, #tpu.memory_space<vmem>>, vector<64x16xf32>
    %c0_1 = arith.constant 0 : index
    %c0_2 = arith.constant 0 : index
    %1 = vector.load %arg3[%c0_1, %c0_2] : memref<16x384xf32, #tpu.memory_space<vmem>>, vector<16x384xf32>
    %cst = arith.constant dense<0.000000e+00> : vector<64x384xf32>
    %2 = tpu.matmul %0, %1, %cst {dimension_numbers = #tpu.dot_dimension_numbers<[1], [0], [0], [1], [0, 0, 1, 1], [], []>} : vector<64x16xf32>, vector<16x384xf32>, vector<64x384xf32> -> vector<64x384xf32>
    %c0_3 = arith.constant 0 : index
    %c0_4 = arith.constant 0 : index
    %3 = vector.load %arg4[%c0_3, %c0_4] : memref<1x384xf32, #tpu.memory_space<vmem>>, vector<1x384xf32>
    %4 = vector.broadcast %3 : vector<1x384xf32> to vector<64x384xf32>
    %5 = arith.addf %2, %4 : vector<64x384xf32>
    %c0_5 = arith.constant 0 : index
    %c0_6 = arith.constant 0 : index
    %6 = vector.load %arg5[%c0_5, %c0_6] : memref<64x384xf32, #tpu.memory_space<vmem>>, vector<64x384xf32>
    tpu.vector_store %arg5[%c0_5, %c0_6], %5 {strides = array<i32>} : memref<64x384xf32, #tpu.memory_space<vmem>>, vector<64x384xf32>,
    return
  }
  func.func @transform_0(%arg0: i32, %arg1: i32) -> (i32, i32) {
    %c0_i32 = arith.constant 0 : i32
    %c0_i32_0 = arith.constant 0 : i32
    return %arg0, %c0_i32 : i32, i32
  }
  func.func @transform_1(%arg0: i32, %arg1: i32) -> (i32, i32) {
    %c0_i32 = arith.constant 0 : i32
    %c0_i32_0 = arith.constant 0 : i32
    return %c0_i32, %arg1 : i32, i32
  }
  func.func @transform_2(%arg0: i32, %arg1: i32) -> (i32, i32) {
    %c0_i32 = arith.constant 0 : i32
    %c0_i32_0 = arith.constant 0 : i32
    return %c0_i32, %arg1 : i32, i32
  }
  func.func @transform_3(%arg0: i32, %arg1: i32) -> (i32, i32) {
    %c0_i32 = arith.constant 0 : i32
    return %arg0, %arg1 : i32, i32
  }
}

module attributes {stable_mosaic.version = 11 : i64} {
  func.func @_matmul_bias_kernel(%arg0: i32, %arg1: i32, %arg2: memref<8x128xf32, #tpu.memory_space<vmem>>, %arg3: memref<128x384xf32, #tpu.memory_space<vmem>>, %arg4: memref<1x384xf32, #tpu.memory_space<vmem>>, %arg5: memref<8x384xf32, #tpu.memory_space<vmem>>) attributes {dimension_semantics = [#tpu.dimension_semantics<parallel>, #tpu.dimension_semantics<parallel>], iteration_bounds = array<i64: 1, 1>, scalar_prefetch = 0 : i64, scratch_operands = 0 : i64, tpu.core_type = #tpu.core_type<tc>, window_params = [{transform_indices = @transform_0, window_bounds = array<i64: 8, 128>}, {transform_indices = @transform_1, window_bounds = array<i64: 128, 384>}, {transform_indices = @transform_2, window_bounds = array<i64: 1, 384>}, {transform_indices = @transform_3, window_bounds = array<i64: 8, 384>}]} {
    %c0 = arith.constant 0 : index
    %c0_0 = arith.constant 0 : index
    %0 = vector.load %arg2[%c0, %c0_0] : memref<8x128xf32, #tpu.memory_space<vmem>>, vector<8x128xf32>
    %c0_1 = arith.constant 0 : index
    %c0_2 = arith.constant 0 : index
    %1 = vector.load %arg3[%c0_1, %c0_2] : memref<128x384xf32, #tpu.memory_space<vmem>>, vector<128x384xf32>
    %cst = arith.constant dense<0.000000e+00> : vector<8x384xf32>
    %2 = tpu.matmul %0, %1, %cst {dimension_numbers = #tpu.dot_dimension_numbers<[1], [0], [0], [1], [0, 0, 1, 1], [], []>} : vector<8x128xf32>, vector<128x384xf32>, vector<8x384xf32> -> vector<8x384xf32>
    %c0_3 = arith.constant 0 : index
    %c0_4 = arith.constant 0 : index
    %3 = vector.load %arg4[%c0_3, %c0_4] : memref<1x384xf32, #tpu.memory_space<vmem>>, vector<1x384xf32>
    %4 = vector.broadcast %3 : vector<1x384xf32> to vector<8x384xf32>
    %5 = arith.addf %2, %4 : vector<8x384xf32>
    %c0_5 = arith.constant 0 : index
    %c0_6 = arith.constant 0 : index
    %6 = vector.load %arg5[%c0_5, %c0_6] : memref<8x384xf32, #tpu.memory_space<vmem>>, vector<8x384xf32>
    tpu.vector_store %arg5[%c0_5, %c0_6], %5 {strides = array<i32>} : memref<8x384xf32, #tpu.memory_space<vmem>>, vector<8x384xf32>,
    return
  }
  func.func @transform_0(%arg0: i32, %arg1: i32) -> (i32, i32) {
    %c0_i32 = arith.constant 0 : i32
    %c0_i32_0 = arith.constant 0 : i32
    return %arg0, %c0_i32 : i32, i32
  }
  func.func @transform_1(%arg0: i32, %arg1: i32) -> (i32, i32) {
    %c0_i32 = arith.constant 0 : i32
    %c0_i32_0 = arith.constant 0 : i32
    return %c0_i32, %arg1 : i32, i32
  }
  func.func @transform_2(%arg0: i32, %arg1: i32) -> (i32, i32) {
    %c0_i32 = arith.constant 0 : i32
    %c0_i32_0 = arith.constant 0 : i32
    return %c0_i32, %arg1 : i32, i32
  }
  func.func @transform_3(%arg0: i32, %arg1: i32) -> (i32, i32) {
    %c0_i32 = arith.constant 0 : i32
    return %arg0, %arg1 : i32, i32
  }
}

module attributes {stable_mosaic.version = 11 : i64} {
  func.func @_gru_enc_kernel(%arg0: i32, %arg1: memref<8x8x384xf32, #tpu.memory_space<vmem>>, %arg2: memref<128x384xf32, #tpu.memory_space<vmem>>, %arg3: memref<1x384xf32, #tpu.memory_space<vmem>>, %arg4: memref<8x128xf32, #tpu.memory_space<vmem>>, %arg5: memref<8x128xf32, #tpu.memory_space<vmem>>, %arg6: memref<8x128xf32, #tpu.memory_space<vmem>>) attributes {dimension_semantics = [#tpu.dimension_semantics<arbitrary>], iteration_bounds = array<i64: 1>, scalar_prefetch = 0 : i64, scratch_operands = 1 : i64, tpu.core_type = #tpu.core_type<tc>, window_params = [{transform_indices = @transform_0, window_bounds = array<i64: 8, 8, 384>}, {pipeline_mode = #tpu.pipeline_mode<synchronous>, transform_indices = @transform_1, window_bounds = array<i64: 128, 384>}, {pipeline_mode = #tpu.pipeline_mode<synchronous>, transform_indices = @transform_2, window_bounds = array<i64: 1, 384>}, {pipeline_mode = #tpu.pipeline_mode<synchronous>, transform_indices = @transform_3, window_bounds = array<i64: 8, 128>}, {pipeline_mode = #tpu.pipeline_mode<synchronous>, transform_indices = @transform_4, window_bounds = array<i64: 8, 128>}]} {
    %c0_i32 = arith.constant 0 : i32
    %0 = arith.cmpi eq, %arg0, %c0_i32 : i32
    %1 = arith.extui %0 : i1 to i32
    %c0_i32_0 = arith.constant 0 : i32
    %2 = arith.cmpi ne, %1, %c0_i32_0 : i32
    scf.if %2 {
      %c0_58 = arith.constant 0 : index
      %c0_59 = arith.constant 0 : index
      %266 = vector.load %arg4[%c0_58, %c0_59] : memref<8x128xf32, #tpu.memory_space<vmem>>, vector<8x128xf32>
      %c0_60 = arith.constant 0 : index
      %c0_61 = arith.constant 0 : index
      %267 = vector.load %arg6[%c0_60, %c0_61] : memref<8x128xf32, #tpu.memory_space<vmem>>, vector<8x128xf32>
      tpu.vector_store %arg6[%c0_60, %c0_61], %266 {strides = array<i32>} : memref<8x128xf32, #tpu.memory_space<vmem>>, vector<8x128xf32>,
    } else {
    }
    %c0 = arith.constant 0 : index
    %c0_1 = arith.constant 0 : index
    %3 = vector.load %arg2[%c0, %c0_1] : memref<128x384xf32, #tpu.memory_space<vmem>>, vector<128x384xf32>
    %c0_2 = arith.constant 0 : index
    %c0_3 = arith.constant 0 : index
    %4 = vector.load %arg3[%c0_2, %c0_3] : memref<1x384xf32, #tpu.memory_space<vmem>>, vector<1x384xf32>
    %c0_4 = arith.constant 0 : index
    %c0_5 = arith.constant 0 : index
    %5 = vector.load %arg6[%c0_4, %c0_5] : memref<8x128xf32, #tpu.memory_space<vmem>>, vector<8x128xf32>
    %c0_i32_6 = arith.constant 0 : i32
    %6 = arith.index_cast %c0_i32_6 : i32 to index
    %c0_7 = arith.constant 0 : index
    %c0_8 = arith.constant 0 : index
    %7 = vector.load %arg1[%6, %c0_7, %c0_8] : memref<8x8x384xf32, #tpu.memory_space<vmem>>, vector<1x8x384xf32>
    %8 = vector.shape_cast %7 : vector<1x8x384xf32> to vector<8x384xf32>
    %cst = arith.constant dense<0.000000e+00> : vector<8x384xf32>
    %9 = tpu.matmul %5, %3, %cst {dimension_numbers = #tpu.dot_dimension_numbers<[1], [0], [0], [1], [0, 0, 1, 1], [], []>} : vector<8x128xf32>, vector<128x384xf32>, vector<8x384xf32> -> vector<8x384xf32>
    %10 = vector.broadcast %4 : vector<1x384xf32> to vector<8x384xf32>
    %11 = arith.addf %9, %10 : vector<8x384xf32>
    %12 = vector.extract_strided_slice %8 {offsets = [0, 0], sizes = [8, 128], strides = [1, 1]} : vector<8x384xf32> to vector<8x128xf32>
    %13 = vector.extract_strided_slice %11 {offsets = [0, 0], sizes = [8, 128], strides = [1, 1]} : vector<8x384xf32> to vector<8x128xf32>
    %14 = arith.addf %12, %13 : vector<8x128xf32>
    %15 = arith.negf %14 : vector<8x128xf32>
    %16 = math.exp %15 : vector<8x128xf32>
    %cst_9 = arith.constant 1.000000e+00 : f32
    %17 = vector.broadcast %cst_9 : f32 to vector<8x128xf32>
    %18 = arith.addf %17, %16 : vector<8x128xf32>
    %19 = arith.divf %17, %18 : vector<8x128xf32>
    %20 = vector.extract_strided_slice %8 {offsets = [0, 128], sizes = [8, 128], strides = [1, 1]} : vector<8x384xf32> to vector<8x128xf32>
    %21 = vector.extract_strided_slice %11 {offsets = [0, 128], sizes = [8, 128], strides = [1, 1]} : vector<8x384xf32> to vector<8x128xf32>
    %22 = arith.addf %20, %21 : vector<8x128xf32>
    %23 = arith.negf %22 : vector<8x128xf32>
    %24 = math.exp %23 : vector<8x128xf32>
    %cst_10 = arith.constant 1.000000e+00 : f32
    %25 = vector.broadcast %cst_10 : f32 to vector<8x128xf32>
    %26 = arith.addf %25, %24 : vector<8x128xf32>
    %27 = arith.divf %25, %26 : vector<8x128xf32>
    %28 = vector.extract_strided_slice %8 {offsets = [0, 256], sizes = [8, 128], strides = [1, 1]} : vector<8x384xf32> to vector<8x128xf32>
    %29 = vector.extract_strided_slice %11 {offsets = [0, 256], sizes = [8, 128], strides = [1, 1]} : vector<8x384xf32> to vector<8x128xf32>
    %30 = arith.mulf %19, %29 : vector<8x128xf32>
    %31 = arith.addf %28, %30 : vector<8x128xf32>
    %32 = math.tanh %31 : vector<8x128xf32>
    %cst_11 = arith.constant 1.000000e+00 : f32
    %33 = vector.broadcast %cst_11 : f32 to vector<8x128xf32>
    %34 = arith.subf %33, %27 : vector<8x128xf32>
    %35 = arith.mulf %34, %32 : vector<8x128xf32>
    %36 = arith.mulf %27, %5 : vector<8x128xf32>
    %37 = arith.addf %35, %36 : vector<8x128xf32>
    %c1_i32 = arith.constant 1 : i32
    %38 = arith.index_cast %c1_i32 : i32 to index
    %c0_12 = arith.constant 0 : index
    %c0_13 = arith.constant 0 : index
    %39 = vector.load %arg1[%38, %c0_12, %c0_13] : memref<8x8x384xf32, #tpu.memory_space<vmem>>, vector<1x8x384xf32>
    %40 = vector.shape_cast %39 : vector<1x8x384xf32> to vector<8x384xf32>
    %cst_14 = arith.constant dense<0.000000e+00> : vector<8x384xf32>
    %41 = tpu.matmul %37, %3, %cst_14 {dimension_numbers = #tpu.dot_dimension_numbers<[1], [0], [0], [1], [0, 0, 1, 1], [], []>} : vector<8x128xf32>, vector<128x384xf32>, vector<8x384xf32> -> vector<8x384xf32>
    %42 = vector.broadcast %4 : vector<1x384xf32> to vector<8x384xf32>
    %43 = arith.addf %41, %42 : vector<8x384xf32>
    %44 = vector.extract_strided_slice %40 {offsets = [0, 0], sizes = [8, 128], strides = [1, 1]} : vector<8x384xf32> to vector<8x128xf32>
    %45 = vector.extract_strided_slice %43 {offsets = [0, 0], sizes = [8, 128], strides = [1, 1]} : vector<8x384xf32> to vector<8x128xf32>
    %46 = arith.addf %44, %45 : vector<8x128xf32>
    %47 = arith.negf %46 : vector<8x128xf32>
    %48 = math.exp %47 : vector<8x128xf32>
    %cst_15 = arith.constant 1.000000e+00 : f32
    %49 = vector.broadcast %cst_15 : f32 to vector<8x128xf32>
    %50 = arith.addf %49, %48 : vector<8x128xf32>
    %51 = arith.divf %49, %50 : vector<8x128xf32>
    %52 = vector.extract_strided_slice %40 {offsets = [0, 128], sizes = [8, 128], strides = [1, 1]} : vector<8x384xf32> to vector<8x128xf32>
    %53 = vector.extract_strided_slice %43 {offsets = [0, 128], sizes = [8, 128], strides = [1, 1]} : vector<8x384xf32> to vector<8x128xf32>
    %54 = arith.addf %52, %53 : vector<8x128xf32>
    %55 = arith.negf %54 : vector<8x128xf32>
    %56 = math.exp %55 : vector<8x128xf32>
    %cst_16 = arith.constant 1.000000e+00 : f32
    %57 = vector.broadcast %cst_16 : f32 to vector<8x128xf32>
    %58 = arith.addf %57, %56 : vector<8x128xf32>
    %59 = arith.divf %57, %58 : vector<8x128xf32>
    %60 = vector.extract_strided_slice %40 {offsets = [0, 256], sizes = [8, 128], strides = [1, 1]} : vector<8x384xf32> to vector<8x128xf32>
    %61 = vector.extract_strided_slice %43 {offsets = [0, 256], sizes = [8, 128], strides = [1, 1]} : vector<8x384xf32> to vector<8x128xf32>
    %62 = arith.mulf %51, %61 : vector<8x128xf32>
    %63 = arith.addf %60, %62 : vector<8x128xf32>
    %64 = math.tanh %63 : vector<8x128xf32>
    %cst_17 = arith.constant 1.000000e+00 : f32
    %65 = vector.broadcast %cst_17 : f32 to vector<8x128xf32>
    %66 = arith.subf %65, %59 : vector<8x128xf32>
    %67 = arith.mulf %66, %64 : vector<8x128xf32>
    %68 = arith.mulf %59, %37 : vector<8x128xf32>
    %69 = arith.addf %67, %68 : vector<8x128xf32>
    %c2_i32 = arith.constant 2 : i32
    %70 = arith.index_cast %c2_i32 : i32 to index
    %c0_18 = arith.constant 0 : index
    %c0_19 = arith.constant 0 : index
    %71 = vector.load %arg1[%70, %c0_18, %c0_19] : memref<8x8x384xf32, #tpu.memory_space<vmem>>, vector<1x8x384xf32>
    %72 = vector.shape_cast %71 : vector<1x8x384xf32> to vector<8x384xf32>
    %cst_20 = arith.constant dense<0.000000e+00> : vector<8x384xf32>
    %73 = tpu.matmul %69, %3, %cst_20 {dimension_numbers = #tpu.dot_dimension_numbers<[1], [0], [0], [1], [0, 0, 1, 1], [], []>} : vector<8x128xf32>, vector<128x384xf32>, vector<8x384xf32> -> vector<8x384xf32>
    %74 = vector.broadcast %4 : vector<1x384xf32> to vector<8x384xf32>
    %75 = arith.addf %73, %74 : vector<8x384xf32>
    %76 = vector.extract_strided_slice %72 {offsets = [0, 0], sizes = [8, 128], strides = [1, 1]} : vector<8x384xf32> to vector<8x128xf32>
    %77 = vector.extract_strided_slice %75 {offsets = [0, 0], sizes = [8, 128], strides = [1, 1]} : vector<8x384xf32> to vector<8x128xf32>
    %78 = arith.addf %76, %77 : vector<8x128xf32>
    %79 = arith.negf %78 : vector<8x128xf32>
    %80 = math.exp %79 : vector<8x128xf32>
    %cst_21 = arith.constant 1.000000e+00 : f32
    %81 = vector.broadcast %cst_21 : f32 to vector<8x128xf32>
    %82 = arith.addf %81, %80 : vector<8x128xf32>
    %83 = arith.divf %81, %82 : vector<8x128xf32>
    %84 = vector.extract_strided_slice %72 {offsets = [0, 128], sizes = [8, 128], strides = [1, 1]} : vector<8x384xf32> to vector<8x128xf32>
    %85 = vector.extract_strided_slice %75 {offsets = [0, 128], sizes = [8, 128], strides = [1, 1]} : vector<8x384xf32> to vector<8x128xf32>
    %86 = arith.addf %84, %85 : vector<8x128xf32>
    %87 = arith.negf %86 : vector<8x128xf32>
    %88 = math.exp %87 : vector<8x128xf32>
    %cst_22 = arith.constant 1.000000e+00 : f32
    %89 = vector.broadcast %cst_22 : f32 to vector<8x128xf32>
    %90 = arith.addf %89, %88 : vector<8x128xf32>
    %91 = arith.divf %89, %90 : vector<8x128xf32>
    %92 = vector.extract_strided_slice %72 {offsets = [0, 256], sizes = [8, 128], strides = [1, 1]} : vector<8x384xf32> to vector<8x128xf32>
    %93 = vector.extract_strided_slice %75 {offsets = [0, 256], sizes = [8, 128], strides = [1, 1]} : vector<8x384xf32> to vector<8x128xf32>
    %94 = arith.mulf %83, %93 : vector<8x128xf32>
    %95 = arith.addf %92, %94 : vector<8x128xf32>
    %96 = math.tanh %95 : vector<8x128xf32>
    %cst_23 = arith.constant 1.000000e+00 : f32
    %97 = vector.broadcast %cst_23 : f32 to vector<8x128xf32>
    %98 = arith.subf %97, %91 : vector<8x128xf32>
    %99 = arith.mulf %98, %96 : vector<8x128xf32>
    %100 = arith.mulf %91, %69 : vector<8x128xf32>
    %101 = arith.addf %99, %100 : vector<8x128xf32>
    %c3_i32 = arith.constant 3 : i32
    %102 = arith.index_cast %c3_i32 : i32 to index
    %c0_24 = arith.constant 0 : index
    %c0_25 = arith.constant 0 : index
    %103 = vector.load %arg1[%102, %c0_24, %c0_25] : memref<8x8x384xf32, #tpu.memory_space<vmem>>, vector<1x8x384xf32>
    %104 = vector.shape_cast %103 : vector<1x8x384xf32> to vector<8x384xf32>
    %cst_26 = arith.constant dense<0.000000e+00> : vector<8x384xf32>
    %105 = tpu.matmul %101, %3, %cst_26 {dimension_numbers = #tpu.dot_dimension_numbers<[1], [0], [0], [1], [0, 0, 1, 1], [], []>} : vector<8x128xf32>, vector<128x384xf32>, vector<8x384xf32> -> vector<8x384xf32>
    %106 = vector.broadcast %4 : vector<1x384xf32> to vector<8x384xf32>
    %107 = arith.addf %105, %106 : vector<8x384xf32>
    %108 = vector.extract_strided_slice %104 {offsets = [0, 0], sizes = [8, 128], strides = [1, 1]} : vector<8x384xf32> to vector<8x128xf32>
    %109 = vector.extract_strided_slice %107 {offsets = [0, 0], sizes = [8, 128], strides = [1, 1]} : vector<8x384xf32> to vector<8x128xf32>
    %110 = arith.addf %108, %109 : vector<8x128xf32>
    %111 = arith.negf %110 : vector<8x128xf32>
    %112 = math.exp %111 : vector<8x128xf32>
    %cst_27 = arith.constant 1.000000e+00 : f32
    %113 = vector.broadcast %cst_27 : f32 to vector<8x128xf32>
    %114 = arith.addf %113, %112 : vector<8x128xf32>
    %115 = arith.divf %113, %114 : vector<8x128xf32>
    %116 = vector.extract_strided_slice %104 {offsets = [0, 128], sizes = [8, 128], strides = [1, 1]} : vector<8x384xf32> to vector<8x128xf32>
    %117 = vector.extract_strided_slice %107 {offsets = [0, 128], sizes = [8, 128], strides = [1, 1]} : vector<8x384xf32> to vector<8x128xf32>
    %118 = arith.addf %116, %117 : vector<8x128xf32>
    %119 = arith.negf %118 : vector<8x128xf32>
    %120 = math.exp %119 : vector<8x128xf32>
    %cst_28 = arith.constant 1.000000e+00 : f32
    %121 = vector.broadcast %cst_28 : f32 to vector<8x128xf32>
    %122 = arith.addf %121, %120 : vector<8x128xf32>
    %123 = arith.divf %121, %122 : vector<8x128xf32>
    %124 = vector.extract_strided_slice %104 {offsets = [0, 256], sizes = [8, 128], strides = [1, 1]} : vector<8x384xf32> to vector<8x128xf32>
    %125 = vector.extract_strided_slice %107 {offsets = [0, 256], sizes = [8, 128], strides = [1, 1]} : vector<8x384xf32> to vector<8x128xf32>
    %126 = arith.mulf %115, %125 : vector<8x128xf32>
    %127 = arith.addf %124, %126 : vector<8x128xf32>
    %128 = math.tanh %127 : vector<8x128xf32>
    %cst_29 = arith.constant 1.000000e+00 : f32
    %129 = vector.broadcast %cst_29 : f32 to vector<8x128xf32>
    %130 = arith.subf %129, %123 : vector<8x128xf32>
    %131 = arith.mulf %130, %128 : vector<8x128xf32>
    %132 = arith.mulf %123, %101 : vector<8x128xf32>
    %133 = arith.addf %131, %132 : vector<8x128xf32>
    %c4_i32 = arith.constant 4 : i32
    %134 = arith.index_cast %c4_i32 : i32 to index
    %c0_30 = arith.constant 0 : index
    %c0_31 = arith.constant 0 : index
    %135 = vector.load %arg1[%134, %c0_30, %c0_31] : memref<8x8x384xf32, #tpu.memory_space<vmem>>, vector<1x8x384xf32>
    %136 = vector.shape_cast %135 : vector<1x8x384xf32> to vector<8x384xf32>
    %cst_32 = arith.constant dense<0.000000e+00> : vector<8x384xf32>
    %137 = tpu.matmul %133, %3, %cst_32 {dimension_numbers = #tpu.dot_dimension_numbers<[1], [0], [0], [1], [0, 0, 1, 1], [], []>} : vector<8x128xf32>, vector<128x384xf32>, vector<8x384xf32> -> vector<8x384xf32>
    %138 = vector.broadcast %4 : vector<1x384xf32> to vector<8x384xf32>
    %139 = arith.addf %137, %138 : vector<8x384xf32>
    %140 = vector.extract_strided_slice %136 {offsets = [0, 0], sizes = [8, 128], strides = [1, 1]} : vector<8x384xf32> to vector<8x128xf32>
    %141 = vector.extract_strided_slice %139 {offsets = [0, 0], sizes = [8, 128], strides = [1, 1]} : vector<8x384xf32> to vector<8x128xf32>
    %142 = arith.addf %140, %141 : vector<8x128xf32>
    %143 = arith.negf %142 : vector<8x128xf32>
    %144 = math.exp %143 : vector<8x128xf32>
    %cst_33 = arith.constant 1.000000e+00 : f32
    %145 = vector.broadcast %cst_33 : f32 to vector<8x128xf32>
    %146 = arith.addf %145, %144 : vector<8x128xf32>
    %147 = arith.divf %145, %146 : vector<8x128xf32>
    %148 = vector.extract_strided_slice %136 {offsets = [0, 128], sizes = [8, 128], strides = [1, 1]} : vector<8x384xf32> to vector<8x128xf32>
    %149 = vector.extract_strided_slice %139 {offsets = [0, 128], sizes = [8, 128], strides = [1, 1]} : vector<8x384xf32> to vector<8x128xf32>
    %150 = arith.addf %148, %149 : vector<8x128xf32>
    %151 = arith.negf %150 : vector<8x128xf32>
    %152 = math.exp %151 : vector<8x128xf32>
    %cst_34 = arith.constant 1.000000e+00 : f32
    %153 = vector.broadcast %cst_34 : f32 to vector<8x128xf32>
    %154 = arith.addf %153, %152 : vector<8x128xf32>
    %155 = arith.divf %153, %154 : vector<8x128xf32>
    %156 = vector.extract_strided_slice %136 {offsets = [0, 256], sizes = [8, 128], strides = [1, 1]} : vector<8x384xf32> to vector<8x128xf32>
    %157 = vector.extract_strided_slice %139 {offsets = [0, 256], sizes = [8, 128], strides = [1, 1]} : vector<8x384xf32> to vector<8x128xf32>
    %158 = arith.mulf %147, %157 : vector<8x128xf32>
    %159 = arith.addf %156, %158 : vector<8x128xf32>
    %160 = math.tanh %159 : vector<8x128xf32>
    %cst_35 = arith.constant 1.000000e+00 : f32
    %161 = vector.broadcast %cst_35 : f32 to vector<8x128xf32>
    %162 = arith.subf %161, %155 : vector<8x128xf32>
    %163 = arith.mulf %162, %160 : vector<8x128xf32>
    %164 = arith.mulf %155, %133 : vector<8x128xf32>
    %165 = arith.addf %163, %164 : vector<8x128xf32>
    %c5_i32 = arith.constant 5 : i32
    %166 = arith.index_cast %c5_i32 : i32 to index
    %c0_36 = arith.constant 0 : index
    %c0_37 = arith.constant 0 : index
    %167 = vector.load %arg1[%166, %c0_36, %c0_37] : memref<8x8x384xf32, #tpu.memory_space<vmem>>, vector<1x8x384xf32>
    %168 = vector.shape_cast %167 : vector<1x8x384xf32> to vector<8x384xf32>
    %cst_38 = arith.constant dense<0.000000e+00> : vector<8x384xf32>
    %169 = tpu.matmul %165, %3, %cst_38 {dimension_numbers = #tpu.dot_dimension_numbers<[1], [0], [0], [1], [0, 0, 1, 1], [], []>} : vector<8x128xf32>, vector<128x384xf32>, vector<8x384xf32> -> vector<8x384xf32>
    %170 = vector.broadcast %4 : vector<1x384xf32> to vector<8x384xf32>
    %171 = arith.addf %169, %170 : vector<8x384xf32>
    %172 = vector.extract_strided_slice %168 {offsets = [0, 0], sizes = [8, 128], strides = [1, 1]} : vector<8x384xf32> to vector<8x128xf32>
    %173 = vector.extract_strided_slice %171 {offsets = [0, 0], sizes = [8, 128], strides = [1, 1]} : vector<8x384xf32> to vector<8x128xf32>
    %174 = arith.addf %172, %173 : vector<8x128xf32>
    %175 = arith.negf %174 : vector<8x128xf32>
    %176 = math.exp %175 : vector<8x128xf32>
    %cst_39 = arith.constant 1.000000e+00 : f32
    %177 = vector.broadcast %cst_39 : f32 to vector<8x128xf32>
    %178 = arith.addf %177, %176 : vector<8x128xf32>
    %179 = arith.divf %177, %178 : vector<8x128xf32>
    %180 = vector.extract_strided_slice %168 {offsets = [0, 128], sizes = [8, 128], strides = [1, 1]} : vector<8x384xf32> to vector<8x128xf32>
    %181 = vector.extract_strided_slice %171 {offsets = [0, 128], sizes = [8, 128], strides = [1, 1]} : vector<8x384xf32> to vector<8x128xf32>
    %182 = arith.addf %180, %181 : vector<8x128xf32>
    %183 = arith.negf %182 : vector<8x128xf32>
    %184 = math.exp %183 : vector<8x128xf32>
    %cst_40 = arith.constant 1.000000e+00 : f32
    %185 = vector.broadcast %cst_40 : f32 to vector<8x128xf32>
    %186 = arith.addf %185, %184 : vector<8x128xf32>
    %187 = arith.divf %185, %186 : vector<8x128xf32>
    %188 = vector.extract_strided_slice %168 {offsets = [0, 256], sizes = [8, 128], strides = [1, 1]} : vector<8x384xf32> to vector<8x128xf32>
    %189 = vector.extract_strided_slice %171 {offsets = [0, 256], sizes = [8, 128], strides = [1, 1]} : vector<8x384xf32> to vector<8x128xf32>
    %190 = arith.mulf %179, %189 : vector<8x128xf32>
    %191 = arith.addf %188, %190 : vector<8x128xf32>
    %192 = math.tanh %191 : vector<8x128xf32>
    %cst_41 = arith.constant 1.000000e+00 : f32
    %193 = vector.broadcast %cst_41 : f32 to vector<8x128xf32>
    %194 = arith.subf %193, %187 : vector<8x128xf32>
    %195 = arith.mulf %194, %192 : vector<8x128xf32>
    %196 = arith.mulf %187, %165 : vector<8x128xf32>
    %197 = arith.addf %195, %196 : vector<8x128xf32>
    %c6_i32 = arith.constant 6 : i32
    %198 = arith.index_cast %c6_i32 : i32 to index
    %c0_42 = arith.constant 0 : index
    %c0_43 = arith.constant 0 : index
    %199 = vector.load %arg1[%198, %c0_42, %c0_43] : memref<8x8x384xf32, #tpu.memory_space<vmem>>, vector<1x8x384xf32>
    %200 = vector.shape_cast %199 : vector<1x8x384xf32> to vector<8x384xf32>
    %cst_44 = arith.constant dense<0.000000e+00> : vector<8x384xf32>
    %201 = tpu.matmul %197, %3, %cst_44 {dimension_numbers = #tpu.dot_dimension_numbers<[1], [0], [0], [1], [0, 0, 1, 1], [], []>} : vector<8x128xf32>, vector<128x384xf32>, vector<8x384xf32> -> vector<8x384xf32>
    %202 = vector.broadcast %4 : vector<1x384xf32> to vector<8x384xf32>
    %203 = arith.addf %201, %202 : vector<8x384xf32>
    %204 = vector.extract_strided_slice %200 {offsets = [0, 0], sizes = [8, 128], strides = [1, 1]} : vector<8x384xf32> to vector<8x128xf32>
    %205 = vector.extract_strided_slice %203 {offsets = [0, 0], sizes = [8, 128], strides = [1, 1]} : vector<8x384xf32> to vector<8x128xf32>
    %206 = arith.addf %204, %205 : vector<8x128xf32>
    %207 = arith.negf %206 : vector<8x128xf32>
    %208 = math.exp %207 : vector<8x128xf32>
    %cst_45 = arith.constant 1.000000e+00 : f32
    %209 = vector.broadcast %cst_45 : f32 to vector<8x128xf32>
    %210 = arith.addf %209, %208 : vector<8x128xf32>
    %211 = arith.divf %209, %210 : vector<8x128xf32>
    %212 = vector.extract_strided_slice %200 {offsets = [0, 128], sizes = [8, 128], strides = [1, 1]} : vector<8x384xf32> to vector<8x128xf32>
    %213 = vector.extract_strided_slice %203 {offsets = [0, 128], sizes = [8, 128], strides = [1, 1]} : vector<8x384xf32> to vector<8x128xf32>
    %214 = arith.addf %212, %213 : vector<8x128xf32>
    %215 = arith.negf %214 : vector<8x128xf32>
    %216 = math.exp %215 : vector<8x128xf32>
    %cst_46 = arith.constant 1.000000e+00 : f32
    %217 = vector.broadcast %cst_46 : f32 to vector<8x128xf32>
    %218 = arith.addf %217, %216 : vector<8x128xf32>
    %219 = arith.divf %217, %218 : vector<8x128xf32>
    %220 = vector.extract_strided_slice %200 {offsets = [0, 256], sizes = [8, 128], strides = [1, 1]} : vector<8x384xf32> to vector<8x128xf32>
    %221 = vector.extract_strided_slice %203 {offsets = [0, 256], sizes = [8, 128], strides = [1, 1]} : vector<8x384xf32> to vector<8x128xf32>
    %222 = arith.mulf %211, %221 : vector<8x128xf32>
    %223 = arith.addf %220, %222 : vector<8x128xf32>
    %224 = math.tanh %223 : vector<8x128xf32>
    %cst_47 = arith.constant 1.000000e+00 : f32
    %225 = vector.broadcast %cst_47 : f32 to vector<8x128xf32>
    %226 = arith.subf %225, %219 : vector<8x128xf32>
    %227 = arith.mulf %226, %224 : vector<8x128xf32>
    %228 = arith.mulf %219, %197 : vector<8x128xf32>
    %229 = arith.addf %227, %228 : vector<8x128xf32>
    %c7_i32 = arith.constant 7 : i32
    %230 = arith.index_cast %c7_i32 : i32 to index
    %c0_48 = arith.constant 0 : index
    %c0_49 = arith.constant 0 : index
    %231 = vector.load %arg1[%230, %c0_48, %c0_49] : memref<8x8x384xf32, #tpu.memory_space<vmem>>, vector<1x8x384xf32>
    %232 = vector.shape_cast %231 : vector<1x8x384xf32> to vector<8x384xf32>
    %cst_50 = arith.constant dense<0.000000e+00> : vector<8x384xf32>
    %233 = tpu.matmul %229, %3, %cst_50 {dimension_numbers = #tpu.dot_dimension_numbers<[1], [0], [0], [1], [0, 0, 1, 1], [], []>} : vector<8x128xf32>, vector<128x384xf32>, vector<8x384xf32> -> vector<8x384xf32>
    %234 = vector.broadcast %4 : vector<1x384xf32> to vector<8x384xf32>
    %235 = arith.addf %233, %234 : vector<8x384xf32>
    %236 = vector.extract_strided_slice %232 {offsets = [0, 0], sizes = [8, 128], strides = [1, 1]} : vector<8x384xf32> to vector<8x128xf32>
    %237 = vector.extract_strided_slice %235 {offsets = [0, 0], sizes = [8, 128], strides = [1, 1]} : vector<8x384xf32> to vector<8x128xf32>
    %238 = arith.addf %236, %237 : vector<8x128xf32>
    %239 = arith.negf %238 : vector<8x128xf32>
    %240 = math.exp %239 : vector<8x128xf32>
    %cst_51 = arith.constant 1.000000e+00 : f32
    %241 = vector.broadcast %cst_51 : f32 to vector<8x128xf32>
    %242 = arith.addf %241, %240 : vector<8x128xf32>
    %243 = arith.divf %241, %242 : vector<8x128xf32>
    %244 = vector.extract_strided_slice %232 {offsets = [0, 128], sizes = [8, 128], strides = [1, 1]} : vector<8x384xf32> to vector<8x128xf32>
    %245 = vector.extract_strided_slice %235 {offsets = [0, 128], sizes = [8, 128], strides = [1, 1]} : vector<8x384xf32> to vector<8x128xf32>
    %246 = arith.addf %244, %245 : vector<8x128xf32>
    %247 = arith.negf %246 : vector<8x128xf32>
    %248 = math.exp %247 : vector<8x128xf32>
    %cst_52 = arith.constant 1.000000e+00 : f32
    %249 = vector.broadcast %cst_52 : f32 to vector<8x128xf32>
    %250 = arith.addf %249, %248 : vector<8x128xf32>
    %251 = arith.divf %249, %250 : vector<8x128xf32>
    %252 = vector.extract_strided_slice %232 {offsets = [0, 256], sizes = [8, 128], strides = [1, 1]} : vector<8x384xf32> to vector<8x128xf32>
    %253 = vector.extract_strided_slice %235 {offsets = [0, 256], sizes = [8, 128], strides = [1, 1]} : vector<8x384xf32> to vector<8x128xf32>
    %254 = arith.mulf %243, %253 : vector<8x128xf32>
    %255 = arith.addf %252, %254 : vector<8x128xf32>
    %256 = math.tanh %255 : vector<8x128xf32>
    %cst_53 = arith.constant 1.000000e+00 : f32
    %257 = vector.broadcast %cst_53 : f32 to vector<8x128xf32>
    %258 = arith.subf %257, %251 : vector<8x128xf32>
    %259 = arith.mulf %258, %256 : vector<8x128xf32>
    %260 = arith.mulf %251, %229 : vector<8x128xf32>
    %261 = arith.addf %259, %260 : vector<8x128xf32>
    %c8_i32 = arith.constant 8 : i32
    %c0_54 = arith.constant 0 : index
    %c0_55 = arith.constant 0 : index
    %262 = vector.load %arg6[%c0_54, %c0_55] : memref<8x128xf32, #tpu.memory_space<vmem>>, vector<8x128xf32>
    tpu.vector_store %arg6[%c0_54, %c0_55], %261 {strides = array<i32>} : memref<8x128xf32, #tpu.memory_space<vmem>>, vector<8x128xf32>,
    %c0_i32_56 = arith.constant 0 : i32
    %263 = arith.cmpi eq, %arg0, %c0_i32_56 : i32
    %264 = arith.extui %263 : i1 to i32
    %c0_i32_57 = arith.constant 0 : i32
    %265 = arith.cmpi ne, %264, %c0_i32_57 : i32
    scf.if %265 {
      %c0_58 = arith.constant 0 : index
      %c0_59 = arith.constant 0 : index
      %266 = vector.load %arg5[%c0_58, %c0_59] : memref<8x128xf32, #tpu.memory_space<vmem>>, vector<8x128xf32>
      tpu.vector_store %arg5[%c0_58, %c0_59], %261 {strides = array<i32>} : memref<8x128xf32, #tpu.memory_space<vmem>>, vector<8x128xf32>,
    } else {
    }
    return
  }
  func.func @transform_0(%arg0: i32) -> (i32, i32, i32) {
    %c0_i32 = arith.constant 0 : i32
    %c0_i32_0 = arith.constant 0 : i32
    %c0_i32_1 = arith.constant 0 : i32
    return %arg0, %c0_i32, %c0_i32_0 : i32, i32, i32
  }
  func.func @transform_1(%arg0: i32) -> (i32, i32) {
    %c0_i32 = arith.constant 0 : i32
    %c0_i32_0 = arith.constant 0 : i32
    %c0_i32_1 = arith.constant 0 : i32
    return %c0_i32, %c0_i32_0 : i32, i32
  }
  func.func @transform_2(%arg0: i32) -> (i32, i32) {
    %c0_i32 = arith.constant 0 : i32
    %c0_i32_0 = arith.constant 0 : i32
    %c0_i32_1 = arith.constant 0 : i32
    return %c0_i32, %c0_i32_0 : i32, i32
  }
  func.func @transform_3(%arg0: i32) -> (i32, i32) {
    %c0_i32 = arith.constant 0 : i32
    %c0_i32_0 = arith.constant 0 : i32
    %c0_i32_1 = arith.constant 0 : i32
    return %c0_i32, %c0_i32_0 : i32, i32
  }
  func.func @transform_4(%arg0: i32) -> (i32, i32) {
    %c0_i32 = arith.constant 0 : i32
    %c0_i32_0 = arith.constant 0 : i32
    %c0_i32_1 = arith.constant 0 : i32
    return %c0_i32, %c0_i32_0 : i32, i32
  }
}

module attributes {stable_mosaic.version = 11 : i64} {
  func.func @_gru_dec_kernel(%arg0: i32, %arg1: memref<8x8x384xf32, #tpu.memory_space<vmem>>, %arg2: memref<8x384xf32, #tpu.memory_space<vmem>>, %arg3: memref<128x384xf32, #tpu.memory_space<vmem>>, %arg4: memref<1x384xf32, #tpu.memory_space<vmem>>, %arg5: memref<8x128xf32, #tpu.memory_space<vmem>>, %arg6: memref<8x8x128xf32, #tpu.memory_space<vmem>>, %arg7: memref<8x128xf32, #tpu.memory_space<vmem>>, %arg8: memref<8x128xf32, #tpu.memory_space<vmem>>) attributes {dimension_semantics = [#tpu.dimension_semantics<arbitrary>], iteration_bounds = array<i64: 1>, scalar_prefetch = 0 : i64, scratch_operands = 1 : i64, tpu.core_type = #tpu.core_type<tc>, window_params = [{transform_indices = @transform_0, window_bounds = array<i64: 8, 8, 384>}, {pipeline_mode = #tpu.pipeline_mode<synchronous>, transform_indices = @transform_1, window_bounds = array<i64: 8, 384>}, {pipeline_mode = #tpu.pipeline_mode<synchronous>, transform_indices = @transform_2, window_bounds = array<i64: 128, 384>}, {pipeline_mode = #tpu.pipeline_mode<synchronous>, transform_indices = @transform_3, window_bounds = array<i64: 1, 384>}, {pipeline_mode = #tpu.pipeline_mode<synchronous>, transform_indices = @transform_4, window_bounds = array<i64: 8, 128>}, {transform_indices = @transform_5, window_bounds = array<i64: 8, 8, 128>}, {pipeline_mode = #tpu.pipeline_mode<synchronous>, transform_indices = @transform_6, window_bounds = array<i64: 8, 128>}]} {
    %c0_i32 = arith.constant 0 : i32
    %0 = arith.cmpi eq, %arg0, %c0_i32 : i32
    %1 = arith.extui %0 : i1 to i32
    %c0_i32_0 = arith.constant 0 : i32
    %2 = arith.cmpi ne, %1, %c0_i32_0 : i32
    scf.if %2 {
      %c0_76 = arith.constant 0 : index
      %c0_77 = arith.constant 0 : index
      %307 = vector.load %arg5[%c0_76, %c0_77] : memref<8x128xf32, #tpu.memory_space<vmem>>, vector<8x128xf32>
      %c0_78 = arith.constant 0 : index
      %c0_79 = arith.constant 0 : index
      %308 = vector.load %arg8[%c0_78, %c0_79] : memref<8x128xf32, #tpu.memory_space<vmem>>, vector<8x128xf32>
      tpu.vector_store %arg8[%c0_78, %c0_79], %307 {strides = array<i32>} : memref<8x128xf32, #tpu.memory_space<vmem>>, vector<8x128xf32>,
    } else {
    }
    %c0 = arith.constant 0 : index
    %c0_1 = arith.constant 0 : index
    %3 = vector.load %arg2[%c0, %c0_1] : memref<8x384xf32, #tpu.memory_space<vmem>>, vector<8x384xf32>
    %c0_2 = arith.constant 0 : index
    %c0_3 = arith.constant 0 : index
    %4 = vector.load %arg3[%c0_2, %c0_3] : memref<128x384xf32, #tpu.memory_space<vmem>>, vector<128x384xf32>
    %c0_4 = arith.constant 0 : index
    %c0_5 = arith.constant 0 : index
    %5 = vector.load %arg4[%c0_4, %c0_5] : memref<1x384xf32, #tpu.memory_space<vmem>>, vector<1x384xf32>
    %c0_6 = arith.constant 0 : index
    %c0_7 = arith.constant 0 : index
    %6 = vector.load %arg8[%c0_6, %c0_7] : memref<8x128xf32, #tpu.memory_space<vmem>>, vector<8x128xf32>
    %c0_i32_8 = arith.constant 0 : i32
    %7 = arith.index_cast %c0_i32_8 : i32 to index
    %c0_9 = arith.constant 0 : index
    %c0_10 = arith.constant 0 : index
    %8 = vector.load %arg1[%7, %c0_9, %c0_10] : memref<8x8x384xf32, #tpu.memory_space<vmem>>, vector<1x8x384xf32>
    %9 = vector.shape_cast %8 : vector<1x8x384xf32> to vector<8x384xf32>
    %10 = arith.addf %9, %3 : vector<8x384xf32>
    %cst = arith.constant dense<0.000000e+00> : vector<8x384xf32>
    %11 = tpu.matmul %6, %4, %cst {dimension_numbers = #tpu.dot_dimension_numbers<[1], [0], [0], [1], [0, 0, 1, 1], [], []>} : vector<8x128xf32>, vector<128x384xf32>, vector<8x384xf32> -> vector<8x384xf32>
    %12 = vector.broadcast %5 : vector<1x384xf32> to vector<8x384xf32>
    %13 = arith.addf %11, %12 : vector<8x384xf32>
    %14 = vector.extract_strided_slice %10 {offsets = [0, 0], sizes = [8, 128], strides = [1, 1]} : vector<8x384xf32> to vector<8x128xf32>
    %15 = vector.extract_strided_slice %13 {offsets = [0, 0], sizes = [8, 128], strides = [1, 1]} : vector<8x384xf32> to vector<8x128xf32>
    %16 = arith.addf %14, %15 : vector<8x128xf32>
    %17 = arith.negf %16 : vector<8x128xf32>
    %18 = math.exp %17 : vector<8x128xf32>
    %cst_11 = arith.constant 1.000000e+00 : f32
    %19 = vector.broadcast %cst_11 : f32 to vector<8x128xf32>
    %20 = arith.addf %19, %18 : vector<8x128xf32>
    %21 = arith.divf %19, %20 : vector<8x128xf32>
    %22 = vector.extract_strided_slice %10 {offsets = [0, 128], sizes = [8, 128], strides = [1, 1]} : vector<8x384xf32> to vector<8x128xf32>
    %23 = vector.extract_strided_slice %13 {offsets = [0, 128], sizes = [8, 128], strides = [1, 1]} : vector<8x384xf32> to vector<8x128xf32>
    %24 = arith.addf %22, %23 : vector<8x128xf32>
    %25 = arith.negf %24 : vector<8x128xf32>
    %26 = math.exp %25 : vector<8x128xf32>
    %cst_12 = arith.constant 1.000000e+00 : f32
    %27 = vector.broadcast %cst_12 : f32 to vector<8x128xf32>
    %28 = arith.addf %27, %26 : vector<8x128xf32>
    %29 = arith.divf %27, %28 : vector<8x128xf32>
    %30 = vector.extract_strided_slice %10 {offsets = [0, 256], sizes = [8, 128], strides = [1, 1]} : vector<8x384xf32> to vector<8x128xf32>
    %31 = vector.extract_strided_slice %13 {offsets = [0, 256], sizes = [8, 128], strides = [1, 1]} : vector<8x384xf32> to vector<8x128xf32>
    %32 = arith.mulf %21, %31 : vector<8x128xf32>
    %33 = arith.addf %30, %32 : vector<8x128xf32>
    %34 = math.tanh %33 : vector<8x128xf32>
    %cst_13 = arith.constant 1.000000e+00 : f32
    %35 = vector.broadcast %cst_13 : f32 to vector<8x128xf32>
    %36 = arith.subf %35, %29 : vector<8x128xf32>
    %37 = arith.mulf %36, %34 : vector<8x128xf32>
    %38 = arith.mulf %29, %6 : vector<8x128xf32>
    %39 = arith.addf %37, %38 : vector<8x128xf32>
    %40 = arith.index_cast %c0_i32_8 : i32 to index
    %c0_14 = arith.constant 0 : index
    %c0_15 = arith.constant 0 : index
    %41 = vector.load %arg6[%40, %c0_14, %c0_15] : memref<8x8x128xf32, #tpu.memory_space<vmem>>, vector<1x8x128xf32>
    %42 = vector.shape_cast %41 : vector<1x8x128xf32> to vector<8x128xf32>
    %43 = vector.shape_cast %39 : vector<8x128xf32> to vector<1x8x128xf32>
    tpu.vector_store %arg6[%40, %c0_14, %c0_15], %43 {strides = array<i32>} : memref<8x8x128xf32, #tpu.memory_space<vmem>>, vector<1x8x128xf32>,
    %c1_i32 = arith.constant 1 : i32
    %44 = arith.index_cast %c1_i32 : i32 to index
    %c0_16 = arith.constant 0 : index
    %c0_17 = arith.constant 0 : index
    %45 = vector.load %arg1[%44, %c0_16, %c0_17] : memref<8x8x384xf32, #tpu.memory_space<vmem>>, vector<1x8x384xf32>
    %46 = vector.shape_cast %45 : vector<1x8x384xf32> to vector<8x384xf32>
    %47 = arith.addf %46, %3 : vector<8x384xf32>
    %cst_18 = arith.constant dense<0.000000e+00> : vector<8x384xf32>
    %48 = tpu.matmul %39, %4, %cst_18 {dimension_numbers = #tpu.dot_dimension_numbers<[1], [0], [0], [1], [0, 0, 1, 1], [], []>} : vector<8x128xf32>, vector<128x384xf32>, vector<8x384xf32> -> vector<8x384xf32>
    %49 = vector.broadcast %5 : vector<1x384xf32> to vector<8x384xf32>
    %50 = arith.addf %48, %49 : vector<8x384xf32>
    %51 = vector.extract_strided_slice %47 {offsets = [0, 0], sizes = [8, 128], strides = [1, 1]} : vector<8x384xf32> to vector<8x128xf32>
    %52 = vector.extract_strided_slice %50 {offsets = [0, 0], sizes = [8, 128], strides = [1, 1]} : vector<8x384xf32> to vector<8x128xf32>
    %53 = arith.addf %51, %52 : vector<8x128xf32>
    %54 = arith.negf %53 : vector<8x128xf32>
    %55 = math.exp %54 : vector<8x128xf32>
    %cst_19 = arith.constant 1.000000e+00 : f32
    %56 = vector.broadcast %cst_19 : f32 to vector<8x128xf32>
    %57 = arith.addf %56, %55 : vector<8x128xf32>
    %58 = arith.divf %56, %57 : vector<8x128xf32>
    %59 = vector.extract_strided_slice %47 {offsets = [0, 128], sizes = [8, 128], strides = [1, 1]} : vector<8x384xf32> to vector<8x128xf32>
    %60 = vector.extract_strided_slice %50 {offsets = [0, 128], sizes = [8, 128], strides = [1, 1]} : vector<8x384xf32> to vector<8x128xf32>
    %61 = arith.addf %59, %60 : vector<8x128xf32>
    %62 = arith.negf %61 : vector<8x128xf32>
    %63 = math.exp %62 : vector<8x128xf32>
    %cst_20 = arith.constant 1.000000e+00 : f32
    %64 = vector.broadcast %cst_20 : f32 to vector<8x128xf32>
    %65 = arith.addf %64, %63 : vector<8x128xf32>
    %66 = arith.divf %64, %65 : vector<8x128xf32>
    %67 = vector.extract_strided_slice %47 {offsets = [0, 256], sizes = [8, 128], strides = [1, 1]} : vector<8x384xf32> to vector<8x128xf32>
    %68 = vector.extract_strided_slice %50 {offsets = [0, 256], sizes = [8, 128], strides = [1, 1]} : vector<8x384xf32> to vector<8x128xf32>
    %69 = arith.mulf %58, %68 : vector<8x128xf32>
    %70 = arith.addf %67, %69 : vector<8x128xf32>
    %71 = math.tanh %70 : vector<8x128xf32>
    %cst_21 = arith.constant 1.000000e+00 : f32
    %72 = vector.broadcast %cst_21 : f32 to vector<8x128xf32>
    %73 = arith.subf %72, %66 : vector<8x128xf32>
    %74 = arith.mulf %73, %71 : vector<8x128xf32>
    %75 = arith.mulf %66, %39 : vector<8x128xf32>
    %76 = arith.addf %74, %75 : vector<8x128xf32>
    %77 = arith.index_cast %c1_i32 : i32 to index
    %c0_22 = arith.constant 0 : index
    %c0_23 = arith.constant 0 : index
    %78 = vector.load %arg6[%77, %c0_22, %c0_23] : memref<8x8x128xf32, #tpu.memory_space<vmem>>, vector<1x8x128xf32>
    %79 = vector.shape_cast %78 : vector<1x8x128xf32> to vector<8x128xf32>
    %80 = vector.shape_cast %76 : vector<8x128xf32> to vector<1x8x128xf32>
    tpu.vector_store %arg6[%77, %c0_22, %c0_23], %80 {strides = array<i32>} : memref<8x8x128xf32, #tpu.memory_space<vmem>>, vector<1x8x128xf32>,
    %c2_i32 = arith.constant 2 : i32
    %81 = arith.index_cast %c2_i32 : i32 to index
    %c0_24 = arith.constant 0 : index
    %c0_25 = arith.constant 0 : index
    %82 = vector.load %arg1[%81, %c0_24, %c0_25] : memref<8x8x384xf32, #tpu.memory_space<vmem>>, vector<1x8x384xf32>
    %83 = vector.shape_cast %82 : vector<1x8x384xf32> to vector<8x384xf32>
    %84 = arith.addf %83, %3 : vector<8x384xf32>
    %cst_26 = arith.constant dense<0.000000e+00> : vector<8x384xf32>
    %85 = tpu.matmul %76, %4, %cst_26 {dimension_numbers = #tpu.dot_dimension_numbers<[1], [0], [0], [1], [0, 0, 1, 1], [], []>} : vector<8x128xf32>, vector<128x384xf32>, vector<8x384xf32> -> vector<8x384xf32>
    %86 = vector.broadcast %5 : vector<1x384xf32> to vector<8x384xf32>
    %87 = arith.addf %85, %86 : vector<8x384xf32>
    %88 = vector.extract_strided_slice %84 {offsets = [0, 0], sizes = [8, 128], strides = [1, 1]} : vector<8x384xf32> to vector<8x128xf32>
    %89 = vector.extract_strided_slice %87 {offsets = [0, 0], sizes = [8, 128], strides = [1, 1]} : vector<8x384xf32> to vector<8x128xf32>
    %90 = arith.addf %88, %89 : vector<8x128xf32>
    %91 = arith.negf %90 : vector<8x128xf32>
    %92 = math.exp %91 : vector<8x128xf32>
    %cst_27 = arith.constant 1.000000e+00 : f32
    %93 = vector.broadcast %cst_27 : f32 to vector<8x128xf32>
    %94 = arith.addf %93, %92 : vector<8x128xf32>
    %95 = arith.divf %93, %94 : vector<8x128xf32>
    %96 = vector.extract_strided_slice %84 {offsets = [0, 128], sizes = [8, 128], strides = [1, 1]} : vector<8x384xf32> to vector<8x128xf32>
    %97 = vector.extract_strided_slice %87 {offsets = [0, 128], sizes = [8, 128], strides = [1, 1]} : vector<8x384xf32> to vector<8x128xf32>
    %98 = arith.addf %96, %97 : vector<8x128xf32>
    %99 = arith.negf %98 : vector<8x128xf32>
    %100 = math.exp %99 : vector<8x128xf32>
    %cst_28 = arith.constant 1.000000e+00 : f32
    %101 = vector.broadcast %cst_28 : f32 to vector<8x128xf32>
    %102 = arith.addf %101, %100 : vector<8x128xf32>
    %103 = arith.divf %101, %102 : vector<8x128xf32>
    %104 = vector.extract_strided_slice %84 {offsets = [0, 256], sizes = [8, 128], strides = [1, 1]} : vector<8x384xf32> to vector<8x128xf32>
    %105 = vector.extract_strided_slice %87 {offsets = [0, 256], sizes = [8, 128], strides = [1, 1]} : vector<8x384xf32> to vector<8x128xf32>
    %106 = arith.mulf %95, %105 : vector<8x128xf32>
    %107 = arith.addf %104, %106 : vector<8x128xf32>
    %108 = math.tanh %107 : vector<8x128xf32>
    %cst_29 = arith.constant 1.000000e+00 : f32
    %109 = vector.broadcast %cst_29 : f32 to vector<8x128xf32>
    %110 = arith.subf %109, %103 : vector<8x128xf32>
    %111 = arith.mulf %110, %108 : vector<8x128xf32>
    %112 = arith.mulf %103, %76 : vector<8x128xf32>
    %113 = arith.addf %111, %112 : vector<8x128xf32>
    %114 = arith.index_cast %c2_i32 : i32 to index
    %c0_30 = arith.constant 0 : index
    %c0_31 = arith.constant 0 : index
    %115 = vector.load %arg6[%114, %c0_30, %c0_31] : memref<8x8x128xf32, #tpu.memory_space<vmem>>, vector<1x8x128xf32>
    %116 = vector.shape_cast %115 : vector<1x8x128xf32> to vector<8x128xf32>
    %117 = vector.shape_cast %113 : vector<8x128xf32> to vector<1x8x128xf32>
    tpu.vector_store %arg6[%114, %c0_30, %c0_31], %117 {strides = array<i32>} : memref<8x8x128xf32, #tpu.memory_space<vmem>>, vector<1x8x128xf32>,
    %c3_i32 = arith.constant 3 : i32
    %118 = arith.index_cast %c3_i32 : i32 to index
    %c0_32 = arith.constant 0 : index
    %c0_33 = arith.constant 0 : index
    %119 = vector.load %arg1[%118, %c0_32, %c0_33] : memref<8x8x384xf32, #tpu.memory_space<vmem>>, vector<1x8x384xf32>
    %120 = vector.shape_cast %119 : vector<1x8x384xf32> to vector<8x384xf32>
    %121 = arith.addf %120, %3 : vector<8x384xf32>
    %cst_34 = arith.constant dense<0.000000e+00> : vector<8x384xf32>
    %122 = tpu.matmul %113, %4, %cst_34 {dimension_numbers = #tpu.dot_dimension_numbers<[1], [0], [0], [1], [0, 0, 1, 1], [], []>} : vector<8x128xf32>, vector<128x384xf32>, vector<8x384xf32> -> vector<8x384xf32>
    %123 = vector.broadcast %5 : vector<1x384xf32> to vector<8x384xf32>
    %124 = arith.addf %122, %123 : vector<8x384xf32>
    %125 = vector.extract_strided_slice %121 {offsets = [0, 0], sizes = [8, 128], strides = [1, 1]} : vector<8x384xf32> to vector<8x128xf32>
    %126 = vector.extract_strided_slice %124 {offsets = [0, 0], sizes = [8, 128], strides = [1, 1]} : vector<8x384xf32> to vector<8x128xf32>
    %127 = arith.addf %125, %126 : vector<8x128xf32>
    %128 = arith.negf %127 : vector<8x128xf32>
    %129 = math.exp %128 : vector<8x128xf32>
    %cst_35 = arith.constant 1.000000e+00 : f32
    %130 = vector.broadcast %cst_35 : f32 to vector<8x128xf32>
    %131 = arith.addf %130, %129 : vector<8x128xf32>
    %132 = arith.divf %130, %131 : vector<8x128xf32>
    %133 = vector.extract_strided_slice %121 {offsets = [0, 128], sizes = [8, 128], strides = [1, 1]} : vector<8x384xf32> to vector<8x128xf32>
    %134 = vector.extract_strided_slice %124 {offsets = [0, 128], sizes = [8, 128], strides = [1, 1]} : vector<8x384xf32> to vector<8x128xf32>
    %135 = arith.addf %133, %134 : vector<8x128xf32>
    %136 = arith.negf %135 : vector<8x128xf32>
    %137 = math.exp %136 : vector<8x128xf32>
    %cst_36 = arith.constant 1.000000e+00 : f32
    %138 = vector.broadcast %cst_36 : f32 to vector<8x128xf32>
    %139 = arith.addf %138, %137 : vector<8x128xf32>
    %140 = arith.divf %138, %139 : vector<8x128xf32>
    %141 = vector.extract_strided_slice %121 {offsets = [0, 256], sizes = [8, 128], strides = [1, 1]} : vector<8x384xf32> to vector<8x128xf32>
    %142 = vector.extract_strided_slice %124 {offsets = [0, 256], sizes = [8, 128], strides = [1, 1]} : vector<8x384xf32> to vector<8x128xf32>
    %143 = arith.mulf %132, %142 : vector<8x128xf32>
    %144 = arith.addf %141, %143 : vector<8x128xf32>
    %145 = math.tanh %144 : vector<8x128xf32>
    %cst_37 = arith.constant 1.000000e+00 : f32
    %146 = vector.broadcast %cst_37 : f32 to vector<8x128xf32>
    %147 = arith.subf %146, %140 : vector<8x128xf32>
    %148 = arith.mulf %147, %145 : vector<8x128xf32>
    %149 = arith.mulf %140, %113 : vector<8x128xf32>
    %150 = arith.addf %148, %149 : vector<8x128xf32>
    %151 = arith.index_cast %c3_i32 : i32 to index
    %c0_38 = arith.constant 0 : index
    %c0_39 = arith.constant 0 : index
    %152 = vector.load %arg6[%151, %c0_38, %c0_39] : memref<8x8x128xf32, #tpu.memory_space<vmem>>, vector<1x8x128xf32>
    %153 = vector.shape_cast %152 : vector<1x8x128xf32> to vector<8x128xf32>
    %154 = vector.shape_cast %150 : vector<8x128xf32> to vector<1x8x128xf32>
    tpu.vector_store %arg6[%151, %c0_38, %c0_39], %154 {strides = array<i32>} : memref<8x8x128xf32, #tpu.memory_space<vmem>>, vector<1x8x128xf32>,
    %c4_i32 = arith.constant 4 : i32
    %155 = arith.index_cast %c4_i32 : i32 to index
    %c0_40 = arith.constant 0 : index
    %c0_41 = arith.constant 0 : index
    %156 = vector.load %arg1[%155, %c0_40, %c0_41] : memref<8x8x384xf32, #tpu.memory_space<vmem>>, vector<1x8x384xf32>
    %157 = vector.shape_cast %156 : vector<1x8x384xf32> to vector<8x384xf32>
    %158 = arith.addf %157, %3 : vector<8x384xf32>
    %cst_42 = arith.constant dense<0.000000e+00> : vector<8x384xf32>
    %159 = tpu.matmul %150, %4, %cst_42 {dimension_numbers = #tpu.dot_dimension_numbers<[1], [0], [0], [1], [0, 0, 1, 1], [], []>} : vector<8x128xf32>, vector<128x384xf32>, vector<8x384xf32> -> vector<8x384xf32>
    %160 = vector.broadcast %5 : vector<1x384xf32> to vector<8x384xf32>
    %161 = arith.addf %159, %160 : vector<8x384xf32>
    %162 = vector.extract_strided_slice %158 {offsets = [0, 0], sizes = [8, 128], strides = [1, 1]} : vector<8x384xf32> to vector<8x128xf32>
    %163 = vector.extract_strided_slice %161 {offsets = [0, 0], sizes = [8, 128], strides = [1, 1]} : vector<8x384xf32> to vector<8x128xf32>
    %164 = arith.addf %162, %163 : vector<8x128xf32>
    %165 = arith.negf %164 : vector<8x128xf32>
    %166 = math.exp %165 : vector<8x128xf32>
    %cst_43 = arith.constant 1.000000e+00 : f32
    %167 = vector.broadcast %cst_43 : f32 to vector<8x128xf32>
    %168 = arith.addf %167, %166 : vector<8x128xf32>
    %169 = arith.divf %167, %168 : vector<8x128xf32>
    %170 = vector.extract_strided_slice %158 {offsets = [0, 128], sizes = [8, 128], strides = [1, 1]} : vector<8x384xf32> to vector<8x128xf32>
    %171 = vector.extract_strided_slice %161 {offsets = [0, 128], sizes = [8, 128], strides = [1, 1]} : vector<8x384xf32> to vector<8x128xf32>
    %172 = arith.addf %170, %171 : vector<8x128xf32>
    %173 = arith.negf %172 : vector<8x128xf32>
    %174 = math.exp %173 : vector<8x128xf32>
    %cst_44 = arith.constant 1.000000e+00 : f32
    %175 = vector.broadcast %cst_44 : f32 to vector<8x128xf32>
    %176 = arith.addf %175, %174 : vector<8x128xf32>
    %177 = arith.divf %175, %176 : vector<8x128xf32>
    %178 = vector.extract_strided_slice %158 {offsets = [0, 256], sizes = [8, 128], strides = [1, 1]} : vector<8x384xf32> to vector<8x128xf32>
    %179 = vector.extract_strided_slice %161 {offsets = [0, 256], sizes = [8, 128], strides = [1, 1]} : vector<8x384xf32> to vector<8x128xf32>
    %180 = arith.mulf %169, %179 : vector<8x128xf32>
    %181 = arith.addf %178, %180 : vector<8x128xf32>
    %182 = math.tanh %181 : vector<8x128xf32>
    %cst_45 = arith.constant 1.000000e+00 : f32
    %183 = vector.broadcast %cst_45 : f32 to vector<8x128xf32>
    %184 = arith.subf %183, %177 : vector<8x128xf32>
    %185 = arith.mulf %184, %182 : vector<8x128xf32>
    %186 = arith.mulf %177, %150 : vector<8x128xf32>
    %187 = arith.addf %185, %186 : vector<8x128xf32>
    %188 = arith.index_cast %c4_i32 : i32 to index
    %c0_46 = arith.constant 0 : index
    %c0_47 = arith.constant 0 : index
    %189 = vector.load %arg6[%188, %c0_46, %c0_47] : memref<8x8x128xf32, #tpu.memory_space<vmem>>, vector<1x8x128xf32>
    %190 = vector.shape_cast %189 : vector<1x8x128xf32> to vector<8x128xf32>
    %191 = vector.shape_cast %187 : vector<8x128xf32> to vector<1x8x128xf32>
    tpu.vector_store %arg6[%188, %c0_46, %c0_47], %191 {strides = array<i32>} : memref<8x8x128xf32, #tpu.memory_space<vmem>>, vector<1x8x128xf32>,
    %c5_i32 = arith.constant 5 : i32
    %192 = arith.index_cast %c5_i32 : i32 to index
    %c0_48 = arith.constant 0 : index
    %c0_49 = arith.constant 0 : index
    %193 = vector.load %arg1[%192, %c0_48, %c0_49] : memref<8x8x384xf32, #tpu.memory_space<vmem>>, vector<1x8x384xf32>
    %194 = vector.shape_cast %193 : vector<1x8x384xf32> to vector<8x384xf32>
    %195 = arith.addf %194, %3 : vector<8x384xf32>
    %cst_50 = arith.constant dense<0.000000e+00> : vector<8x384xf32>
    %196 = tpu.matmul %187, %4, %cst_50 {dimension_numbers = #tpu.dot_dimension_numbers<[1], [0], [0], [1], [0, 0, 1, 1], [], []>} : vector<8x128xf32>, vector<128x384xf32>, vector<8x384xf32> -> vector<8x384xf32>
    %197 = vector.broadcast %5 : vector<1x384xf32> to vector<8x384xf32>
    %198 = arith.addf %196, %197 : vector<8x384xf32>
    %199 = vector.extract_strided_slice %195 {offsets = [0, 0], sizes = [8, 128], strides = [1, 1]} : vector<8x384xf32> to vector<8x128xf32>
    %200 = vector.extract_strided_slice %198 {offsets = [0, 0], sizes = [8, 128], strides = [1, 1]} : vector<8x384xf32> to vector<8x128xf32>
    %201 = arith.addf %199, %200 : vector<8x128xf32>
    %202 = arith.negf %201 : vector<8x128xf32>
    %203 = math.exp %202 : vector<8x128xf32>
    %cst_51 = arith.constant 1.000000e+00 : f32
    %204 = vector.broadcast %cst_51 : f32 to vector<8x128xf32>
    %205 = arith.addf %204, %203 : vector<8x128xf32>
    %206 = arith.divf %204, %205 : vector<8x128xf32>
    %207 = vector.extract_strided_slice %195 {offsets = [0, 128], sizes = [8, 128], strides = [1, 1]} : vector<8x384xf32> to vector<8x128xf32>
    %208 = vector.extract_strided_slice %198 {offsets = [0, 128], sizes = [8, 128], strides = [1, 1]} : vector<8x384xf32> to vector<8x128xf32>
    %209 = arith.addf %207, %208 : vector<8x128xf32>
    %210 = arith.negf %209 : vector<8x128xf32>
    %211 = math.exp %210 : vector<8x128xf32>
    %cst_52 = arith.constant 1.000000e+00 : f32
    %212 = vector.broadcast %cst_52 : f32 to vector<8x128xf32>
    %213 = arith.addf %212, %211 : vector<8x128xf32>
    %214 = arith.divf %212, %213 : vector<8x128xf32>
    %215 = vector.extract_strided_slice %195 {offsets = [0, 256], sizes = [8, 128], strides = [1, 1]} : vector<8x384xf32> to vector<8x128xf32>
    %216 = vector.extract_strided_slice %198 {offsets = [0, 256], sizes = [8, 128], strides = [1, 1]} : vector<8x384xf32> to vector<8x128xf32>
    %217 = arith.mulf %206, %216 : vector<8x128xf32>
    %218 = arith.addf %215, %217 : vector<8x128xf32>
    %219 = math.tanh %218 : vector<8x128xf32>
    %cst_53 = arith.constant 1.000000e+00 : f32
    %220 = vector.broadcast %cst_53 : f32 to vector<8x128xf32>
    %221 = arith.subf %220, %214 : vector<8x128xf32>
    %222 = arith.mulf %221, %219 : vector<8x128xf32>
    %223 = arith.mulf %214, %187 : vector<8x128xf32>
    %224 = arith.addf %222, %223 : vector<8x128xf32>
    %225 = arith.index_cast %c5_i32 : i32 to index
    %c0_54 = arith.constant 0 : index
    %c0_55 = arith.constant 0 : index
    %226 = vector.load %arg6[%225, %c0_54, %c0_55] : memref<8x8x128xf32, #tpu.memory_space<vmem>>, vector<1x8x128xf32>
    %227 = vector.shape_cast %226 : vector<1x8x128xf32> to vector<8x128xf32>
    %228 = vector.shape_cast %224 : vector<8x128xf32> to vector<1x8x128xf32>
    tpu.vector_store %arg6[%225, %c0_54, %c0_55], %228 {strides = array<i32>} : memref<8x8x128xf32, #tpu.memory_space<vmem>>, vector<1x8x128xf32>,
    %c6_i32 = arith.constant 6 : i32
    %229 = arith.index_cast %c6_i32 : i32 to index
    %c0_56 = arith.constant 0 : index
    %c0_57 = arith.constant 0 : index
    %230 = vector.load %arg1[%229, %c0_56, %c0_57] : memref<8x8x384xf32, #tpu.memory_space<vmem>>, vector<1x8x384xf32>
    %231 = vector.shape_cast %230 : vector<1x8x384xf32> to vector<8x384xf32>
    %232 = arith.addf %231, %3 : vector<8x384xf32>
    %cst_58 = arith.constant dense<0.000000e+00> : vector<8x384xf32>
    %233 = tpu.matmul %224, %4, %cst_58 {dimension_numbers = #tpu.dot_dimension_numbers<[1], [0], [0], [1], [0, 0, 1, 1], [], []>} : vector<8x128xf32>, vector<128x384xf32>, vector<8x384xf32> -> vector<8x384xf32>
    %234 = vector.broadcast %5 : vector<1x384xf32> to vector<8x384xf32>
    %235 = arith.addf %233, %234 : vector<8x384xf32>
    %236 = vector.extract_strided_slice %232 {offsets = [0, 0], sizes = [8, 128], strides = [1, 1]} : vector<8x384xf32> to vector<8x128xf32>
    %237 = vector.extract_strided_slice %235 {offsets = [0, 0], sizes = [8, 128], strides = [1, 1]} : vector<8x384xf32> to vector<8x128xf32>
    %238 = arith.addf %236, %237 : vector<8x128xf32>
    %239 = arith.negf %238 : vector<8x128xf32>
    %240 = math.exp %239 : vector<8x128xf32>
    %cst_59 = arith.constant 1.000000e+00 : f32
    %241 = vector.broadcast %cst_59 : f32 to vector<8x128xf32>
    %242 = arith.addf %241, %240 : vector<8x128xf32>
    %243 = arith.divf %241, %242 : vector<8x128xf32>
    %244 = vector.extract_strided_slice %232 {offsets = [0, 128], sizes = [8, 128], strides = [1, 1]} : vector<8x384xf32> to vector<8x128xf32>
    %245 = vector.extract_strided_slice %235 {offsets = [0, 128], sizes = [8, 128], strides = [1, 1]} : vector<8x384xf32> to vector<8x128xf32>
    %246 = arith.addf %244, %245 : vector<8x128xf32>
    %247 = arith.negf %246 : vector<8x128xf32>
    %248 = math.exp %247 : vector<8x128xf32>
    %cst_60 = arith.constant 1.000000e+00 : f32
    %249 = vector.broadcast %cst_60 : f32 to vector<8x128xf32>
    %250 = arith.addf %249, %248 : vector<8x128xf32>
    %251 = arith.divf %249, %250 : vector<8x128xf32>
    %252 = vector.extract_strided_slice %232 {offsets = [0, 256], sizes = [8, 128], strides = [1, 1]} : vector<8x384xf32> to vector<8x128xf32>
    %253 = vector.extract_strided_slice %235 {offsets = [0, 256], sizes = [8, 128], strides = [1, 1]} : vector<8x384xf32> to vector<8x128xf32>
    %254 = arith.mulf %243, %253 : vector<8x128xf32>
    %255 = arith.addf %252, %254 : vector<8x128xf32>
    %256 = math.tanh %255 : vector<8x128xf32>
    %cst_61 = arith.constant 1.000000e+00 : f32
    %257 = vector.broadcast %cst_61 : f32 to vector<8x128xf32>
    %258 = arith.subf %257, %251 : vector<8x128xf32>
    %259 = arith.mulf %258, %256 : vector<8x128xf32>
    %260 = arith.mulf %251, %224 : vector<8x128xf32>
    %261 = arith.addf %259, %260 : vector<8x128xf32>
    %262 = arith.index_cast %c6_i32 : i32 to index
    %c0_62 = arith.constant 0 : index
    %c0_63 = arith.constant 0 : index
    %263 = vector.load %arg6[%262, %c0_62, %c0_63] : memref<8x8x128xf32, #tpu.memory_space<vmem>>, vector<1x8x128xf32>
    %264 = vector.shape_cast %263 : vector<1x8x128xf32> to vector<8x128xf32>
    %265 = vector.shape_cast %261 : vector<8x128xf32> to vector<1x8x128xf32>
    tpu.vector_store %arg6[%262, %c0_62, %c0_63], %265 {strides = array<i32>} : memref<8x8x128xf32, #tpu.memory_space<vmem>>, vector<1x8x128xf32>,
    %c7_i32 = arith.constant 7 : i32
    %266 = arith.index_cast %c7_i32 : i32 to index
    %c0_64 = arith.constant 0 : index
    %c0_65 = arith.constant 0 : index
    %267 = vector.load %arg1[%266, %c0_64, %c0_65] : memref<8x8x384xf32, #tpu.memory_space<vmem>>, vector<1x8x384xf32>
    %268 = vector.shape_cast %267 : vector<1x8x384xf32> to vector<8x384xf32>
    %269 = arith.addf %268, %3 : vector<8x384xf32>
    %cst_66 = arith.constant dense<0.000000e+00> : vector<8x384xf32>
    %270 = tpu.matmul %261, %4, %cst_66 {dimension_numbers = #tpu.dot_dimension_numbers<[1], [0], [0], [1], [0, 0, 1, 1], [], []>} : vector<8x128xf32>, vector<128x384xf32>, vector<8x384xf32> -> vector<8x384xf32>
    %271 = vector.broadcast %5 : vector<1x384xf32> to vector<8x384xf32>
    %272 = arith.addf %270, %271 : vector<8x384xf32>
    %273 = vector.extract_strided_slice %269 {offsets = [0, 0], sizes = [8, 128], strides = [1, 1]} : vector<8x384xf32> to vector<8x128xf32>
    %274 = vector.extract_strided_slice %272 {offsets = [0, 0], sizes = [8, 128], strides = [1, 1]} : vector<8x384xf32> to vector<8x128xf32>
    %275 = arith.addf %273, %274 : vector<8x128xf32>
    %276 = arith.negf %275 : vector<8x128xf32>
    %277 = math.exp %276 : vector<8x128xf32>
    %cst_67 = arith.constant 1.000000e+00 : f32
    %278 = vector.broadcast %cst_67 : f32 to vector<8x128xf32>
    %279 = arith.addf %278, %277 : vector<8x128xf32>
    %280 = arith.divf %278, %279 : vector<8x128xf32>
    %281 = vector.extract_strided_slice %269 {offsets = [0, 128], sizes = [8, 128], strides = [1, 1]} : vector<8x384xf32> to vector<8x128xf32>
    %282 = vector.extract_strided_slice %272 {offsets = [0, 128], sizes = [8, 128], strides = [1, 1]} : vector<8x384xf32> to vector<8x128xf32>
    %283 = arith.addf %281, %282 : vector<8x128xf32>
    %284 = arith.negf %283 : vector<8x128xf32>
    %285 = math.exp %284 : vector<8x128xf32>
    %cst_68 = arith.constant 1.000000e+00 : f32
    %286 = vector.broadcast %cst_68 : f32 to vector<8x128xf32>
    %287 = arith.addf %286, %285 : vector<8x128xf32>
    %288 = arith.divf %286, %287 : vector<8x128xf32>
    %289 = vector.extract_strided_slice %269 {offsets = [0, 256], sizes = [8, 128], strides = [1, 1]} : vector<8x384xf32> to vector<8x128xf32>
    %290 = vector.extract_strided_slice %272 {offsets = [0, 256], sizes = [8, 128], strides = [1, 1]} : vector<8x384xf32> to vector<8x128xf32>
    %291 = arith.mulf %280, %290 : vector<8x128xf32>
    %292 = arith.addf %289, %291 : vector<8x128xf32>
    %293 = math.tanh %292 : vector<8x128xf32>
    %cst_69 = arith.constant 1.000000e+00 : f32
    %294 = vector.broadcast %cst_69 : f32 to vector<8x128xf32>
    %295 = arith.subf %294, %288 : vector<8x128xf32>
    %296 = arith.mulf %295, %293 : vector<8x128xf32>
    %297 = arith.mulf %288, %261 : vector<8x128xf32>
    %298 = arith.addf %296, %297 : vector<8x128xf32>
    %299 = arith.index_cast %c7_i32 : i32 to index
    %c0_70 = arith.constant 0 : index
    %c0_71 = arith.constant 0 : index
    %300 = vector.load %arg6[%299, %c0_70, %c0_71] : memref<8x8x128xf32, #tpu.memory_space<vmem>>, vector<1x8x128xf32>
    %301 = vector.shape_cast %300 : vector<1x8x128xf32> to vector<8x128xf32>
    %302 = vector.shape_cast %298 : vector<8x128xf32> to vector<1x8x128xf32>
    tpu.vector_store %arg6[%299, %c0_70, %c0_71], %302 {strides = array<i32>} : memref<8x8x128xf32, #tpu.memory_space<vmem>>, vector<1x8x128xf32>,
    %c8_i32 = arith.constant 8 : i32
    %c0_72 = arith.constant 0 : index
    %c0_73 = arith.constant 0 : index
    %303 = vector.load %arg8[%c0_72, %c0_73] : memref<8x128xf32, #tpu.memory_space<vmem>>, vector<8x128xf32>
    tpu.vector_store %arg8[%c0_72, %c0_73], %298 {strides = array<i32>} : memref<8x128xf32, #tpu.memory_space<vmem>>, vector<8x128xf32>,
    %c0_i32_74 = arith.constant 0 : i32
    %304 = arith.cmpi eq, %arg0, %c0_i32_74 : i32
    %305 = arith.extui %304 : i1 to i32
    %c0_i32_75 = arith.constant 0 : i32
    %306 = arith.cmpi ne, %305, %c0_i32_75 : i32
    scf.if %306 {
      %c0_76 = arith.constant 0 : index
      %c0_77 = arith.constant 0 : index
      %307 = vector.load %arg7[%c0_76, %c0_77] : memref<8x128xf32, #tpu.memory_space<vmem>>, vector<8x128xf32>
      tpu.vector_store %arg7[%c0_76, %c0_77], %298 {strides = array<i32>} : memref<8x128xf32, #tpu.memory_space<vmem>>, vector<8x128xf32>,
    } else {
    }
    return
  }
  func.func @transform_0(%arg0: i32) -> (i32, i32, i32) {
    %c0_i32 = arith.constant 0 : i32
    %c0_i32_0 = arith.constant 0 : i32
    %c0_i32_1 = arith.constant 0 : i32
    return %arg0, %c0_i32, %c0_i32_0 : i32, i32, i32
  }
  func.func @transform_1(%arg0: i32) -> (i32, i32) {
    %c0_i32 = arith.constant 0 : i32
    %c0_i32_0 = arith.constant 0 : i32
    %c0_i32_1 = arith.constant 0 : i32
    return %c0_i32, %c0_i32_0 : i32, i32
  }
  func.func @transform_2(%arg0: i32) -> (i32, i32) {
    %c0_i32 = arith.constant 0 : i32
    %c0_i32_0 = arith.constant 0 : i32
    %c0_i32_1 = arith.constant 0 : i32
    return %c0_i32, %c0_i32_0 : i32, i32
  }
  func.func @transform_3(%arg0: i32) -> (i32, i32) {
    %c0_i32 = arith.constant 0 : i32
    %c0_i32_0 = arith.constant 0 : i32
    %c0_i32_1 = arith.constant 0 : i32
    return %c0_i32, %c0_i32_0 : i32, i32
  }
  func.func @transform_4(%arg0: i32) -> (i32, i32) {
    %c0_i32 = arith.constant 0 : i32
    %c0_i32_0 = arith.constant 0 : i32
    %c0_i32_1 = arith.constant 0 : i32
    return %c0_i32, %c0_i32_0 : i32, i32
  }
  func.func @transform_5(%arg0: i32) -> (i32, i32, i32) {
    %c0_i32 = arith.constant 0 : i32
    %c0_i32_0 = arith.constant 0 : i32
    %c0_i32_1 = arith.constant 0 : i32
    return %arg0, %c0_i32, %c0_i32_0 : i32, i32, i32
  }
  func.func @transform_6(%arg0: i32) -> (i32, i32) {
    %c0_i32 = arith.constant 0 : i32
    %c0_i32_0 = arith.constant 0 : i32
    %c0_i32_1 = arith.constant 0 : i32
    return %c0_i32, %c0_i32_0 : i32, i32
  }
}

module attributes {stable_mosaic.version = 11 : i64} {
  func.func @_matmul_bias_kernel(%arg0: i32, %arg1: i32, %arg2: memref<64x128xf32, #tpu.memory_space<vmem>>, %arg3: memref<128x128xf32, #tpu.memory_space<vmem>>, %arg4: memref<1x128xf32, #tpu.memory_space<vmem>>, %arg5: memref<64x128xf32, #tpu.memory_space<vmem>>) attributes {dimension_semantics = [#tpu.dimension_semantics<parallel>, #tpu.dimension_semantics<parallel>], iteration_bounds = array<i64: 1, 1>, scalar_prefetch = 0 : i64, scratch_operands = 0 : i64, tpu.core_type = #tpu.core_type<tc>, window_params = [{transform_indices = @transform_0, window_bounds = array<i64: 64, 128>}, {transform_indices = @transform_1, window_bounds = array<i64: 128, 128>}, {transform_indices = @transform_2, window_bounds = array<i64: 1, 128>}, {transform_indices = @transform_3, window_bounds = array<i64: 64, 128>}]} {
    %c0 = arith.constant 0 : index
    %c0_0 = arith.constant 0 : index
    %0 = vector.load %arg2[%c0, %c0_0] : memref<64x128xf32, #tpu.memory_space<vmem>>, vector<64x128xf32>
    %c0_1 = arith.constant 0 : index
    %c0_2 = arith.constant 0 : index
    %1 = vector.load %arg3[%c0_1, %c0_2] : memref<128x128xf32, #tpu.memory_space<vmem>>, vector<128x128xf32>
    %cst = arith.constant dense<0.000000e+00> : vector<64x128xf32>
    %2 = tpu.matmul %0, %1, %cst {dimension_numbers = #tpu.dot_dimension_numbers<[1], [0], [0], [1], [0, 0, 1, 1], [], []>} : vector<64x128xf32>, vector<128x128xf32>, vector<64x128xf32> -> vector<64x128xf32>
    %c0_3 = arith.constant 0 : index
    %c0_4 = arith.constant 0 : index
    %3 = vector.load %arg4[%c0_3, %c0_4] : memref<1x128xf32, #tpu.memory_space<vmem>>, vector<1x128xf32>
    %4 = vector.broadcast %3 : vector<1x128xf32> to vector<64x128xf32>
    %5 = arith.addf %2, %4 : vector<64x128xf32>
    %c0_5 = arith.constant 0 : index
    %c0_6 = arith.constant 0 : index
    %6 = vector.load %arg5[%c0_5, %c0_6] : memref<64x128xf32, #tpu.memory_space<vmem>>, vector<64x128xf32>
    tpu.vector_store %arg5[%c0_5, %c0_6], %5 {strides = array<i32>} : memref<64x128xf32, #tpu.memory_space<vmem>>, vector<64x128xf32>,
    return
  }
  func.func @transform_0(%arg0: i32, %arg1: i32) -> (i32, i32) {
    %c0_i32 = arith.constant 0 : i32
    %c0_i32_0 = arith.constant 0 : i32
    return %arg0, %c0_i32 : i32, i32
  }
  func.func @transform_1(%arg0: i32, %arg1: i32) -> (i32, i32) {
    %c0_i32 = arith.constant 0 : i32
    %c0_i32_0 = arith.constant 0 : i32
    return %c0_i32, %arg1 : i32, i32
  }
  func.func @transform_2(%arg0: i32, %arg1: i32) -> (i32, i32) {
    %c0_i32 = arith.constant 0 : i32
    %c0_i32_0 = arith.constant 0 : i32
    return %c0_i32, %arg1 : i32, i32
  }
  func.func @transform_3(%arg0: i32, %arg1: i32) -> (i32, i32) {
    %c0_i32 = arith.constant 0 : i32
    return %arg0, %arg1 : i32, i32
  }
}

</mosaic_0001>

<llo_original>
// kernel: encoder_decoder_forward.9
$region0: #{encoder_decoder_forward.9}
  #allocation0 [shape = 'u32[]', space=smem, size = 0x4, offset = 0x4, fixed_abs, tag = 'smem constant byte address 0x4 - core index']
  #allocation1 [shape = 'u32[72,128]{1,0:T(1,128)}', space=vmem, size = 0x9000, scoped, tag = 'internal scratch']
  %s0 = inlined_call_operand.vmem [shape: f32[8,128], index: 0, kind: input, shape index: {}]
  %s1 = inlined_call_operand.vmem [shape: f32[128,384], index: 1, kind: input, shape index: {}]
  %s2 = inlined_call_operand.vmem [shape: f32[1,384], index: 2, kind: input, shape index: {}]
  %s3 = inlined_call_operand.vmem [shape: f32[8,384], index: 3, kind: output, shape index: {}]
  %s4 = sld [smem:[#allocation0]]
  $region22: #{encoder_decoder_forward.9} parent=0
    _
  %s6 = ssub.s32 1, %s4
  %s7 = scalar_select 0, %s6, %s4
  // Predicated region
  $region2: #{encoder_decoder_forward.9} parent=0 // pred_check
    _
  $region3: #{encoder_decoder_forward.9} parent=0 // pred_check_branch
    %9 = sbr.rel (0) target = $region5
  $region4: #{encoder_decoder_forward.9} parent=0 // pred_region
    _
  $region5: #{encoder_decoder_forward.9} parent=0 // pred_fallthru
    _
  // Predicated region
  $region6: #{encoder_decoder_forward.9} parent=0 // pred_check
    _
  $region7: #{encoder_decoder_forward.9} parent=0 // pred_check_branch
    %11 = sbr.rel (0) target = $region9
  $region8: #{encoder_decoder_forward.9} parent=0 // pred_region
    _
  $region9: #{encoder_decoder_forward.9} parent=0 // pred_fallthru
    _
  // Predicated region
  $region10: #{encoder_decoder_forward.9} parent=0 // pred_check
    _
  $region11: #{encoder_decoder_forward.9} parent=0 // pred_check_branch
    %13 = sbr.rel (0) target = $region13
  $region12: #{encoder_decoder_forward.9} parent=0 // pred_region
    _
  $region13: #{encoder_decoder_forward.9} parent=0 // pred_fallthru
    _
  %v14 = vld [vmem:[%s0] sm:$0xff]
  %v15 = vld [vmem:[%s1] sm:$0xff]
  %v16 = vld [vmem:[%s1 + $0x8] sm:$0xff]
  %v17 = vld [vmem:[%s1 + $0x10] sm:$0xff]
  %v18 = vld [vmem:[%s1 + $0x18] sm:$0xff]
  %v19 = vld [vmem:[%s1 + $0x20] sm:$0xff]
  %v20 = vld [vmem:[%s1 + $0x28] sm:$0xff]
  %v21 = vld [vmem:[%s1 + $0x30] sm:$0xff]
  %v22 = vld [vmem:[%s1 + $0x38] sm:$0xff]
  %v23 = vld [vmem:[%s1 + $0x40] sm:$0xff]
  %v24 = vld [vmem:[%s1 + $0x48] sm:$0xff]
  %v25 = vld [vmem:[%s1 + $0x50] sm:$0xff]
  %v26 = vld [vmem:[%s1 + $0x58] sm:$0xff]
  %v27 = vld [vmem:[%s1 + $0x60] sm:$0xff]
  %v28 = vld [vmem:[%s1 + $0x68] sm:$0xff]
  %v29 = vld [vmem:[%s1 + $0x70] sm:$0xff]
  %v30 = vld [vmem:[%s1 + $0x78] sm:$0xff]
  %v31 = vld [vmem:[%s1 + $0x80] sm:$0xff]
  %v32 = vld [vmem:[%s1 + $0x88] sm:$0xff]
  %v33 = vld [vmem:[%s1 + $0x90] sm:$0xff]
  %v34 = vld [vmem:[%s1 + $0x98] sm:$0xff]
  %v35 = vld [vmem:[%s1 + $0xa0] sm:$0xff]
  %v36 = vld [vmem:[%s1 + $0xa8] sm:$0xff]
  %v37 = vld [vmem:[%s1 + $0xb0] sm:$0xff]
  %v38 = vld [vmem:[%s1 + $0xb8] sm:$0xff]
  %v39 = vld [vmem:[%s1 + $0xc0] sm:$0xff]
  %v40 = vld [vmem:[%s1 + $0xc8] sm:$0xff]
  %v41 = vld [vmem:[%s1 + $0xd0] sm:$0xff]
  %v42 = vld [vmem:[%s1 + $0xd8] sm:$0xff]
  %v43 = vld [vmem:[%s1 + $0xe0] sm:$0xff]
  %v44 = vld [vmem:[%s1 + $0xe8] sm:$0xff]
  %v45 = vld [vmem:[%s1 + $0xf0] sm:$0xff]
  %v46 = vld [vmem:[%s1 + $0xf8] sm:$0xff]
  %v47 = vld [vmem:[%s1 + $0x100] sm:$0xff]
  %v48 = vld [vmem:[%s1 + $0x108] sm:$0xff]
  %v49 = vld [vmem:[%s1 + $0x110] sm:$0xff]
  %v50 = vld [vmem:[%s1 + $0x118] sm:$0xff]
  %v51 = vld [vmem:[%s1 + $0x120] sm:$0xff]
  %v52 = vld [vmem:[%s1 + $0x128] sm:$0xff]
  %v53 = vld [vmem:[%s1 + $0x130] sm:$0xff]
  %v54 = vld [vmem:[%s1 + $0x138] sm:$0xff]
  %v55 = vld [vmem:[%s1 + $0x140] sm:$0xff]
  %v56 = vld [vmem:[%s1 + $0x148] sm:$0xff]
  %v57 = vld [vmem:[%s1 + $0x150] sm:$0xff]
  %v58 = vld [vmem:[%s1 + $0x158] sm:$0xff]
  %v59 = vld [vmem:[%s1 + $0x160] sm:$0xff]
  %v60 = vld [vmem:[%s1 + $0x168] sm:$0xff]
  %v61 = vld [vmem:[%s1 + $0x170] sm:$0xff]
  %v62 = vld [vmem:[%s1 + $0x178] sm:$0xff]
  %v63 = vld [vmem:[%s2] sm:$0x7]
  %v65 = vperm.slane %v63, 0
  %v66 = vperm.slane %v63, 1
  %v67 = vperm.slane %v63, 2
  %71 = vmatpush.msra.mxu0 %v60
  %72 = vmatpush.msra.mxu0 %v57
  %73 = vmatpush.msra.mxu0 %v54
  %74 = vmatpush.msra.mxu0 %v51
  %75 = vmatpush.msra.mxu0 %v48
  %76 = vmatpush.msra.mxu0 %v45
  %77 = vmatpush.msra.mxu0 %v42
  %78 = vmatpush.msra.mxu0 %v39
  %79 = vmatpush.msra.mxu0 %v36
  %80 = vmatpush.msra.mxu0 %v33
  %81 = vmatpush.msra.mxu0 %v30
  %82 = vmatpush.msra.mxu0 %v27
  %83 = vmatpush.msra.mxu0 %v24
  %84 = vmatpush.msra.mxu0 %v21
  %85 = vmatpush.msra.mxu0 %v18
  %86 = vmatpush.msra.mxu0 %v15
  %87 = vmatmul.f32.gmra.mxu0 %v14
  %v88 = vpop.f32.mrf.mxu0
  %v89 = vadd.f32 %v65, %v88
  %90 = vdwg.mxu0
  %91 = vmatpush.msra.mxu0 %v61
  %92 = vmatpush.msra.mxu0 %v58
  %93 = vmatpush.msra.mxu0 %v55
  %94 = vmatpush.msra.mxu0 %v52
  %95 = vmatpush.msra.mxu0 %v49
  %96 = vmatpush.msra.mxu0 %v46
  %97 = vmatpush.msra.mxu0 %v43
  %98 = vmatpush.msra.mxu0 %v40
  %99 = vmatpush.msra.mxu0 %v37
  %100 = vmatpush.msra.mxu0 %v34
  %101 = vmatpush.msra.mxu0 %v31
  %102 = vmatpush.msra.mxu0 %v28
  %103 = vmatpush.msra.mxu0 %v25
  %104 = vmatpush.msra.mxu0 %v22
  %105 = vmatpush.msra.mxu0 %v19
  %106 = vmatpush.msra.mxu0 %v16
  %107 = vmatmul.f32.gmra.mxu0 %v14
  %v108 = vpop.f32.mrf.mxu0
  %v109 = vadd.f32 %v66, %v108
  %110 = vdwg.mxu0
  %111 = vmatpush.msra.mxu0 %v62
  %112 = vmatpush.msra.mxu0 %v59
  %113 = vmatpush.msra.mxu0 %v56
  %114 = vmatpush.msra.mxu0 %v53
  %115 = vmatpush.msra.mxu0 %v50
  %116 = vmatpush.msra.mxu0 %v47
  %117 = vmatpush.msra.mxu0 %v44
  %118 = vmatpush.msra.mxu0 %v41
  %119 = vmatpush.msra.mxu0 %v38
  %120 = vmatpush.msra.mxu0 %v35
  %121 = vmatpush.msra.mxu0 %v32
  %122 = vmatpush.msra.mxu0 %v29
  %123 = vmatpush.msra.mxu0 %v26
  %124 = vmatpush.msra.mxu0 %v23
  %125 = vmatpush.msra.mxu0 %v20
  %126 = vmatpush.msra.mxu0 %v17
  %127 = vmatmul.f32.gmra.mxu0 %v14
  %v128 = vpop.f32.mrf.mxu0
  %v129 = vadd.f32 %v67, %v128
  %130 = vdwg.mxu0
  %131 = vst [vmem:[%s3] sm:$0xff] %v89
  %132 = vst [vmem:[%s3 + $0x8] sm:$0xff] %v109
  %133 = vst [vmem:[%s3 + $0x10] sm:$0xff] %v129
  // Predicated region
  $region14: #{encoder_decoder_forward.9} parent=0 // pred_check
    _
  $region15: #{encoder_decoder_forward.9} parent=0 // pred_check_branch
    %135 = sbr.rel (0) target = $region17
  $region16: #{encoder_decoder_forward.9} parent=0 // pred_region
    _
  $region17: #{encoder_decoder_forward.9} parent=0 // pred_fallthru
    _
  // Predicated region
  $region18: #{encoder_decoder_forward.9} parent=0 // pred_check
    _
  $region19: #{encoder_decoder_forward.9} parent=0 // pred_check_branch
    %137 = sbr.rel (0) target = $region21
  $region20: #{encoder_decoder_forward.9} parent=0 // pred_region
    _
  $region21: #{encoder_decoder_forward.9} parent=0 // pred_fallthru
    _

// kernel: encoder_decoder_forward.6
$region0: #{encoder_decoder_forward.6}
  #allocation0 [shape = 'u32[]', space=smem, size = 0x4, offset = 0x4, fixed_abs, tag = 'smem constant byte address 0x4 - core index']
  #allocation1 [shape = 'u32[72,128]{1,0:T(1,128)}', space=vmem, size = 0x9000, scoped, tag = 'internal scratch']
  %s0 = inlined_call_operand.vmem [shape: f32[64,16], index: 0, kind: input, shape index: {}]
  %s1 = inlined_call_operand.vmem [shape: f32[16,384], index: 1, kind: input, shape index: {}]
  %s2 = inlined_call_operand.vmem [shape: f32[1,384], index: 2, kind: input, shape index: {}]
  %s3 = inlined_call_operand.vmem [shape: f32[64,384], index: 3, kind: output, shape index: {}]
  %s4 = sld [smem:[#allocation0]]
  $region22: #{encoder_decoder_forward.6} parent=0
    _
  %s6 = ssub.s32 1, %s4
  %s7 = scalar_select 0, %s6, %s4
  // Predicated region
  $region2: #{encoder_decoder_forward.6} parent=0 // pred_check
    _
  $region3: #{encoder_decoder_forward.6} parent=0 // pred_check_branch
    %9 = sbr.rel (0) target = $region5
  $region4: #{encoder_decoder_forward.6} parent=0 // pred_region
    _
  $region5: #{encoder_decoder_forward.6} parent=0 // pred_fallthru
    _
  // Predicated region
  $region6: #{encoder_decoder_forward.6} parent=0 // pred_check
    _
  $region7: #{encoder_decoder_forward.6} parent=0 // pred_check_branch
    %11 = sbr.rel (0) target = $region9
  $region8: #{encoder_decoder_forward.6} parent=0 // pred_region
    _
  $region9: #{encoder_decoder_forward.6} parent=0 // pred_fallthru
    _
  // Predicated region
  $region10: #{encoder_decoder_forward.6} parent=0 // pred_check
    _
  $region11: #{encoder_decoder_forward.6} parent=0 // pred_check_branch
    %13 = sbr.rel (0) target = $region13
  $region12: #{encoder_decoder_forward.6} parent=0 // pred_region
    _
  $region13: #{encoder_decoder_forward.6} parent=0 // pred_fallthru
    _
  %v14 = vld [vmem:[%s0] sm:$0xff]
  %v15 = vld [vmem:[%s0 + $0x8] sm:$0xff]
  %v16 = vld [vmem:[%s0 + $0x10] sm:$0xff]
  %v17 = vld [vmem:[%s0 + $0x18] sm:$0xff]
  %v18 = vld [vmem:[%s0 + $0x20] sm:$0xff]
  %v19 = vld [vmem:[%s0 + $0x28] sm:$0xff]
  %v20 = vld [vmem:[%s0 + $0x30] sm:$0xff]
  %v21 = vld [vmem:[%s0 + $0x38] sm:$0xff]
  %v22 = vld [vmem:[%s1] sm:$0xff]
  %v23 = vld [vmem:[%s1 + $0x8] sm:$0xff]
  %v24 = vld [vmem:[%s1 + $0x10] sm:$0xff]
  %v25 = vld [vmem:[%s1 + $0x18] sm:$0xff]
  %v26 = vld [vmem:[%s1 + $0x20] sm:$0xff]
  %v27 = vld [vmem:[%s1 + $0x28] sm:$0xff]
  %v28 = vld [vmem:[%s2] sm:$0x7]
  %v30 = vperm.slane %v28, 0
  %v31 = vperm.slane %v28, 1
  %v32 = vperm.slane %v28, 2
  %vm36 = vcmask 130048
  %v38 = vsel %vm36, %v14, 0
  %v41 = vsel %vm36, %v15, 0
  %v44 = vsel %vm36, %v16, 0
  %v47 = vsel %vm36, %v17, 0
  %v50 = vsel %vm36, %v18, 0
  %v53 = vsel %vm36, %v19, 0
  %v56 = vsel %vm36, %v20, 0
  %v59 = vsel %vm36, %v21, 0
  %61 = vmatpush.msra.mxu0 0.0
  %62 = vmatpush.msra.mxu0 0.0
  %63 = vmatpush.msra.mxu0 0.0
  %64 = vmatpush.msra.mxu0 0.0
  %65 = vmatpush.msra.mxu0 0.0
  %66 = vmatpush.msra.mxu0 0.0
  %67 = vmatpush.msra.mxu0 0.0
  %68 = vmatpush.msra.mxu0 0.0
  %69 = vmatpush.msra.mxu0 0.0
  %70 = vmatpush.msra.mxu0 0.0
  %71 = vmatpush.msra.mxu0 0.0
  %72 = vmatpush.msra.mxu0 0.0
  %73 = vmatpush.msra.mxu0 0.0
  %74 = vmatpush.msra.mxu0 0.0
  %75 = vmatpush.msra.mxu0 %v25
  %76 = vmatpush.msra.mxu0 %v22
  %77 = vmatmul.f32.gmra.mxu0 %v38
  %v78 = vpop.f32.mrf.mxu0
  %v79 = vadd.f32 %v30, %v78
  %80 = vmatmul.f32.gmra.mxu0 %v41
  %v81 = vpop.f32.mrf.mxu0
  %v82 = vadd.f32 %v30, %v81
  %83 = vmatmul.f32.gmra.mxu0 %v44
  %v84 = vpop.f32.mrf.mxu0
  %v85 = vadd.f32 %v30, %v84
  %86 = vmatmul.f32.gmra.mxu0 %v47
  %v87 = vpop.f32.mrf.mxu0
  %v88 = vadd.f32 %v30, %v87
  %89 = vmatmul.f32.gmra.mxu0 %v50
  %v90 = vpop.f32.mrf.mxu0
  %v91 = vadd.f32 %v30, %v90
  %92 = vmatmul.f32.gmra.mxu0 %v53
  %v93 = vpop.f32.mrf.mxu0
  %v94 = vadd.f32 %v30, %v93
  %95 = vmatmul.f32.gmra.mxu0 %v56
  %v96 = vpop.f32.mrf.mxu0
  %v97 = vadd.f32 %v30, %v96
  %98 = vmatmul.f32.gmra.mxu0 %v59
  %v99 = vpop.f32.mrf.mxu0
  %v100 = vadd.f32 %v30, %v99
  %101 = vdwg.mxu0
  %102 = vmatpush.msra.mxu0 0.0
  %103 = vmatpush.msra.mxu0 0.0
  %104 = vmatpush.msra.mxu0 0.0
  %105 = vmatpush.msra.mxu0 0.0
  %106 = vmatpush.msra.mxu0 0.0
  %107 = vmatpush.msra.mxu0 0.0
  %108 = vmatpush.msra.mxu0 0.0
  %109 = vmatpush.msra.mxu0 0.0
  %110 = vmatpush.msra.mxu0 0.0
  %111 = vmatpush.msra.mxu0 0.0
  %112 = vmatpush.msra.mxu0 0.0
  %113 = vmatpush.msra.mxu0 0.0
  %114 = vmatpush.msra.mxu0 0.0
  %115 = vmatpush.msra.mxu0 0.0
  %116 = vmatpush.msra.mxu0 %v26
  %117 = vmatpush.msra.mxu0 %v23
  %118 = vmatmul.f32.gmra.mxu0 %v38
  %v119 = vpop.f32.mrf.mxu0
  %v120 = vadd.f32 %v31, %v119
  %121 = vmatmul.f32.gmra.mxu0 %v41
  %v122 = vpop.f32.mrf.mxu0
  %v123 = vadd.f32 %v31, %v122
  %124 = vmatmul.f32.gmra.mxu0 %v44
  %v125 = vpop.f32.mrf.mxu0
  %v126 = vadd.f32 %v31, %v125
  %127 = vmatmul.f32.gmra.mxu0 %v47
  %v128 = vpop.f32.mrf.mxu0
  %v129 = vadd.f32 %v31, %v128
  %130 = vmatmul.f32.gmra.mxu0 %v50
  %v131 = vpop.f32.mrf.mxu0
  %v132 = vadd.f32 %v31, %v131
  %133 = vmatmul.f32.gmra.mxu0 %v53
  %v134 = vpop.f32.mrf.mxu0
  %v135 = vadd.f32 %v31, %v134
  %136 = vmatmul.f32.gmra.mxu0 %v56
  %v137 = vpop.f32.mrf.mxu0
  %v138 = vadd.f32 %v31, %v137
  %139 = vmatmul.f32.gmra.mxu0 %v59
  %v140 = vpop.f32.mrf.mxu0
  %v141 = vadd.f32 %v31, %v140
  %142 = vdwg.mxu0
  %143 = vmatpush.msra.mxu0 0.0
  %144 = vmatpush.msra.mxu0 0.0
  %145 = vmatpush.msra.mxu0 0.0
  %146 = vmatpush.msra.mxu0 0.0
  %147 = vmatpush.msra.mxu0 0.0
  %148 = vmatpush.msra.mxu0 0.0
  %149 = vmatpush.msra.mxu0 0.0
  %150 = vmatpush.msra.mxu0 0.0
  %151 = vmatpush.msra.mxu0 0.0
  %152 = vmatpush.msra.mxu0 0.0
  %153 = vmatpush.msra.mxu0 0.0
  %154 = vmatpush.msra.mxu0 0.0
  %155 = vmatpush.msra.mxu0 0.0
  %156 = vmatpush.msra.mxu0 0.0
  %157 = vmatpush.msra.mxu0 %v27
  %158 = vmatpush.msra.mxu0 %v24
  %159 = vmatmul.f32.gmra.mxu0 %v38
  %v160 = vpop.f32.mrf.mxu0
  %v161 = vadd.f32 %v32, %v160
  %162 = vmatmul.f32.gmra.mxu0 %v41
  %v163 = vpop.f32.mrf.mxu0
  %v164 = vadd.f32 %v32, %v163
  %165 = vmatmul.f32.gmra.mxu0 %v44
  %v166 = vpop.f32.mrf.mxu0
  %v167 = vadd.f32 %v32, %v166
  %168 = vmatmul.f32.gmra.mxu0 %v47
  %v169 = vpop.f32.mrf.mxu0
  %v170 = vadd.f32 %v32, %v169
  %171 = vmatmul.f32.gmra.mxu0 %v50
  %v172 = vpop.f32.mrf.mxu0
  %v173 = vadd.f32 %v32, %v172
  %174 = vmatmul.f32.gmra.mxu0 %v53
  %v175 = vpop.f32.mrf.mxu0
  %v176 = vadd.f32 %v32, %v175
  %177 = vmatmul.f32.gmra.mxu0 %v56
  %v178 = vpop.f32.mrf.mxu0
  %v179 = vadd.f32 %v32, %v178
  %180 = vmatmul.f32.gmra.mxu0 %v59
  %v181 = vpop.f32.mrf.mxu0
  %v182 = vadd.f32 %v32, %v181
  %183 = vdwg.mxu0
  %184 = vst [vmem:[%s3] sm:$0xff] %v79
  %185 = vst [vmem:[%s3 + $0x8] sm:$0xff] %v120
  %186 = vst [vmem:[%s3 + $0x10] sm:$0xff] %v161
  %187 = vst [vmem:[%s3 + $0x18] sm:$0xff] %v82
  %188 = vst [vmem:[%s3 + $0x20] sm:$0xff] %v123
  %189 = vst [vmem:[%s3 + $0x28] sm:$0xff] %v164
  %190 = vst [vmem:[%s3 + $0x30] sm:$0xff] %v85
  %191 = vst [vmem:[%s3 + $0x38] sm:$0xff] %v126
  %192 = vst [vmem:[%s3 + $0x40] sm:$0xff] %v167
  %193 = vst [vmem:[%s3 + $0x48] sm:$0xff] %v88
  %194 = vst [vmem:[%s3 + $0x50] sm:$0xff] %v129
  %195 = vst [vmem:[%s3 + $0x58] sm:$0xff] %v170
  %196 = vst [vmem:[%s3 + $0x60] sm:$0xff] %v91
  %197 = vst [vmem:[%s3 + $0x68] sm:$0xff] %v132
  %198 = vst [vmem:[%s3 + $0x70] sm:$0xff] %v173
  %199 = vst [vmem:[%s3 + $0x78] sm:$0xff] %v94
  %200 = vst [vmem:[%s3 + $0x80] sm:$0xff] %v135
  %201 = vst [vmem:[%s3 + $0x88] sm:$0xff] %v176
  %202 = vst [vmem:[%s3 + $0x90] sm:$0xff] %v97
  %203 = vst [vmem:[%s3 + $0x98] sm:$0xff] %v138
  %204 = vst [vmem:[%s3 + $0xa0] sm:$0xff] %v179
  %205 = vst [vmem:[%s3 + $0xa8] sm:$0xff] %v100
  %206 = vst [vmem:[%s3 + $0xb0] sm:$0xff] %v141
  %207 = vst [vmem:[%s3 + $0xb8] sm:$0xff] %v182
  // Predicated region
  $region14: #{encoder_decoder_forward.6} parent=0 // pred_check
    _
  $region15: #{encoder_decoder_forward.6} parent=0 // pred_check_branch
    %209 = sbr.rel (0) target = $region17
  $region16: #{encoder_decoder_forward.6} parent=0 // pred_region
    _
  $region17: #{encoder_decoder_forward.6} parent=0 // pred_fallthru
    _
  // Predicated region
  $region18: #{encoder_decoder_forward.6} parent=0 // pred_check
    _
  $region19: #{encoder_decoder_forward.6} parent=0 // pred_check_branch
    %211 = sbr.rel (0) target = $region21
  $region20: #{encoder_decoder_forward.6} parent=0 // pred_region
    _
  $region21: #{encoder_decoder_forward.6} parent=0 // pred_fallthru
    _

// kernel: encoder_decoder_forward.7
$region0: #{encoder_decoder_forward.7}
  #allocation0 [shape = 'u32[]', space=smem, size = 0x4, offset = 0x4, fixed_abs, tag = 'smem constant byte address 0x4 - core index']
  #allocation1 [shape = 'u32[72,128]{1,0:T(1,128)}', space=vmem, size = 0x9000, scoped, tag = 'internal scratch']
  #allocation2 [shape = 'f32[8,128]{1,0:T(8,128)}', space=vmem, size = 0x1000, scoped, tag = 'scratch operand']
  %s0 = inlined_call_operand.vmem [shape: f32[8,8,384], index: 0, kind: input, shape index: {}]
  %s1 = inlined_call_operand.vmem [shape: f32[128,384], index: 1, kind: input, shape index: {}]
  %s2 = inlined_call_operand.vmem [shape: f32[1,384], index: 2, kind: input, shape index: {}]
  %s3 = inlined_call_operand.vmem [shape: f32[8,128], index: 3, kind: input, shape index: {}]
  %s4 = inlined_call_operand.vmem [shape: f32[8,128], index: 4, kind: output, shape index: {}]
  %s5 = sld [smem:[#allocation0]]
  $region34: #{encoder_decoder_forward.7} parent=0
    _
  %s7 = ssub.s32 1, %s5
  %s8 = scalar_select 0, %s7, %s5
  // Predicated region
  $region2: #{encoder_decoder_forward.7} parent=0 // pred_check
    _
  $region3: #{encoder_decoder_forward.7} parent=0 // pred_check_branch
    %10 = sbr.rel (0) target = $region5
  $region4: #{encoder_decoder_forward.7} parent=0 // pred_region
    _
  $region5: #{encoder_decoder_forward.7} parent=0 // pred_fallthru
    _
  // Predicated region
  $region6: #{encoder_decoder_forward.7} parent=0 // pred_check
    _
  $region7: #{encoder_decoder_forward.7} parent=0 // pred_check_branch
    %12 = sbr.rel (0) target = $region9
  $region8: #{encoder_decoder_forward.7} parent=0 // pred_region
    _
  $region9: #{encoder_decoder_forward.7} parent=0 // pred_fallthru
    _
  // Predicated region
  $region10: #{encoder_decoder_forward.7} parent=0 // pred_check
    _
  $region11: #{encoder_decoder_forward.7} parent=0 // pred_check_branch
    %14 = sbr.rel (0) target = $region13
  $region12: #{encoder_decoder_forward.7} parent=0 // pred_region
    _
  $region13: #{encoder_decoder_forward.7} parent=0 // pred_fallthru
    _
  // Predicated region
  $region14: #{encoder_decoder_forward.7} parent=0 // pred_check
    _
  $region15: #{encoder_decoder_forward.7} parent=0 // pred_check_branch
    %16 = sbr.rel (0) target = $region17
  $region16: #{encoder_decoder_forward.7} parent=0 // pred_region
    _
  $region17: #{encoder_decoder_forward.7} parent=0 // pred_fallthru
    _
  %p17 = scmp.eq.s32.totalorder 0, 0
  // Predicated region
  $region18: #{encoder_decoder_forward.7} parent=0 // pred_check
    %p18 = pneg %p17
  $region19: #{encoder_decoder_forward.7} parent=0 // pred_check_branch
    %20 = sbr.rel (%p18) target = $region21
  $region20: #{encoder_decoder_forward.7} parent=0 // pred_region
    %v21 = vld [vmem:[%s3] sm:$0xff]
    %22 = vst [vmem:[#allocation2] sm:$0xff] %v21
  $region21: #{encoder_decoder_forward.7} parent=0 // pred_fallthru
    _
  %v23 = vld [vmem:[%s1] sm:$0xff]
  %v24 = vld [vmem:[%s1 + $0x8] sm:$0xff]
  %v25 = vld [vmem:[%s1 + $0x10] sm:$0xff]
  %v26 = vld [vmem:[%s1 + $0x18] sm:$0xff]
  %v27 = vld [vmem:[%s1 + $0x20] sm:$0xff]
  %v28 = vld [vmem:[%s1 + $0x28] sm:$0xff]
  %v29 = vld [vmem:[%s1 + $0x30] sm:$0xff]
  %v30 = vld [vmem:[%s1 + $0x38] sm:$0xff]
  %v31 = vld [vmem:[%s1 + $0x40] sm:$0xff]
  %v32 = vld [vmem:[%s1 + $0x48] sm:$0xff]
  %v33 = vld [vmem:[%s1 + $0x50] sm:$0xff]
  %v34 = vld [vmem:[%s1 + $0x58] sm:$0xff]
  %v35 = vld [vmem:[%s1 + $0x60] sm:$0xff]
  %v36 = vld [vmem:[%s1 + $0x68] sm:$0xff]
  %v37 = vld [vmem:[%s1 + $0x70] sm:$0xff]
  %v38 = vld [vmem:[%s1 + $0x78] sm:$0xff]
  %v39 = vld [vmem:[%s1 + $0x80] sm:$0xff]
  %v40 = vld [vmem:[%s1 + $0x88] sm:$0xff]
  %v41 = vld [vmem:[%s1 + $0x90] sm:$0xff]
  %v42 = vld [vmem:[%s1 + $0x98] sm:$0xff]
  %v43 = vld [vmem:[%s1 + $0xa0] sm:$0xff]
  %v44 = vld [vmem:[%s1 + $0xa8] sm:$0xff]
  %v45 = vld [vmem:[%s1 + $0xb0] sm:$0xff]
  %v46 = vld [vmem:[%s1 + $0xb8] sm:$0xff]
  %v47 = vld [vmem:[%s1 + $0xc0] sm:$0xff]
  %v48 = vld [vmem:[%s1 + $0xc8] sm:$0xff]
  %v49 = vld [vmem:[%s1 + $0xd0] sm:$0xff]
  %v50 = vld [vmem:[%s1 + $0xd8] sm:$0xff]
  %v51 = vld [vmem:[%s1 + $0xe0] sm:$0xff]
  %v52 = vld [vmem:[%s1 + $0xe8] sm:$0xff]
  %v53 = vld [vmem:[%s1 + $0xf0] sm:$0xff]
  %v54 = vld [vmem:[%s1 + $0xf8] sm:$0xff]
  %v55 = vld [vmem:[%s1 + $0x100] sm:$0xff]
  %v56 = vld [vmem:[%s1 + $0x108] sm:$0xff]
  %v57 = vld [vmem:[%s1 + $0x110] sm:$0xff]
  %v58 = vld [vmem:[%s1 + $0x118] sm:$0xff]
  %v59 = vld [vmem:[%s1 + $0x120] sm:$0xff]
  %v60 = vld [vmem:[%s1 + $0x128] sm:$0xff]
  %v61 = vld [vmem:[%s1 + $0x130] sm:$0xff]
  %v62 = vld [vmem:[%s1 + $0x138] sm:$0xff]
  %v63 = vld [vmem:[%s1 + $0x140] sm:$0xff]
  %v64 = vld [vmem:[%s1 + $0x148] sm:$0xff]
  %v65 = vld [vmem:[%s1 + $0x150] sm:$0xff]
  %v66 = vld [vmem:[%s1 + $0x158] sm:$0xff]
  %v67 = vld [vmem:[%s1 + $0x160] sm:$0xff]
  %v68 = vld [vmem:[%s1 + $0x168] sm:$0xff]
  %v69 = vld [vmem:[%s1 + $0x170] sm:$0xff]
  %v70 = vld [vmem:[%s1 + $0x178] sm:$0xff]
  %v71 = vld [vmem:[%s2] sm:$0x7]
  %v72 = vld [vmem:[#allocation2] sm:$0xff]
  %v73 = vld [vmem:[%s0] sm:$0xff]
  %v74 = vld [vmem:[%s0 + $0x8] sm:$0xff]
  %v75 = vld [vmem:[%s0 + $0x10] sm:$0xff]
  %v77 = vperm.slane %v71, 0
  %v78 = vperm.slane %v71, 1
  %v79 = vperm.slane %v71, 2
  %83 = vmatpush.msra.mxu0 %v68
  %84 = vmatpush.msra.mxu0 %v65
  %85 = vmatpush.msra.mxu0 %v62
  %86 = vmatpush.msra.mxu0 %v59
  %87 = vmatpush.msra.mxu0 %v56
  %88 = vmatpush.msra.mxu0 %v53
  %89 = vmatpush.msra.mxu0 %v50
  %90 = vmatpush.msra.mxu0 %v47
  %91 = vmatpush.msra.mxu0 %v44
  %92 = vmatpush.msra.mxu0 %v41
  %93 = vmatpush.msra.mxu0 %v38
  %94 = vmatpush.msra.mxu0 %v35
  %95 = vmatpush.msra.mxu0 %v32
  %96 = vmatpush.msra.mxu0 %v29
  %97 = vmatpush.msra.mxu0 %v26
  %98 = vmatpush.msra.mxu0 %v23
  %99 = vmatmul.f32.gmra.mxu0 %v72
  %v100 = vpop.f32.mrf.mxu0
  %v101 = vadd.f32 %v77, %v100
  %102 = vdwg.mxu0
  %103 = vmatpush.msra.mxu0 %v69
  %104 = vmatpush.msra.mxu0 %v66
  %105 = vmatpush.msra.mxu0 %v63
  %106 = vmatpush.msra.mxu0 %v60
  %107 = vmatpush.msra.mxu0 %v57
  %108 = vmatpush.msra.mxu0 %v54
  %109 = vmatpush.msra.mxu0 %v51
  %110 = vmatpush.msra.mxu0 %v48
  %111 = vmatpush.msra.mxu0 %v45
  %112 = vmatpush.msra.mxu0 %v42
  %113 = vmatpush.msra.mxu0 %v39
  %114 = vmatpush.msra.mxu0 %v36
  %115 = vmatpush.msra.mxu0 %v33
  %116 = vmatpush.msra.mxu0 %v30
  %117 = vmatpush.msra.mxu0 %v27
  %118 = vmatpush.msra.mxu0 %v24
  %119 = vmatmul.f32.gmra.mxu0 %v72
  %v120 = vpop.f32.mrf.mxu0
  %v121 = vadd.f32 %v78, %v120
  %122 = vdwg.mxu0
  %123 = vmatpush.msra.mxu0 %v70
  %124 = vmatpush.msra.mxu0 %v67
  %125 = vmatpush.msra.mxu0 %v64
  %126 = vmatpush.msra.mxu0 %v61
  %127 = vmatpush.msra.mxu0 %v58
  %128 = vmatpush.msra.mxu0 %v55
  %129 = vmatpush.msra.mxu0 %v52
  %130 = vmatpush.msra.mxu0 %v49
  %131 = vmatpush.msra.mxu0 %v46
  %132 = vmatpush.msra.mxu0 %v43
  %133 = vmatpush.msra.mxu0 %v40
  %134 = vmatpush.msra.mxu0 %v37
  %135 = vmatpush.msra.mxu0 %v34
  %136 = vmatpush.msra.mxu0 %v31
  %137 = vmatpush.msra.mxu0 %v28
  %138 = vmatpush.msra.mxu0 %v25
  %139 = vmatmul.f32.gmra.mxu0 %v72
  %v140 = vpop.f32.mrf.mxu0
  %v141 = vadd.f32 %v79, %v140
  %142 = vdwg.mxu0
  %v143 = vadd.f32 %v73, %v101
  %v144 = vxor.u32 %v143, 2147483648
  %v145 = vmul.f32 %v144, 1.442695
  %v146 = vpow.pop %v145
  %v147 = vadd.f32 %v146, 1.0
  %v148 = vrcp.pop %v147
  %v149 = vmul.f32 %v147, %v148
  %v150 = vsub.f32 1.0, %v149
  %v151 = vmul.f32 %v148, %v150
  %v152 = vadd.f32 %v148, %v151
  %vm153 = vweird.f32 %v147
  %vm154 = vweird.f32 %v148
  %vm155 = vmor %vm153, %vm154
  %v156 = vsel %vm155, %v148, %v152
  %v157 = vand.u32 2147483647, %v147
  %vm158 = vcmp.eq.f32.partialorder %v157, 8.507059e+37
  %v159 = vand.u32 %v147, 2147483648
  %v160 = vor.u32 1.1754944e-38, %v159
  %v161 = vsel %vm158, %v160, %v156
  %v162 = vmul.f32 1.0, %v161
  %v163 = vadd.f32 %v74, %v121
  %v164 = vxor.u32 %v163, 2147483648
  %v165 = vmul.f32 %v164, 1.442695
  %v166 = vpow.pop %v165
  %v167 = vadd.f32 %v166, 1.0
  %v168 = vrcp.pop %v167
  %v169 = vmul.f32 %v167, %v168
  %v170 = vsub.f32 1.0, %v169
  %v171 = vmul.f32 %v168, %v170
  %v172 = vadd.f32 %v168, %v171
  %vm173 = vweird.f32 %v167
  %vm174 = vweird.f32 %v168
  %vm175 = vmor %vm173, %vm174
  %v176 = vsel %vm175, %v168, %v172
  %v177 = vand.u32 2147483647, %v167
  %vm178 = vcmp.eq.f32.partialorder %v177, 8.507059e+37
  %v179 = vand.u32 %v167, 2147483648
  %v180 = vor.u32 1.1754944e-38, %v179
  %v181 = vsel %vm178, %v180, %v176
  %v182 = vmul.f32 1.0, %v181
  %v183 = vmul.f32 %v162, %v141
  %v184 = vadd.f32 %v75, %v183
  %v185 = vtanh.pop %v184
  %v186 = vsub.f32 1.0, %v182
  %v187 = vmul.f32 %v186, %v185
  %v188 = vmul.f32 %v182, %v72
  %v189 = vadd.f32 %v187, %v188
  %s190 = scalar_lea.vmem %s0, 24
  %v191 = vld [vmem:[%s190] sm:$0xff]
  %v192 = vld [vmem:[%s190 + $0x8] sm:$0xff]
  %v193 = vld [vmem:[%s190 + $0x10] sm:$0xff]
  %194 = vmatpush.msra.mxu0 %v68
  %195 = vmatpush.msra.mxu0 %v65
  %196 = vmatpush.msra.mxu0 %v62
  %197 = vmatpush.msra.mxu0 %v59
  %198 = vmatpush.msra.mxu0 %v56
  %199 = vmatpush.msra.mxu0 %v53
  %200 = vmatpush.msra.mxu0 %v50
  %201 = vmatpush.msra.mxu0 %v47
  %202 = vmatpush.msra.mxu0 %v44
  %203 = vmatpush.msra.mxu0 %v41
  %204 = vmatpush.msra.mxu0 %v38
  %205 = vmatpush.msra.mxu0 %v35
  %206 = vmatpush.msra.mxu0 %v32
  %207 = vmatpush.msra.mxu0 %v29
  %208 = vmatpush.msra.mxu0 %v26
  %209 = vmatpush.msra.mxu0 %v23
  %210 = vmatmul.f32.gmra.mxu0 %v189
  %v211 = vpop.f32.mrf.mxu0
  %v212 = vadd.f32 %v77, %v211
  %213 = vdwg.mxu0
  %214 = vmatpush.msra.mxu0 %v69
  %215 = vmatpush.msra.mxu0 %v66
  %216 = vmatpush.msra.mxu0 %v63
  %217 = vmatpush.msra.mxu0 %v60
  %218 = vmatpush.msra.mxu0 %v57
  %219 = vmatpush.msra.mxu0 %v54
  %220 = vmatpush.msra.mxu0 %v51
  %221 = vmatpush.msra.mxu0 %v48
  %222 = vmatpush.msra.mxu0 %v45
  %223 = vmatpush.msra.mxu0 %v42
  %224 = vmatpush.msra.mxu0 %v39
  %225 = vmatpush.msra.mxu0 %v36
  %226 = vmatpush.msra.mxu0 %v33
  %227 = vmatpush.msra.mxu0 %v30
  %228 = vmatpush.msra.mxu0 %v27
  %229 = vmatpush.msra.mxu0 %v24
  %230 = vmatmul.f32.gmra.mxu0 %v189
  %v231 = vpop.f32.mrf.mxu0
  %v232 = vadd.f32 %v78, %v231
  %233 = vdwg.mxu0
  %234 = vmatpush.msra.mxu0 %v70
  %235 = vmatpush.msra.mxu0 %v67
  %236 = vmatpush.msra.mxu0 %v64
  %237 = vmatpush.msra.mxu0 %v61
  %238 = vmatpush.msra.mxu0 %v58
  %239 = vmatpush.msra.mxu0 %v55
  %240 = vmatpush.msra.mxu0 %v52
  %241 = vmatpush.msra.mxu0 %v49
  %242 = vmatpush.msra.mxu0 %v46
  %243 = vmatpush.msra.mxu0 %v43
  %244 = vmatpush.msra.mxu0 %v40
  %245 = vmatpush.msra.mxu0 %v37
  %246 = vmatpush.msra.mxu0 %v34
  %247 = vmatpush.msra.mxu0 %v31
  %248 = vmatpush.msra.mxu0 %v28
  %249 = vmatpush.msra.mxu0 %v25
  %250 = vmatmul.f32.gmra.mxu0 %v189
  %v251 = vpop.f32.mrf.mxu0
  %v252 = vadd.f32 %v79, %v251
  %253 = vdwg.mxu0
  %v254 = vadd.f32 %v191, %v212
  %v255 = vxor.u32 %v254, 2147483648
  %v256 = vmul.f32 %v255, 1.442695
  %v257 = vpow.pop %v256
  %v258 = vadd.f32 %v257, 1.0
  %v259 = vrcp.pop %v258
  %v260 = vmul.f32 %v258, %v259
  %v261 = vsub.f32 1.0, %v260
  %v262 = vmul.f32 %v259, %v261
  %v263 = vadd.f32 %v259, %v262
  %vm264 = vweird.f32 %v258
  %vm265 = vweird.f32 %v259
  %vm266 = vmor %vm264, %vm265
  %v267 = vsel %vm266, %v259, %v263
  %v268 = vand.u32 2147483647, %v258
  %vm269 = vcmp.eq.f32.partialorder %v268, 8.507059e+37
  %v270 = vand.u32 %v258, 2147483648
  %v271 = vor.u32 1.1754944e-38, %v270
  %v272 = vsel %vm269, %v271, %v267
  %v273 = vmul.f32 1.0, %v272
  %v274 = vadd.f32 %v192, %v232
  %v275 = vxor.u32 %v274, 2147483648
  %v276 = vmul.f32 %v275, 1.442695
  %v277 = vpow.pop %v276
  %v278 = vadd.f32 %v277, 1.0
  %v279 = vrcp.pop %v278
  %v280 = vmul.f32 %v278, %v279
  %v281 = vsub.f32 1.0, %v280
  %v282 = vmul.f32 %v279, %v281
  %v283 = vadd.f32 %v279, %v282
  %vm284 = vweird.f32 %v278
  %vm285 = vweird.f32 %v279
  %vm286 = vmor %vm284, %vm285
  %v287 = vsel %vm286, %v279, %v283
  %v288 = vand.u32 2147483647, %v278
  %vm289 = vcmp.eq.f32.partialorder %v288, 8.507059e+37
  %v290 = vand.u32 %v278, 2147483648
  %v291 = vor.u32 1.1754944e-38, %v290
  %v292 = vsel %vm289, %v291, %v287
  %v293 = vmul.f32 1.0, %v292
  %v294 = vmul.f32 %v273, %v252
  %v295 = vadd.f32 %v193, %v294
  %v296 = vtanh.pop %v295
  %v297 = vsub.f32 1.0, %v293
  %v298 = vmul.f32 %v297, %v296
  %v299 = vmul.f32 %v293, %v189
  %v300 = vadd.f32 %v298, %v299
  %s301 = scalar_lea.vmem %s0, 48
  %v302 = vld [vmem:[%s301] sm:$0xff]
  %v303 = vld [vmem:[%s301 + $0x8] sm:$0xff]
  %v304 = vld [vmem:[%s301 + $0x10] sm:$0xff]
  %305 = vmatpush.msra.mxu0 %v68
  %306 = vmatpush.msra.mxu0 %v65
  %307 = vmatpush.msra.mxu0 %v62
  %308 = vmatpush.msra.mxu0 %v59
  %309 = vmatpush.msra.mxu0 %v56
  %310 = vmatpush.msra.mxu0 %v53
  %311 = vmatpush.msra.mxu0 %v50
  %312 = vmatpush.msra.mxu0 %v47
  %313 = vmatpush.msra.mxu0 %v44
  %314 = vmatpush.msra.mxu0 %v41
  %315 = vmatpush.msra.mxu0 %v38
  %316 = vmatpush.msra.mxu0 %v35
  %317 = vmatpush.msra.mxu0 %v32
  %318 = vmatpush.msra.mxu0 %v29
  %319 = vmatpush.msra.mxu0 %v26
  %320 = vmatpush.msra.mxu0 %v23
  %321 = vmatmul.f32.gmra.mxu0 %v300
  %v322 = vpop.f32.mrf.mxu0
  %v323 = vadd.f32 %v77, %v322
  %324 = vdwg.mxu0
  %325 = vmatpush.msra.mxu0 %v69
  %326 = vmatpush.msra.mxu0 %v66
  %327 = vmatpush.msra.mxu0 %v63
  %328 = vmatpush.msra.mxu0 %v60
  %329 = vmatpush.msra.mxu0 %v57
  %330 = vmatpush.msra.mxu0 %v54
  %331 = vmatpush.msra.mxu0 %v51
  %332 = vmatpush.msra.mxu0 %v48
  %333 = vmatpush.msra.mxu0 %v45
  %334 = vmatpush.msra.mxu0 %v42
  %335 = vmatpush.msra.mxu0 %v39
  %336 = vmatpush.msra.mxu0 %v36
  %337 = vmatpush.msra.mxu0 %v33
  %338 = vmatpush.msra.mxu0 %v30
  %339 = vmatpush.msra.mxu0 %v27
  %340 = vmatpush.msra.mxu0 %v24
  %341 = vmatmul.f32.gmra.mxu0 %v300
  %v342 = vpop.f32.mrf.mxu0
  %v343 = vadd.f32 %v78, %v342
  %344 = vdwg.mxu0
  %345 = vmatpush.msra.mxu0 %v70
  %346 = vmatpush.msra.mxu0 %v67
  %347 = vmatpush.msra.mxu0 %v64
  %348 = vmatpush.msra.mxu0 %v61
  %349 = vmatpush.msra.mxu0 %v58
  %350 = vmatpush.msra.mxu0 %v55
  %351 = vmatpush.msra.mxu0 %v52
  %352 = vmatpush.msra.mxu0 %v49
  %353 = vmatpush.msra.mxu0 %v46
  %354 = vmatpush.msra.mxu0 %v43
  %355 = vmatpush.msra.mxu0 %v40
  %356 = vmatpush.msra.mxu0 %v37
  %357 = vmatpush.msra.mxu0 %v34
  %358 = vmatpush.msra.mxu0 %v31
  %359 = vmatpush.msra.mxu0 %v28
  %360 = vmatpush.msra.mxu0 %v25
  %361 = vmatmul.f32.gmra.mxu0 %v300
  %v362 = vpop.f32.mrf.mxu0
  %v363 = vadd.f32 %v79, %v362
  %364 = vdwg.mxu0
  %v365 = vadd.f32 %v302, %v323
  %v366 = vxor.u32 %v365, 2147483648
  %v367 = vmul.f32 %v366, 1.442695
  %v368 = vpow.pop %v367
  %v369 = vadd.f32 %v368, 1.0
  %v370 = vrcp.pop %v369
  %v371 = vmul.f32 %v369, %v370
  %v372 = vsub.f32 1.0, %v371
  %v373 = vmul.f32 %v370, %v372
  %v374 = vadd.f32 %v370, %v373
  %vm375 = vweird.f32 %v369
  %vm376 = vweird.f32 %v370
  %vm377 = vmor %vm375, %vm376
  %v378 = vsel %vm377, %v370, %v374
  %v379 = vand.u32 2147483647, %v369
  %vm380 = vcmp.eq.f32.partialorder %v379, 8.507059e+37
  %v381 = vand.u32 %v369, 2147483648
  %v382 = vor.u32 1.1754944e-38, %v381
  %v383 = vsel %vm380, %v382, %v378
  %v384 = vmul.f32 1.0, %v383
  %v385 = vadd.f32 %v303, %v343
  %v386 = vxor.u32 %v385, 2147483648
  %v387 = vmul.f32 %v386, 1.442695
  %v388 = vpow.pop %v387
  %v389 = vadd.f32 %v388, 1.0
  %v390 = vrcp.pop %v389
  %v391 = vmul.f32 %v389, %v390
  %v392 = vsub.f32 1.0, %v391
  %v393 = vmul.f32 %v390, %v392
  %v394 = vadd.f32 %v390, %v393
  %vm395 = vweird.f32 %v389
  %vm396 = vweird.f32 %v390
  %vm397 = vmor %vm395, %vm396
  %v398 = vsel %vm397, %v390, %v394
  %v399 = vand.u32 2147483647, %v389
  %vm400 = vcmp.eq.f32.partialorder %v399, 8.507059e+37
  %v401 = vand.u32 %v389, 2147483648
  %v402 = vor.u32 1.1754944e-38, %v401
  %v403 = vsel %vm400, %v402, %v398
  %v404 = vmul.f32 1.0, %v403
  %v405 = vmul.f32 %v384, %v363
  %v406 = vadd.f32 %v304, %v405
  %v407 = vtanh.pop %v406
  %v408 = vsub.f32 1.0, %v404
  %v409 = vmul.f32 %v408, %v407
  %v410 = vmul.f32 %v404, %v300
  %v411 = vadd.f32 %v409, %v410
  %s412 = scalar_lea.vmem %s0, 72
  %v413 = vld [vmem:[%s412] sm:$0xff]
  %v414 = vld [vmem:[%s412 + $0x8] sm:$0xff]
  %v415 = vld [vmem:[%s412 + $0x10] sm:$0xff]
  %416 = vmatpush.msra.mxu0 %v68
  %417 = vmatpush.msra.mxu0 %v65
  %418 = vmatpush.msra.mxu0 %v62
  %419 = vmatpush.msra.mxu0 %v59
  %420 = vmatpush.msra.mxu0 %v56
  %421 = vmatpush.msra.mxu0 %v53
  %422 = vmatpush.msra.mxu0 %v50
  %423 = vmatpush.msra.mxu0 %v47
  %424 = vmatpush.msra.mxu0 %v44
  %425 = vmatpush.msra.mxu0 %v41
  %426 = vmatpush.msra.mxu0 %v38
  %427 = vmatpush.msra.mxu0 %v35
  %428 = vmatpush.msra.mxu0 %v32
  %429 = vmatpush.msra.mxu0 %v29
  %430 = vmatpush.msra.mxu0 %v26
  %431 = vmatpush.msra.mxu0 %v23
  %432 = vmatmul.f32.gmra.mxu0 %v411
  %v433 = vpop.f32.mrf.mxu0
  %v434 = vadd.f32 %v77, %v433
  %435 = vdwg.mxu0
  %436 = vmatpush.msra.mxu0 %v69
  %437 = vmatpush.msra.mxu0 %v66
  %438 = vmatpush.msra.mxu0 %v63
  %439 = vmatpush.msra.mxu0 %v60
  %440 = vmatpush.msra.mxu0 %v57
  %441 = vmatpush.msra.mxu0 %v54
  %442 = vmatpush.msra.mxu0 %v51
  %443 = vmatpush.msra.mxu0 %v48
  %444 = vmatpush.msra.mxu0 %v45
  %445 = vmatpush.msra.mxu0 %v42
  %446 = vmatpush.msra.mxu0 %v39
  %447 = vmatpush.msra.mxu0 %v36
  %448 = vmatpush.msra.mxu0 %v33
  %449 = vmatpush.msra.mxu0 %v30
  %450 = vmatpush.msra.mxu0 %v27
  %451 = vmatpush.msra.mxu0 %v24
  %452 = vmatmul.f32.gmra.mxu0 %v411
  %v453 = vpop.f32.mrf.mxu0
  %v454 = vadd.f32 %v78, %v453
  %455 = vdwg.mxu0
  %456 = vmatpush.msra.mxu0 %v70
  %457 = vmatpush.msra.mxu0 %v67
  %458 = vmatpush.msra.mxu0 %v64
  %459 = vmatpush.msra.mxu0 %v61
  %460 = vmatpush.msra.mxu0 %v58
  %461 = vmatpush.msra.mxu0 %v55
  %462 = vmatpush.msra.mxu0 %v52
  %463 = vmatpush.msra.mxu0 %v49
  %464 = vmatpush.msra.mxu0 %v46
  %465 = vmatpush.msra.mxu0 %v43
  %466 = vmatpush.msra.mxu0 %v40
  %467 = vmatpush.msra.mxu0 %v37
  %468 = vmatpush.msra.mxu0 %v34
  %469 = vmatpush.msra.mxu0 %v31
  %470 = vmatpush.msra.mxu0 %v28
  %471 = vmatpush.msra.mxu0 %v25
  %472 = vmatmul.f32.gmra.mxu0 %v411
  %v473 = vpop.f32.mrf.mxu0
  %v474 = vadd.f32 %v79, %v473
  %475 = vdwg.mxu0
  %v476 = vadd.f32 %v413, %v434
  %v477 = vxor.u32 %v476, 2147483648
  %v478 = vmul.f32 %v477, 1.442695
  %v479 = vpow.pop %v478
  %v480 = vadd.f32 %v479, 1.0
  %v481 = vrcp.pop %v480
  %v482 = vmul.f32 %v480, %v481
  %v483 = vsub.f32 1.0, %v482
  %v484 = vmul.f32 %v481, %v483
  %v485 = vadd.f32 %v481, %v484
  %vm486 = vweird.f32 %v480
  %vm487 = vweird.f32 %v481
  %vm488 = vmor %vm486, %vm487
  %v489 = vsel %vm488, %v481, %v485
  %v490 = vand.u32 2147483647, %v480
  %vm491 = vcmp.eq.f32.partialorder %v490, 8.507059e+37
  %v492 = vand.u32 %v480, 2147483648
  %v493 = vor.u32 1.1754944e-38, %v492
  %v494 = vsel %vm491, %v493, %v489
  %v495 = vmul.f32 1.0, %v494
  %v496 = vadd.f32 %v414, %v454
  %v497 = vxor.u32 %v496, 2147483648
  %v498 = vmul.f32 %v497, 1.442695
  %v499 = vpow.pop %v498
  %v500 = vadd.f32 %v499, 1.0
  %v501 = vrcp.pop %v500
  %v502 = vmul.f32 %v500, %v501
  %v503 = vsub.f32 1.0, %v502
  %v504 = vmul.f32 %v501, %v503
  %v505 = vadd.f32 %v501, %v504
  %vm506 = vweird.f32 %v500
  %vm507 = vweird.f32 %v501
  %vm508 = vmor %vm506, %vm507
  %v509 = vsel %vm508, %v501, %v505
  %v510 = vand.u32 2147483647, %v500
  %vm511 = vcmp.eq.f32.partialorder %v510, 8.507059e+37
  %v512 = vand.u32 %v500, 2147483648
  %v513 = vor.u32 1.1754944e-38, %v512
  %v514 = vsel %vm511, %v513, %v509
  %v515 = vmul.f32 1.0, %v514
  %v516 = vmul.f32 %v495, %v474
  %v517 = vadd.f32 %v415, %v516
  %v518 = vtanh.pop %v517
  %v519 = vsub.f32 1.0, %v515
  %v520 = vmul.f32 %v519, %v518
  %v521 = vmul.f32 %v515, %v411
  %v522 = vadd.f32 %v520, %v521
  %s523 = scalar_lea.vmem %s0, 96
  %v524 = vld [vmem:[%s523] sm:$0xff]
  %v525 = vld [vmem:[%s523 + $0x8] sm:$0xff]
  %v526 = vld [vmem:[%s523 + $0x10] sm:$0xff]
  %527 = vmatpush.msra.mxu0 %v68
  %528 = vmatpush.msra.mxu0 %v65
  %529 = vmatpush.msra.mxu0 %v62
  %530 = vmatpush.msra.mxu0 %v59
  %531 = vmatpush.msra.mxu0 %v56
  %532 = vmatpush.msra.mxu0 %v53
  %533 = vmatpush.msra.mxu0 %v50
  %534 = vmatpush.msra.mxu0 %v47
  %535 = vmatpush.msra.mxu0 %v44
  %536 = vmatpush.msra.mxu0 %v41
  %537 = vmatpush.msra.mxu0 %v38
  %538 = vmatpush.msra.mxu0 %v35
  %539 = vmatpush.msra.mxu0 %v32
  %540 = vmatpush.msra.mxu0 %v29
  %541 = vmatpush.msra.mxu0 %v26
  %542 = vmatpush.msra.mxu0 %v23
  %543 = vmatmul.f32.gmra.mxu0 %v522
  %v544 = vpop.f32.mrf.mxu0
  %v545 = vadd.f32 %v77, %v544
  %546 = vdwg.mxu0
  %547 = vmatpush.msra.mxu0 %v69
  %548 = vmatpush.msra.mxu0 %v66
  %549 = vmatpush.msra.mxu0 %v63
  %550 = vmatpush.msra.mxu0 %v60
  %551 = vmatpush.msra.mxu0 %v57
  %552 = vmatpush.msra.mxu0 %v54
  %553 = vmatpush.msra.mxu0 %v51
  %554 = vmatpush.msra.mxu0 %v48
  %555 = vmatpush.msra.mxu0 %v45
  %556 = vmatpush.msra.mxu0 %v42
  %557 = vmatpush.msra.mxu0 %v39
  %558 = vmatpush.msra.mxu0 %v36
  %559 = vmatpush.msra.mxu0 %v33
  %560 = vmatpush.msra.mxu0 %v30
  %561 = vmatpush.msra.mxu0 %v27
  %562 = vmatpush.msra.mxu0 %v24
  %563 = vmatmul.f32.gmra.mxu0 %v522
  %v564 = vpop.f32.mrf.mxu0
  %v565 = vadd.f32 %v78, %v564
  %566 = vdwg.mxu0
  %567 = vmatpush.msra.mxu0 %v70
  %568 = vmatpush.msra.mxu0 %v67
  %569 = vmatpush.msra.mxu0 %v64
  %570 = vmatpush.msra.mxu0 %v61
  %571 = vmatpush.msra.mxu0 %v58
  %572 = vmatpush.msra.mxu0 %v55
  %573 = vmatpush.msra.mxu0 %v52
  %574 = vmatpush.msra.mxu0 %v49
  %575 = vmatpush.msra.mxu0 %v46
  %576 = vmatpush.msra.mxu0 %v43
  %577 = vmatpush.msra.mxu0 %v40
  %578 = vmatpush.msra.mxu0 %v37
  %579 = vmatpush.msra.mxu0 %v34
  %580 = vmatpush.msra.mxu0 %v31
  %581 = vmatpush.msra.mxu0 %v28
  %582 = vmatpush.msra.mxu0 %v25
  %583 = vmatmul.f32.gmra.mxu0 %v522
  %v584 = vpop.f32.mrf.mxu0
  %v585 = vadd.f32 %v79, %v584
  %586 = vdwg.mxu0
  %v587 = vadd.f32 %v524, %v545
  %v588 = vxor.u32 %v587, 2147483648
  %v589 = vmul.f32 %v588, 1.442695
  %v590 = vpow.pop %v589
  %v591 = vadd.f32 %v590, 1.0
  %v592 = vrcp.pop %v591
  %v593 = vmul.f32 %v591, %v592
  %v594 = vsub.f32 1.0, %v593
  %v595 = vmul.f32 %v592, %v594
  %v596 = vadd.f32 %v592, %v595
  %vm597 = vweird.f32 %v591
  %vm598 = vweird.f32 %v592
  %vm599 = vmor %vm597, %vm598
  %v600 = vsel %vm599, %v592, %v596
  %v601 = vand.u32 2147483647, %v591
  %vm602 = vcmp.eq.f32.partialorder %v601, 8.507059e+37
  %v603 = vand.u32 %v591, 2147483648
  %v604 = vor.u32 1.1754944e-38, %v603
  %v605 = vsel %vm602, %v604, %v600
  %v606 = vmul.f32 1.0, %v605
  %v607 = vadd.f32 %v525, %v565
  %v608 = vxor.u32 %v607, 2147483648
  %v609 = vmul.f32 %v608, 1.442695
  %v610 = vpow.pop %v609
  %v611 = vadd.f32 %v610, 1.0
  %v612 = vrcp.pop %v611
  %v613 = vmul.f32 %v611, %v612
  %v614 = vsub.f32 1.0, %v613
  %v615 = vmul.f32 %v612, %v614
  %v616 = vadd.f32 %v612, %v615
  %vm617 = vweird.f32 %v611
  %vm618 = vweird.f32 %v612
  %vm619 = vmor %vm617, %vm618
  %v620 = vsel %vm619, %v612, %v616
  %v621 = vand.u32 2147483647, %v611
  %vm622 = vcmp.eq.f32.partialorder %v621, 8.507059e+37
  %v623 = vand.u32 %v611, 2147483648
  %v624 = vor.u32 1.1754944e-38, %v623
  %v625 = vsel %vm622, %v624, %v620
  %v626 = vmul.f32 1.0, %v625
  %v627 = vmul.f32 %v606, %v585
  %v628 = vadd.f32 %v526, %v627
  %v629 = vtanh.pop %v628
  %v630 = vsub.f32 1.0, %v626
  %v631 = vmul.f32 %v630, %v629
  %v632 = vmul.f32 %v626, %v522
  %v633 = vadd.f32 %v631, %v632
  %s634 = scalar_lea.vmem %s0, 120
  %v635 = vld [vmem:[%s634] sm:$0xff]
  %v636 = vld [vmem:[%s634 + $0x8] sm:$0xff]
  %v637 = vld [vmem:[%s634 + $0x10] sm:$0xff]
  %638 = vmatpush.msra.mxu0 %v68
  %639 = vmatpush.msra.mxu0 %v65
  %640 = vmatpush.msra.mxu0 %v62
  %641 = vmatpush.msra.mxu0 %v59
  %642 = vmatpush.msra.mxu0 %v56
  %643 = vmatpush.msra.mxu0 %v53
  %644 = vmatpush.msra.mxu0 %v50
  %645 = vmatpush.msra.mxu0 %v47
  %646 = vmatpush.msra.mxu0 %v44
  %647 = vmatpush.msra.mxu0 %v41
  %648 = vmatpush.msra.mxu0 %v38
  %649 = vmatpush.msra.mxu0 %v35
  %650 = vmatpush.msra.mxu0 %v32
  %651 = vmatpush.msra.mxu0 %v29
  %652 = vmatpush.msra.mxu0 %v26
  %653 = vmatpush.msra.mxu0 %v23
  %654 = vmatmul.f32.gmra.mxu0 %v633
  %v655 = vpop.f32.mrf.mxu0
  %v656 = vadd.f32 %v77, %v655
  %657 = vdwg.mxu0
  %658 = vmatpush.msra.mxu0 %v69
  %659 = vmatpush.msra.mxu0 %v66
  %660 = vmatpush.msra.mxu0 %v63
  %661 = vmatpush.msra.mxu0 %v60
  %662 = vmatpush.msra.mxu0 %v57
  %663 = vmatpush.msra.mxu0 %v54
  %664 = vmatpush.msra.mxu0 %v51
  %665 = vmatpush.msra.mxu0 %v48
  %666 = vmatpush.msra.mxu0 %v45
  %667 = vmatpush.msra.mxu0 %v42
  %668 = vmatpush.msra.mxu0 %v39
  %669 = vmatpush.msra.mxu0 %v36
  %670 = vmatpush.msra.mxu0 %v33
  %671 = vmatpush.msra.mxu0 %v30
  %672 = vmatpush.msra.mxu0 %v27
  %673 = vmatpush.msra.mxu0 %v24
  %674 = vmatmul.f32.gmra.mxu0 %v633
  %v675 = vpop.f32.mrf.mxu0
  %v676 = vadd.f32 %v78, %v675
  %677 = vdwg.mxu0
  %678 = vmatpush.msra.mxu0 %v70
  %679 = vmatpush.msra.mxu0 %v67
  %680 = vmatpush.msra.mxu0 %v64
  %681 = vmatpush.msra.mxu0 %v61
  %682 = vmatpush.msra.mxu0 %v58
  %683 = vmatpush.msra.mxu0 %v55
  %684 = vmatpush.msra.mxu0 %v52
  %685 = vmatpush.msra.mxu0 %v49
  %686 = vmatpush.msra.mxu0 %v46
  %687 = vmatpush.msra.mxu0 %v43
  %688 = vmatpush.msra.mxu0 %v40
  %689 = vmatpush.msra.mxu0 %v37
  %690 = vmatpush.msra.mxu0 %v34
  %691 = vmatpush.msra.mxu0 %v31
  %692 = vmatpush.msra.mxu0 %v28
  %693 = vmatpush.msra.mxu0 %v25
  %694 = vmatmul.f32.gmra.mxu0 %v633
  %v695 = vpop.f32.mrf.mxu0
  %v696 = vadd.f32 %v79, %v695
  %697 = vdwg.mxu0
  %v698 = vadd.f32 %v635, %v656
  %v699 = vxor.u32 %v698, 2147483648
  %v700 = vmul.f32 %v699, 1.442695
  %v701 = vpow.pop %v700
  %v702 = vadd.f32 %v701, 1.0
  %v703 = vrcp.pop %v702
  %v704 = vmul.f32 %v702, %v703
  %v705 = vsub.f32 1.0, %v704
  %v706 = vmul.f32 %v703, %v705
  %v707 = vadd.f32 %v703, %v706
  %vm708 = vweird.f32 %v702
  %vm709 = vweird.f32 %v703
  %vm710 = vmor %vm708, %vm709
  %v711 = vsel %vm710, %v703, %v707
  %v712 = vand.u32 2147483647, %v702
  %vm713 = vcmp.eq.f32.partialorder %v712, 8.507059e+37
  %v714 = vand.u32 %v702, 2147483648
  %v715 = vor.u32 1.1754944e-38, %v714
  %v716 = vsel %vm713, %v715, %v711
  %v717 = vmul.f32 1.0, %v716
  %v718 = vadd.f32 %v636, %v676
  %v719 = vxor.u32 %v718, 2147483648
  %v720 = vmul.f32 %v719, 1.442695
  %v721 = vpow.pop %v720
  %v722 = vadd.f32 %v721, 1.0
  %v723 = vrcp.pop %v722
  %v724 = vmul.f32 %v722, %v723
  %v725 = vsub.f32 1.0, %v724
  %v726 = vmul.f32 %v723, %v725
  %v727 = vadd.f32 %v723, %v726
  %vm728 = vweird.f32 %v722
  %vm729 = vweird.f32 %v723
  %vm730 = vmor %vm728, %vm729
  %v731 = vsel %vm730, %v723, %v727
  %v732 = vand.u32 2147483647, %v722
  %vm733 = vcmp.eq.f32.partialorder %v732, 8.507059e+37
  %v734 = vand.u32 %v722, 2147483648
  %v735 = vor.u32 1.1754944e-38, %v734
  %v736 = vsel %vm733, %v735, %v731
  %v737 = vmul.f32 1.0, %v736
  %v738 = vmul.f32 %v717, %v696
  %v739 = vadd.f32 %v637, %v738
  %v740 = vtanh.pop %v739
  %v741 = vsub.f32 1.0, %v737
  %v742 = vmul.f32 %v741, %v740
  %v743 = vmul.f32 %v737, %v633
  %v744 = vadd.f32 %v742, %v743
  %s745 = scalar_lea.vmem %s0, 144
  %v746 = vld [vmem:[%s745] sm:$0xff]
  %v747 = vld [vmem:[%s745 + $0x8] sm:$0xff]
  %v748 = vld [vmem:[%s745 + $0x10] sm:$0xff]
  %749 = vmatpush.msra.mxu0 %v68
  %750 = vmatpush.msra.mxu0 %v65
  %751 = vmatpush.msra.mxu0 %v62
  %752 = vmatpush.msra.mxu0 %v59
  %753 = vmatpush.msra.mxu0 %v56
  %754 = vmatpush.msra.mxu0 %v53
  %755 = vmatpush.msra.mxu0 %v50
  %756 = vmatpush.msra.mxu0 %v47
  %757 = vmatpush.msra.mxu0 %v44
  %758 = vmatpush.msra.mxu0 %v41
  %759 = vmatpush.msra.mxu0 %v38
  %760 = vmatpush.msra.mxu0 %v35
  %761 = vmatpush.msra.mxu0 %v32
  %762 = vmatpush.msra.mxu0 %v29
  %763 = vmatpush.msra.mxu0 %v26
  %764 = vmatpush.msra.mxu0 %v23
  %765 = vmatmul.f32.gmra.mxu0 %v744
  %v766 = vpop.f32.mrf.mxu0
  %v767 = vadd.f32 %v77, %v766
  %768 = vdwg.mxu0
  %769 = vmatpush.msra.mxu0 %v69
  %770 = vmatpush.msra.mxu0 %v66
  %771 = vmatpush.msra.mxu0 %v63
  %772 = vmatpush.msra.mxu0 %v60
  %773 = vmatpush.msra.mxu0 %v57
  %774 = vmatpush.msra.mxu0 %v54
  %775 = vmatpush.msra.mxu0 %v51
  %776 = vmatpush.msra.mxu0 %v48
  %777 = vmatpush.msra.mxu0 %v45
  %778 = vmatpush.msra.mxu0 %v42
  %779 = vmatpush.msra.mxu0 %v39
  %780 = vmatpush.msra.mxu0 %v36
  %781 = vmatpush.msra.mxu0 %v33
  %782 = vmatpush.msra.mxu0 %v30
  %783 = vmatpush.msra.mxu0 %v27
  %784 = vmatpush.msra.mxu0 %v24
  %785 = vmatmul.f32.gmra.mxu0 %v744
  %v786 = vpop.f32.mrf.mxu0
  %v787 = vadd.f32 %v78, %v786
  %788 = vdwg.mxu0
  %789 = vmatpush.msra.mxu0 %v70
  %790 = vmatpush.msra.mxu0 %v67
  %791 = vmatpush.msra.mxu0 %v64
  %792 = vmatpush.msra.mxu0 %v61
  %793 = vmatpush.msra.mxu0 %v58
  %794 = vmatpush.msra.mxu0 %v55
  %795 = vmatpush.msra.mxu0 %v52
  %796 = vmatpush.msra.mxu0 %v49
  %797 = vmatpush.msra.mxu0 %v46
  %798 = vmatpush.msra.mxu0 %v43
  %799 = vmatpush.msra.mxu0 %v40
  %800 = vmatpush.msra.mxu0 %v37
  %801 = vmatpush.msra.mxu0 %v34
  %802 = vmatpush.msra.mxu0 %v31
  %803 = vmatpush.msra.mxu0 %v28
  %804 = vmatpush.msra.mxu0 %v25
  %805 = vmatmul.f32.gmra.mxu0 %v744
  %v806 = vpop.f32.mrf.mxu0
  %v807 = vadd.f32 %v79, %v806
  %808 = vdwg.mxu0
  %v809 = vadd.f32 %v746, %v767
  %v810 = vxor.u32 %v809, 2147483648
  %v811 = vmul.f32 %v810, 1.442695
  %v812 = vpow.pop %v811
  %v813 = vadd.f32 %v812, 1.0
  %v814 = vrcp.pop %v813
  %v815 = vmul.f32 %v813, %v814
  %v816 = vsub.f32 1.0, %v815
  %v817 = vmul.f32 %v814, %v816
  %v818 = vadd.f32 %v814, %v817
  %vm819 = vweird.f32 %v813
  %vm820 = vweird.f32 %v814
  %vm821 = vmor %vm819, %vm820
  %v822 = vsel %vm821, %v814, %v818
  %v823 = vand.u32 2147483647, %v813
  %vm824 = vcmp.eq.f32.partialorder %v823, 8.507059e+37
  %v825 = vand.u32 %v813, 2147483648
  %v826 = vor.u32 1.1754944e-38, %v825
  %v827 = vsel %vm824, %v826, %v822
  %v828 = vmul.f32 1.0, %v827
  %v829 = vadd.f32 %v747, %v787
  %v830 = vxor.u32 %v829, 2147483648
  %v831 = vmul.f32 %v830, 1.442695
  %v832 = vpow.pop %v831
  %v833 = vadd.f32 %v832, 1.0
  %v834 = vrcp.pop %v833
  %v835 = vmul.f32 %v833, %v834
  %v836 = vsub.f32 1.0, %v835
  %v837 = vmul.f32 %v834, %v836
  %v838 = vadd.f32 %v834, %v837
  %vm839 = vweird.f32 %v833
  %vm840 = vweird.f32 %v834
  %vm841 = vmor %vm839, %vm840
  %v842 = vsel %vm841, %v834, %v838
  %v843 = vand.u32 2147483647, %v833
  %vm844 = vcmp.eq.f32.partialorder %v843, 8.507059e+37
  %v845 = vand.u32 %v833, 2147483648
  %v846 = vor.u32 1.1754944e-38, %v845
  %v847 = vsel %vm844, %v846, %v842
  %v848 = vmul.f32 1.0, %v847
  %v849 = vmul.f32 %v828, %v807
  %v850 = vadd.f32 %v748, %v849
  %v851 = vtanh.pop %v850
  %v852 = vsub.f32 1.0, %v848
  %v853 = vmul.f32 %v852, %v851
  %v854 = vmul.f32 %v848, %v744
  %v855 = vadd.f32 %v853, %v854
  %s856 = scalar_lea.vmem %s0, 168
  %v857 = vld [vmem:[%s856] sm:$0xff]
  %v858 = vld [vmem:[%s856 + $0x8] sm:$0xff]
  %v859 = vld [vmem:[%s856 + $0x10] sm:$0xff]
  %860 = vmatpush.msra.mxu0 %v68
  %861 = vmatpush.msra.mxu0 %v65
  %862 = vmatpush.msra.mxu0 %v62
  %863 = vmatpush.msra.mxu0 %v59
  %864 = vmatpush.msra.mxu0 %v56
  %865 = vmatpush.msra.mxu0 %v53
  %866 = vmatpush.msra.mxu0 %v50
  %867 = vmatpush.msra.mxu0 %v47
  %868 = vmatpush.msra.mxu0 %v44
  %869 = vmatpush.msra.mxu0 %v41
  %870 = vmatpush.msra.mxu0 %v38
  %871 = vmatpush.msra.mxu0 %v35
  %872 = vmatpush.msra.mxu0 %v32
  %873 = vmatpush.msra.mxu0 %v29
  %874 = vmatpush.msra.mxu0 %v26
  %875 = vmatpush.msra.mxu0 %v23
  %876 = vmatmul.f32.gmra.mxu0 %v855
  %v877 = vpop.f32.mrf.mxu0
  %v878 = vadd.f32 %v77, %v877
  %879 = vdwg.mxu0
  %880 = vmatpush.msra.mxu0 %v69
  %881 = vmatpush.msra.mxu0 %v66
  %882 = vmatpush.msra.mxu0 %v63
  %883 = vmatpush.msra.mxu0 %v60
  %884 = vmatpush.msra.mxu0 %v57
  %885 = vmatpush.msra.mxu0 %v54
  %886 = vmatpush.msra.mxu0 %v51
  %887 = vmatpush.msra.mxu0 %v48
  %888 = vmatpush.msra.mxu0 %v45
  %889 = vmatpush.msra.mxu0 %v42
  %890 = vmatpush.msra.mxu0 %v39
  %891 = vmatpush.msra.mxu0 %v36
  %892 = vmatpush.msra.mxu0 %v33
  %893 = vmatpush.msra.mxu0 %v30
  %894 = vmatpush.msra.mxu0 %v27
  %895 = vmatpush.msra.mxu0 %v24
  %896 = vmatmul.f32.gmra.mxu0 %v855
  %v897 = vpop.f32.mrf.mxu0
  %v898 = vadd.f32 %v78, %v897
  %899 = vdwg.mxu0
  %900 = vmatpush.msra.mxu0 %v70
  %901 = vmatpush.msra.mxu0 %v67
  %902 = vmatpush.msra.mxu0 %v64
  %903 = vmatpush.msra.mxu0 %v61
  %904 = vmatpush.msra.mxu0 %v58
  %905 = vmatpush.msra.mxu0 %v55
  %906 = vmatpush.msra.mxu0 %v52
  %907 = vmatpush.msra.mxu0 %v49
  %908 = vmatpush.msra.mxu0 %v46
  %909 = vmatpush.msra.mxu0 %v43
  %910 = vmatpush.msra.mxu0 %v40
  %911 = vmatpush.msra.mxu0 %v37
  %912 = vmatpush.msra.mxu0 %v34
  %913 = vmatpush.msra.mxu0 %v31
  %914 = vmatpush.msra.mxu0 %v28
  %915 = vmatpush.msra.mxu0 %v25
  %916 = vmatmul.f32.gmra.mxu0 %v855
  %v917 = vpop.f32.mrf.mxu0
  %v918 = vadd.f32 %v79, %v917
  %919 = vdwg.mxu0
  %v920 = vadd.f32 %v857, %v878
  %v921 = vxor.u32 %v920, 2147483648
  %v922 = vmul.f32 %v921, 1.442695
  %v923 = vpow.pop %v922
  %v924 = vadd.f32 %v923, 1.0
  %v925 = vrcp.pop %v924
  %v926 = vmul.f32 %v924, %v925
  %v927 = vsub.f32 1.0, %v926
  %v928 = vmul.f32 %v925, %v927
  %v929 = vadd.f32 %v925, %v928
  %vm930 = vweird.f32 %v924
  %vm931 = vweird.f32 %v925
  %vm932 = vmor %vm930, %vm931
  %v933 = vsel %vm932, %v925, %v929
  %v934 = vand.u32 2147483647, %v924
  %vm935 = vcmp.eq.f32.partialorder %v934, 8.507059e+37
  %v936 = vand.u32 %v924, 2147483648
  %v937 = vor.u32 1.1754944e-38, %v936
  %v938 = vsel %vm935, %v937, %v933
  %v939 = vmul.f32 1.0, %v938
  %v940 = vadd.f32 %v858, %v898
  %v941 = vxor.u32 %v940, 2147483648
  %v942 = vmul.f32 %v941, 1.442695
  %v943 = vpow.pop %v942
  %v944 = vadd.f32 %v943, 1.0
  %v945 = vrcp.pop %v944
  %v946 = vmul.f32 %v944, %v945
  %v947 = vsub.f32 1.0, %v946
  %v948 = vmul.f32 %v945, %v947
  %v949 = vadd.f32 %v945, %v948
  %vm950 = vweird.f32 %v944
  %vm951 = vweird.f32 %v945
  %vm952 = vmor %vm950, %vm951
  %v953 = vsel %vm952, %v945, %v949
  %v954 = vand.u32 2147483647, %v944
  %vm955 = vcmp.eq.f32.partialorder %v954, 8.507059e+37
  %v956 = vand.u32 %v944, 2147483648
  %v957 = vor.u32 1.1754944e-38, %v956
  %v958 = vsel %vm955, %v957, %v953
  %v959 = vmul.f32 1.0, %v958
  %v960 = vmul.f32 %v939, %v918
  %v961 = vadd.f32 %v859, %v960
  %v962 = vtanh.pop %v961
  %v963 = vsub.f32 1.0, %v959
  %v964 = vmul.f32 %v963, %v962
  %v965 = vmul.f32 %v959, %v855
  %v966 = vadd.f32 %v964, %v965
  %967 = vst [vmem:[#allocation2] sm:$0xff] %v966
  // Predicated region
  $region22: #{encoder_decoder_forward.7} parent=0 // pred_check
    %p968 = pneg %p17
  $region23: #{encoder_decoder_forward.7} parent=0 // pred_check_branch
    %970 = sbr.rel (%p968) target = $region25
  $region24: #{encoder_decoder_forward.7} parent=0 // pred_region
    %971 = vst [vmem:[%s4] sm:$0xff] %v966
  $region25: #{encoder_decoder_forward.7} parent=0 // pred_fallthru
    _
  // Predicated region
  $region26: #{encoder_decoder_forward.7} parent=0 // pred_check
    _
  $region27: #{encoder_decoder_forward.7} parent=0 // pred_check_branch
    %973 = sbr.rel (0) target = $region29
  $region28: #{encoder_decoder_forward.7} parent=0 // pred_region
    _
  $region29: #{encoder_decoder_forward.7} parent=0 // pred_fallthru
    _
  // Predicated region
  $region30: #{encoder_decoder_forward.7} parent=0 // pred_check
    _
  $region31: #{encoder_decoder_forward.7} parent=0 // pred_check_branch
    %975 = sbr.rel (0) target = $region33
  $region32: #{encoder_decoder_forward.7} parent=0 // pred_region
    _
  $region33: #{encoder_decoder_forward.7} parent=0 // pred_fallthru
    _

// kernel: encoder_decoder_forward.10
$region0: #{encoder_decoder_forward.10}
  #allocation0 [shape = 'u32[]', space=smem, size = 0x4, offset = 0x4, fixed_abs, tag = 'smem constant byte address 0x4 - core index']
  #allocation1 [shape = 'u32[72,128]{1,0:T(1,128)}', space=vmem, size = 0x9000, scoped, tag = 'internal scratch']
  #allocation2 [shape = 'f32[8,128]{1,0:T(8,128)}', space=vmem, size = 0x1000, scoped, tag = 'scratch operand']
  %s0 = inlined_call_operand.vmem [shape: f32[8,8,384], index: 0, kind: input, shape index: {}]
  %s1 = inlined_call_operand.vmem [shape: f32[8,384], index: 1, kind: input, shape index: {}]
  %s2 = inlined_call_operand.vmem [shape: f32[128,384], index: 2, kind: input, shape index: {}]
  %s3 = inlined_call_operand.vmem [shape: f32[1,384], index: 3, kind: input, shape index: {}]
  %s4 = inlined_call_operand.vmem [shape: f32[8,128], index: 4, kind: input, shape index: {}]
  %s5 = inlined_call_operand.vmem [shape: f32[8,8,128], index: 5, kind: output, shape index: {0}]
  %s6 = inlined_call_operand.vmem [shape: f32[8,128], index: 6, kind: output, shape index: {1}]
  %7 = xla_tuple %s5, %s6
  %s8 = sld [smem:[#allocation0]]
  $region46: #{encoder_decoder_forward.10} parent=0
    _
  %s10 = ssub.s32 1, %s8
  %s11 = scalar_select 0, %s10, %s8
  // Predicated region
  $region2: #{encoder_decoder_forward.10} parent=0 // pred_check
    _
  $region3: #{encoder_decoder_forward.10} parent=0 // pred_check_branch
    %13 = sbr.rel (0) target = $region5
  $region4: #{encoder_decoder_forward.10} parent=0 // pred_region
    _
  $region5: #{encoder_decoder_forward.10} parent=0 // pred_fallthru
    _
  // Predicated region
  $region6: #{encoder_decoder_forward.10} parent=0 // pred_check
    _
  $region7: #{encoder_decoder_forward.10} parent=0 // pred_check_branch
    %15 = sbr.rel (0) target = $region9
  $region8: #{encoder_decoder_forward.10} parent=0 // pred_region
    _
  $region9: #{encoder_decoder_forward.10} parent=0 // pred_fallthru
    _
  // Predicated region
  $region10: #{encoder_decoder_forward.10} parent=0 // pred_check
    _
  $region11: #{encoder_decoder_forward.10} parent=0 // pred_check_branch
    %17 = sbr.rel (0) target = $region13
  $region12: #{encoder_decoder_forward.10} parent=0 // pred_region
    _
  $region13: #{encoder_decoder_forward.10} parent=0 // pred_fallthru
    _
  // Predicated region
  $region14: #{encoder_decoder_forward.10} parent=0 // pred_check
    _
  $region15: #{encoder_decoder_forward.10} parent=0 // pred_check_branch
    %19 = sbr.rel (0) target = $region17
  $region16: #{encoder_decoder_forward.10} parent=0 // pred_region
    _
  $region17: #{encoder_decoder_forward.10} parent=0 // pred_fallthru
    _
  // Predicated region
  $region18: #{encoder_decoder_forward.10} parent=0 // pred_check
    _
  $region19: #{encoder_decoder_forward.10} parent=0 // pred_check_branch
    %21 = sbr.rel (0) target = $region21
  $region20: #{encoder_decoder_forward.10} parent=0 // pred_region
    _
  $region21: #{encoder_decoder_forward.10} parent=0 // pred_fallthru
    _
  %p22 = scmp.eq.s32.totalorder 0, 0
  // Predicated region
  $region22: #{encoder_decoder_forward.10} parent=0 // pred_check
    %p23 = pneg %p22
  $region23: #{encoder_decoder_forward.10} parent=0 // pred_check_branch
    %25 = sbr.rel (%p23) target = $region25
  $region24: #{encoder_decoder_forward.10} parent=0 // pred_region
    %v26 = vld [vmem:[%s4] sm:$0xff]
    %27 = vst [vmem:[#allocation2] sm:$0xff] %v26
  $region25: #{encoder_decoder_forward.10} parent=0 // pred_fallthru
    _
  %v28 = vld [vmem:[%s1] sm:$0xff]
  %v29 = vld [vmem:[%s1 + $0x8] sm:$0xff]
  %v30 = vld [vmem:[%s1 + $0x10] sm:$0xff]
  %v31 = vld [vmem:[%s2] sm:$0xff]
  %v32 = vld [vmem:[%s2 + $0x8] sm:$0xff]
  %v33 = vld [vmem:[%s2 + $0x10] sm:$0xff]
  %v34 = vld [vmem:[%s2 + $0x18] sm:$0xff]
  %v35 = vld [vmem:[%s2 + $0x20] sm:$0xff]
  %v36 = vld [vmem:[%s2 + $0x28] sm:$0xff]
  %v37 = vld [vmem:[%s2 + $0x30] sm:$0xff]
  %v38 = vld [vmem:[%s2 + $0x38] sm:$0xff]
  %v39 = vld [vmem:[%s2 + $0x40] sm:$0xff]
  %v40 = vld [vmem:[%s2 + $0x48] sm:$0xff]
  %v41 = vld [vmem:[%s2 + $0x50] sm:$0xff]
  %v42 = vld [vmem:[%s2 + $0x58] sm:$0xff]
  %v43 = vld [vmem:[%s2 + $0x60] sm:$0xff]
  %v44 = vld [vmem:[%s2 + $0x68] sm:$0xff]
  %v45 = vld [vmem:[%s2 + $0x70] sm:$0xff]
  %v46 = vld [vmem:[%s2 + $0x78] sm:$0xff]
  %v47 = vld [vmem:[%s2 + $0x80] sm:$0xff]
  %v48 = vld [vmem:[%s2 + $0x88] sm:$0xff]
  %v49 = vld [vmem:[%s2 + $0x90] sm:$0xff]
  %v50 = vld [vmem:[%s2 + $0x98] sm:$0xff]
  %v51 = vld [vmem:[%s2 + $0xa0] sm:$0xff]
  %v52 = vld [vmem:[%s2 + $0xa8] sm:$0xff]
  %v53 = vld [vmem:[%s2 + $0xb0] sm:$0xff]
  %v54 = vld [vmem:[%s2 + $0xb8] sm:$0xff]
  %v55 = vld [vmem:[%s2 + $0xc0] sm:$0xff]
  %v56 = vld [vmem:[%s2 + $0xc8] sm:$0xff]
  %v57 = vld [vmem:[%s2 + $0xd0] sm:$0xff]
  %v58 = vld [vmem:[%s2 + $0xd8] sm:$0xff]
  %v59 = vld [vmem:[%s2 + $0xe0] sm:$0xff]
  %v60 = vld [vmem:[%s2 + $0xe8] sm:$0xff]
  %v61 = vld [vmem:[%s2 + $0xf0] sm:$0xff]
  %v62 = vld [vmem:[%s2 + $0xf8] sm:$0xff]
  %v63 = vld [vmem:[%s2 + $0x100] sm:$0xff]
  %v64 = vld [vmem:[%s2 + $0x108] sm:$0xff]
  %v65 = vld [vmem:[%s2 + $0x110] sm:$0xff]
  %v66 = vld [vmem:[%s2 + $0x118] sm:$0xff]
  %v67 = vld [vmem:[%s2 + $0x120] sm:$0xff]
  %v68 = vld [vmem:[%s2 + $0x128] sm:$0xff]
  %v69 = vld [vmem:[%s2 + $0x130] sm:$0xff]
  %v70 = vld [vmem:[%s2 + $0x138] sm:$0xff]
  %v71 = vld [vmem:[%s2 + $0x140] sm:$0xff]
  %v72 = vld [vmem:[%s2 + $0x148] sm:$0xff]
  %v73 = vld [vmem:[%s2 + $0x150] sm:$0xff]
  %v74 = vld [vmem:[%s2 + $0x158] sm:$0xff]
  %v75 = vld [vmem:[%s2 + $0x160] sm:$0xff]
  %v76 = vld [vmem:[%s2 + $0x168] sm:$0xff]
  %v77 = vld [vmem:[%s2 + $0x170] sm:$0xff]
  %v78 = vld [vmem:[%s2 + $0x178] sm:$0xff]
  %v79 = vld [vmem:[%s3] sm:$0x7]
  %v80 = vld [vmem:[#allocation2] sm:$0xff]
  %v81 = vld [vmem:[%s0] sm:$0xff]
  %v82 = vld [vmem:[%s0 + $0x8] sm:$0xff]
  %v83 = vld [vmem:[%s0 + $0x10] sm:$0xff]
  %v84 = vadd.f32 %v81, %v28
  %v85 = vadd.f32 %v82, %v29
  %v86 = vadd.f32 %v83, %v30
  %v88 = vperm.slane %v79, 0
  %v89 = vperm.slane %v79, 1
  %v90 = vperm.slane %v79, 2
  %94 = vmatpush.msra.mxu0 %v76
  %95 = vmatpush.msra.mxu0 %v73
  %96 = vmatpush.msra.mxu0 %v70
  %97 = vmatpush.msra.mxu0 %v67
  %98 = vmatpush.msra.mxu0 %v64
  %99 = vmatpush.msra.mxu0 %v61
  %100 = vmatpush.msra.mxu0 %v58
  %101 = vmatpush.msra.mxu0 %v55
  %102 = vmatpush.msra.mxu0 %v52
  %103 = vmatpush.msra.mxu0 %v49
  %104 = vmatpush.msra.mxu0 %v46
  %105 = vmatpush.msra.mxu0 %v43
  %106 = vmatpush.msra.mxu0 %v40
  %107 = vmatpush.msra.mxu0 %v37
  %108 = vmatpush.msra.mxu0 %v34
  %109 = vmatpush.msra.mxu0 %v31
  %110 = vmatmul.f32.gmra.mxu0 %v80
  %v111 = vpop.f32.mrf.mxu0
  %v112 = vadd.f32 %v88, %v111
  %113 = vdwg.mxu0
  %114 = vmatpush.msra.mxu0 %v77
  %115 = vmatpush.msra.mxu0 %v74
  %116 = vmatpush.msra.mxu0 %v71
  %117 = vmatpush.msra.mxu0 %v68
  %118 = vmatpush.msra.mxu0 %v65
  %119 = vmatpush.msra.mxu0 %v62
  %120 = vmatpush.msra.mxu0 %v59
  %121 = vmatpush.msra.mxu0 %v56
  %122 = vmatpush.msra.mxu0 %v53
  %123 = vmatpush.msra.mxu0 %v50
  %124 = vmatpush.msra.mxu0 %v47
  %125 = vmatpush.msra.mxu0 %v44
  %126 = vmatpush.msra.mxu0 %v41
  %127 = vmatpush.msra.mxu0 %v38
  %128 = vmatpush.msra.mxu0 %v35
  %129 = vmatpush.msra.mxu0 %v32
  %130 = vmatmul.f32.gmra.mxu0 %v80
  %v131 = vpop.f32.mrf.mxu0
  %v132 = vadd.f32 %v89, %v131
  %133 = vdwg.mxu0
  %134 = vmatpush.msra.mxu0 %v78
  %135 = vmatpush.msra.mxu0 %v75
  %136 = vmatpush.msra.mxu0 %v72
  %137 = vmatpush.msra.mxu0 %v69
  %138 = vmatpush.msra.mxu0 %v66
  %139 = vmatpush.msra.mxu0 %v63
  %140 = vmatpush.msra.mxu0 %v60
  %141 = vmatpush.msra.mxu0 %v57
  %142 = vmatpush.msra.mxu0 %v54
  %143 = vmatpush.msra.mxu0 %v51
  %144 = vmatpush.msra.mxu0 %v48
  %145 = vmatpush.msra.mxu0 %v45
  %146 = vmatpush.msra.mxu0 %v42
  %147 = vmatpush.msra.mxu0 %v39
  %148 = vmatpush.msra.mxu0 %v36
  %149 = vmatpush.msra.mxu0 %v33
  %150 = vmatmul.f32.gmra.mxu0 %v80
  %v151 = vpop.f32.mrf.mxu0
  %v152 = vadd.f32 %v90, %v151
  %153 = vdwg.mxu0
  %v154 = vadd.f32 %v84, %v112
  %v155 = vxor.u32 %v154, 2147483648
  %v156 = vmul.f32 %v155, 1.442695
  %v157 = vpow.pop %v156
  %v158 = vadd.f32 %v157, 1.0
  %v159 = vrcp.pop %v158
  %v160 = vmul.f32 %v158, %v159
  %v161 = vsub.f32 1.0, %v160
  %v162 = vmul.f32 %v159, %v161
  %v163 = vadd.f32 %v159, %v162
  %vm164 = vweird.f32 %v158
  %vm165 = vweird.f32 %v159
  %vm166 = vmor %vm164, %vm165
  %v167 = vsel %vm166, %v159, %v163
  %v168 = vand.u32 2147483647, %v158
  %vm169 = vcmp.eq.f32.partialorder %v168, 8.507059e+37
  %v170 = vand.u32 %v158, 2147483648
  %v171 = vor.u32 1.1754944e-38, %v170
  %v172 = vsel %vm169, %v171, %v167
  %v173 = vmul.f32 1.0, %v172
  %v174 = vadd.f32 %v85, %v132
  %v175 = vxor.u32 %v174, 2147483648
  %v176 = vmul.f32 %v175, 1.442695
  %v177 = vpow.pop %v176
  %v178 = vadd.f32 %v177, 1.0
  %v179 = vrcp.pop %v178
  %v180 = vmul.f32 %v178, %v179
  %v181 = vsub.f32 1.0, %v180
  %v182 = vmul.f32 %v179, %v181
  %v183 = vadd.f32 %v179, %v182
  %vm184 = vweird.f32 %v178
  %vm185 = vweird.f32 %v179
  %vm186 = vmor %vm184, %vm185
  %v187 = vsel %vm186, %v179, %v183
  %v188 = vand.u32 2147483647, %v178
  %vm189 = vcmp.eq.f32.partialorder %v188, 8.507059e+37
  %v190 = vand.u32 %v178, 2147483648
  %v191 = vor.u32 1.1754944e-38, %v190
  %v192 = vsel %vm189, %v191, %v187
  %v193 = vmul.f32 1.0, %v192
  %v194 = vmul.f32 %v173, %v152
  %v195 = vadd.f32 %v86, %v194
  %v196 = vtanh.pop %v195
  %v197 = vsub.f32 1.0, %v193
  %v198 = vmul.f32 %v197, %v196
  %v199 = vmul.f32 %v193, %v80
  %v200 = vadd.f32 %v198, %v199
  %201 = vst [vmem:[%s5] sm:$0xff] %v200
  %s202 = scalar_lea.vmem %s0, 24
  %v203 = vld [vmem:[%s202] sm:$0xff]
  %v204 = vld [vmem:[%s202 + $0x8] sm:$0xff]
  %v205 = vld [vmem:[%s202 + $0x10] sm:$0xff]
  %v206 = vadd.f32 %v203, %v28
  %v207 = vadd.f32 %v204, %v29
  %v208 = vadd.f32 %v205, %v30
  %209 = vmatpush.msra.mxu0 %v76
  %210 = vmatpush.msra.mxu0 %v73
  %211 = vmatpush.msra.mxu0 %v70
  %212 = vmatpush.msra.mxu0 %v67
  %213 = vmatpush.msra.mxu0 %v64
  %214 = vmatpush.msra.mxu0 %v61
  %215 = vmatpush.msra.mxu0 %v58
  %216 = vmatpush.msra.mxu0 %v55
  %217 = vmatpush.msra.mxu0 %v52
  %218 = vmatpush.msra.mxu0 %v49
  %219 = vmatpush.msra.mxu0 %v46
  %220 = vmatpush.msra.mxu0 %v43
  %221 = vmatpush.msra.mxu0 %v40
  %222 = vmatpush.msra.mxu0 %v37
  %223 = vmatpush.msra.mxu0 %v34
  %224 = vmatpush.msra.mxu0 %v31
  %225 = vmatmul.f32.gmra.mxu0 %v200
  %v226 = vpop.f32.mrf.mxu0
  %v227 = vadd.f32 %v88, %v226
  %228 = vdwg.mxu0
  %229 = vmatpush.msra.mxu0 %v77
  %230 = vmatpush.msra.mxu0 %v74
  %231 = vmatpush.msra.mxu0 %v71
  %232 = vmatpush.msra.mxu0 %v68
  %233 = vmatpush.msra.mxu0 %v65
  %234 = vmatpush.msra.mxu0 %v62
  %235 = vmatpush.msra.mxu0 %v59
  %236 = vmatpush.msra.mxu0 %v56
  %237 = vmatpush.msra.mxu0 %v53
  %238 = vmatpush.msra.mxu0 %v50
  %239 = vmatpush.msra.mxu0 %v47
  %240 = vmatpush.msra.mxu0 %v44
  %241 = vmatpush.msra.mxu0 %v41
  %242 = vmatpush.msra.mxu0 %v38
  %243 = vmatpush.msra.mxu0 %v35
  %244 = vmatpush.msra.mxu0 %v32
  %245 = vmatmul.f32.gmra.mxu0 %v200
  %v246 = vpop.f32.mrf.mxu0
  %v247 = vadd.f32 %v89, %v246
  %248 = vdwg.mxu0
  %249 = vmatpush.msra.mxu0 %v78
  %250 = vmatpush.msra.mxu0 %v75
  %251 = vmatpush.msra.mxu0 %v72
  %252 = vmatpush.msra.mxu0 %v69
  %253 = vmatpush.msra.mxu0 %v66
  %254 = vmatpush.msra.mxu0 %v63
  %255 = vmatpush.msra.mxu0 %v60
  %256 = vmatpush.msra.mxu0 %v57
  %257 = vmatpush.msra.mxu0 %v54
  %258 = vmatpush.msra.mxu0 %v51
  %259 = vmatpush.msra.mxu0 %v48
  %260 = vmatpush.msra.mxu0 %v45
  %261 = vmatpush.msra.mxu0 %v42
  %262 = vmatpush.msra.mxu0 %v39
  %263 = vmatpush.msra.mxu0 %v36
  %264 = vmatpush.msra.mxu0 %v33
  %265 = vmatmul.f32.gmra.mxu0 %v200
  %v266 = vpop.f32.mrf.mxu0
  %v267 = vadd.f32 %v90, %v266
  %268 = vdwg.mxu0
  %v269 = vadd.f32 %v206, %v227
  %v270 = vxor.u32 %v269, 2147483648
  %v271 = vmul.f32 %v270, 1.442695
  %v272 = vpow.pop %v271
  %v273 = vadd.f32 %v272, 1.0
  %v274 = vrcp.pop %v273
  %v275 = vmul.f32 %v273, %v274
  %v276 = vsub.f32 1.0, %v275
  %v277 = vmul.f32 %v274, %v276
  %v278 = vadd.f32 %v274, %v277
  %vm279 = vweird.f32 %v273
  %vm280 = vweird.f32 %v274
  %vm281 = vmor %vm279, %vm280
  %v282 = vsel %vm281, %v274, %v278
  %v283 = vand.u32 2147483647, %v273
  %vm284 = vcmp.eq.f32.partialorder %v283, 8.507059e+37
  %v285 = vand.u32 %v273, 2147483648
  %v286 = vor.u32 1.1754944e-38, %v285
  %v287 = vsel %vm284, %v286, %v282
  %v288 = vmul.f32 1.0, %v287
  %v289 = vadd.f32 %v207, %v247
  %v290 = vxor.u32 %v289, 2147483648
  %v291 = vmul.f32 %v290, 1.442695
  %v292 = vpow.pop %v291
  %v293 = vadd.f32 %v292, 1.0
  %v294 = vrcp.pop %v293
  %v295 = vmul.f32 %v293, %v294
  %v296 = vsub.f32 1.0, %v295
  %v297 = vmul.f32 %v294, %v296
  %v298 = vadd.f32 %v294, %v297
  %vm299 = vweird.f32 %v293
  %vm300 = vweird.f32 %v294
  %vm301 = vmor %vm299, %vm300
  %v302 = vsel %vm301, %v294, %v298
  %v303 = vand.u32 2147483647, %v293
  %vm304 = vcmp.eq.f32.partialorder %v303, 8.507059e+37
  %v305 = vand.u32 %v293, 2147483648
  %v306 = vor.u32 1.1754944e-38, %v305
  %v307 = vsel %vm304, %v306, %v302
  %v308 = vmul.f32 1.0, %v307
  %v309 = vmul.f32 %v288, %v267
  %v310 = vadd.f32 %v208, %v309
  %v311 = vtanh.pop %v310
  %v312 = vsub.f32 1.0, %v308
  %v313 = vmul.f32 %v312, %v311
  %v314 = vmul.f32 %v308, %v200
  %v315 = vadd.f32 %v313, %v314
  %s316 = scalar_lea.vmem %s5, 8
  %317 = vst [vmem:[%s316] sm:$0xff] %v315
  %s318 = scalar_lea.vmem %s0, 48
  %v319 = vld [vmem:[%s318] sm:$0xff]
  %v320 = vld [vmem:[%s318 + $0x8] sm:$0xff]
  %v321 = vld [vmem:[%s318 + $0x10] sm:$0xff]
  %v322 = vadd.f32 %v319, %v28
  %v323 = vadd.f32 %v320, %v29
  %v324 = vadd.f32 %v321, %v30
  %325 = vmatpush.msra.mxu0 %v76
  %326 = vmatpush.msra.mxu0 %v73
  %327 = vmatpush.msra.mxu0 %v70
  %328 = vmatpush.msra.mxu0 %v67
  %329 = vmatpush.msra.mxu0 %v64
  %330 = vmatpush.msra.mxu0 %v61
  %331 = vmatpush.msra.mxu0 %v58
  %332 = vmatpush.msra.mxu0 %v55
  %333 = vmatpush.msra.mxu0 %v52
  %334 = vmatpush.msra.mxu0 %v49
  %335 = vmatpush.msra.mxu0 %v46
  %336 = vmatpush.msra.mxu0 %v43
  %337 = vmatpush.msra.mxu0 %v40
  %338 = vmatpush.msra.mxu0 %v37
  %339 = vmatpush.msra.mxu0 %v34
  %340 = vmatpush.msra.mxu0 %v31
  %341 = vmatmul.f32.gmra.mxu0 %v315
  %v342 = vpop.f32.mrf.mxu0
  %v343 = vadd.f32 %v88, %v342
  %344 = vdwg.mxu0
  %345 = vmatpush.msra.mxu0 %v77
  %346 = vmatpush.msra.mxu0 %v74
  %347 = vmatpush.msra.mxu0 %v71
  %348 = vmatpush.msra.mxu0 %v68
  %349 = vmatpush.msra.mxu0 %v65
  %350 = vmatpush.msra.mxu0 %v62
  %351 = vmatpush.msra.mxu0 %v59
  %352 = vmatpush.msra.mxu0 %v56
  %353 = vmatpush.msra.mxu0 %v53
  %354 = vmatpush.msra.mxu0 %v50
  %355 = vmatpush.msra.mxu0 %v47
  %356 = vmatpush.msra.mxu0 %v44
  %357 = vmatpush.msra.mxu0 %v41
  %358 = vmatpush.msra.mxu0 %v38
  %359 = vmatpush.msra.mxu0 %v35
  %360 = vmatpush.msra.mxu0 %v32
  %361 = vmatmul.f32.gmra.mxu0 %v315
  %v362 = vpop.f32.mrf.mxu0
  %v363 = vadd.f32 %v89, %v362
  %364 = vdwg.mxu0
  %365 = vmatpush.msra.mxu0 %v78
  %366 = vmatpush.msra.mxu0 %v75
  %367 = vmatpush.msra.mxu0 %v72
  %368 = vmatpush.msra.mxu0 %v69
  %369 = vmatpush.msra.mxu0 %v66
  %370 = vmatpush.msra.mxu0 %v63
  %371 = vmatpush.msra.mxu0 %v60
  %372 = vmatpush.msra.mxu0 %v57
  %373 = vmatpush.msra.mxu0 %v54
  %374 = vmatpush.msra.mxu0 %v51
  %375 = vmatpush.msra.mxu0 %v48
  %376 = vmatpush.msra.mxu0 %v45
  %377 = vmatpush.msra.mxu0 %v42
  %378 = vmatpush.msra.mxu0 %v39
  %379 = vmatpush.msra.mxu0 %v36
  %380 = vmatpush.msra.mxu0 %v33
  %381 = vmatmul.f32.gmra.mxu0 %v315
  %v382 = vpop.f32.mrf.mxu0
  %v383 = vadd.f32 %v90, %v382
  %384 = vdwg.mxu0
  %v385 = vadd.f32 %v322, %v343
  %v386 = vxor.u32 %v385, 2147483648
  %v387 = vmul.f32 %v386, 1.442695
  %v388 = vpow.pop %v387
  %v389 = vadd.f32 %v388, 1.0
  %v390 = vrcp.pop %v389
  %v391 = vmul.f32 %v389, %v390
  %v392 = vsub.f32 1.0, %v391
  %v393 = vmul.f32 %v390, %v392
  %v394 = vadd.f32 %v390, %v393
  %vm395 = vweird.f32 %v389
  %vm396 = vweird.f32 %v390
  %vm397 = vmor %vm395, %vm396
  %v398 = vsel %vm397, %v390, %v394
  %v399 = vand.u32 2147483647, %v389
  %vm400 = vcmp.eq.f32.partialorder %v399, 8.507059e+37
  %v401 = vand.u32 %v389, 2147483648
  %v402 = vor.u32 1.1754944e-38, %v401
  %v403 = vsel %vm400, %v402, %v398
  %v404 = vmul.f32 1.0, %v403
  %v405 = vadd.f32 %v323, %v363
  %v406 = vxor.u32 %v405, 2147483648
  %v407 = vmul.f32 %v406, 1.442695
  %v408 = vpow.pop %v407
  %v409 = vadd.f32 %v408, 1.0
  %v410 = vrcp.pop %v409
  %v411 = vmul.f32 %v409, %v410
  %v412 = vsub.f32 1.0, %v411
  %v413 = vmul.f32 %v410, %v412
  %v414 = vadd.f32 %v410, %v413
  %vm415 = vweird.f32 %v409
  %vm416 = vweird.f32 %v410
  %vm417 = vmor %vm415, %vm416
  %v418 = vsel %vm417, %v410, %v414
  %v419 = vand.u32 2147483647, %v409
  %vm420 = vcmp.eq.f32.partialorder %v419, 8.507059e+37
  %v421 = vand.u32 %v409, 2147483648
  %v422 = vor.u32 1.1754944e-38, %v421
  %v423 = vsel %vm420, %v422, %v418
  %v424 = vmul.f32 1.0, %v423
  %v425 = vmul.f32 %v404, %v383
  %v426 = vadd.f32 %v324, %v425
  %v427 = vtanh.pop %v426
  %v428 = vsub.f32 1.0, %v424
  %v429 = vmul.f32 %v428, %v427
  %v430 = vmul.f32 %v424, %v315
  %v431 = vadd.f32 %v429, %v430
  %s432 = scalar_lea.vmem %s5, 16
  %433 = vst [vmem:[%s432] sm:$0xff] %v431
  %s434 = scalar_lea.vmem %s0, 72
  %v435 = vld [vmem:[%s434] sm:$0xff]
  %v436 = vld [vmem:[%s434 + $0x8] sm:$0xff]
  %v437 = vld [vmem:[%s434 + $0x10] sm:$0xff]
  %v438 = vadd.f32 %v435, %v28
  %v439 = vadd.f32 %v436, %v29
  %v440 = vadd.f32 %v437, %v30
  %441 = vmatpush.msra.mxu0 %v76
  %442 = vmatpush.msra.mxu0 %v73
  %443 = vmatpush.msra.mxu0 %v70
  %444 = vmatpush.msra.mxu0 %v67
  %445 = vmatpush.msra.mxu0 %v64
  %446 = vmatpush.msra.mxu0 %v61
  %447 = vmatpush.msra.mxu0 %v58
  %448 = vmatpush.msra.mxu0 %v55
  %449 = vmatpush.msra.mxu0 %v52
  %450 = vmatpush.msra.mxu0 %v49
  %451 = vmatpush.msra.mxu0 %v46
  %452 = vmatpush.msra.mxu0 %v43
  %453 = vmatpush.msra.mxu0 %v40
  %454 = vmatpush.msra.mxu0 %v37
  %455 = vmatpush.msra.mxu0 %v34
  %456 = vmatpush.msra.mxu0 %v31
  %457 = vmatmul.f32.gmra.mxu0 %v431
  %v458 = vpop.f32.mrf.mxu0
  %v459 = vadd.f32 %v88, %v458
  %460 = vdwg.mxu0
  %461 = vmatpush.msra.mxu0 %v77
  %462 = vmatpush.msra.mxu0 %v74
  %463 = vmatpush.msra.mxu0 %v71
  %464 = vmatpush.msra.mxu0 %v68
  %465 = vmatpush.msra.mxu0 %v65
  %466 = vmatpush.msra.mxu0 %v62
  %467 = vmatpush.msra.mxu0 %v59
  %468 = vmatpush.msra.mxu0 %v56
  %469 = vmatpush.msra.mxu0 %v53
  %470 = vmatpush.msra.mxu0 %v50
  %471 = vmatpush.msra.mxu0 %v47
  %472 = vmatpush.msra.mxu0 %v44
  %473 = vmatpush.msra.mxu0 %v41
  %474 = vmatpush.msra.mxu0 %v38
  %475 = vmatpush.msra.mxu0 %v35
  %476 = vmatpush.msra.mxu0 %v32
  %477 = vmatmul.f32.gmra.mxu0 %v431
  %v478 = vpop.f32.mrf.mxu0
  %v479 = vadd.f32 %v89, %v478
  %480 = vdwg.mxu0
  %481 = vmatpush.msra.mxu0 %v78
  %482 = vmatpush.msra.mxu0 %v75
  %483 = vmatpush.msra.mxu0 %v72
  %484 = vmatpush.msra.mxu0 %v69
  %485 = vmatpush.msra.mxu0 %v66
  %486 = vmatpush.msra.mxu0 %v63
  %487 = vmatpush.msra.mxu0 %v60
  %488 = vmatpush.msra.mxu0 %v57
  %489 = vmatpush.msra.mxu0 %v54
  %490 = vmatpush.msra.mxu0 %v51
  %491 = vmatpush.msra.mxu0 %v48
  %492 = vmatpush.msra.mxu0 %v45
  %493 = vmatpush.msra.mxu0 %v42
  %494 = vmatpush.msra.mxu0 %v39
  %495 = vmatpush.msra.mxu0 %v36
  %496 = vmatpush.msra.mxu0 %v33
  %497 = vmatmul.f32.gmra.mxu0 %v431
  %v498 = vpop.f32.mrf.mxu0
  %v499 = vadd.f32 %v90, %v498
  %500 = vdwg.mxu0
  %v501 = vadd.f32 %v438, %v459
  %v502 = vxor.u32 %v501, 2147483648
  %v503 = vmul.f32 %v502, 1.442695
  %v504 = vpow.pop %v503
  %v505 = vadd.f32 %v504, 1.0
  %v506 = vrcp.pop %v505
  %v507 = vmul.f32 %v505, %v506
  %v508 = vsub.f32 1.0, %v507
  %v509 = vmul.f32 %v506, %v508
  %v510 = vadd.f32 %v506, %v509
  %vm511 = vweird.f32 %v505
  %vm512 = vweird.f32 %v506
  %vm513 = vmor %vm511, %vm512
  %v514 = vsel %vm513, %v506, %v510
  %v515 = vand.u32 2147483647, %v505
  %vm516 = vcmp.eq.f32.partialorder %v515, 8.507059e+37
  %v517 = vand.u32 %v505, 2147483648
  %v518 = vor.u32 1.1754944e-38, %v517
  %v519 = vsel %vm516, %v518, %v514
  %v520 = vmul.f32 1.0, %v519
  %v521 = vadd.f32 %v439, %v479
  %v522 = vxor.u32 %v521, 2147483648
  %v523 = vmul.f32 %v522, 1.442695
  %v524 = vpow.pop %v523
  %v525 = vadd.f32 %v524, 1.0
  %v526 = vrcp.pop %v525
  %v527 = vmul.f32 %v525, %v526
  %v528 = vsub.f32 1.0, %v527
  %v529 = vmul.f32 %v526, %v528
  %v530 = vadd.f32 %v526, %v529
  %vm531 = vweird.f32 %v525
  %vm532 = vweird.f32 %v526
  %vm533 = vmor %vm531, %vm532
  %v534 = vsel %vm533, %v526, %v530
  %v535 = vand.u32 2147483647, %v525
  %vm536 = vcmp.eq.f32.partialorder %v535, 8.507059e+37
  %v537 = vand.u32 %v525, 2147483648
  %v538 = vor.u32 1.1754944e-38, %v537
  %v539 = vsel %vm536, %v538, %v534
  %v540 = vmul.f32 1.0, %v539
  %v541 = vmul.f32 %v520, %v499
  %v542 = vadd.f32 %v440, %v541
  %v543 = vtanh.pop %v542
  %v544 = vsub.f32 1.0, %v540
  %v545 = vmul.f32 %v544, %v543
  %v546 = vmul.f32 %v540, %v431
  %v547 = vadd.f32 %v545, %v546
  %s548 = scalar_lea.vmem %s5, 24
  %549 = vst [vmem:[%s548] sm:$0xff] %v547
  %s550 = scalar_lea.vmem %s0, 96
  %v551 = vld [vmem:[%s550] sm:$0xff]
  %v552 = vld [vmem:[%s550 + $0x8] sm:$0xff]
  %v553 = vld [vmem:[%s550 + $0x10] sm:$0xff]
  %v554 = vadd.f32 %v551, %v28
  %v555 = vadd.f32 %v552, %v29
  %v556 = vadd.f32 %v553, %v30
  %557 = vmatpush.msra.mxu0 %v76
  %558 = vmatpush.msra.mxu0 %v73
  %559 = vmatpush.msra.mxu0 %v70
  %560 = vmatpush.msra.mxu0 %v67
  %561 = vmatpush.msra.mxu0 %v64
  %562 = vmatpush.msra.mxu0 %v61
  %563 = vmatpush.msra.mxu0 %v58
  %564 = vmatpush.msra.mxu0 %v55
  %565 = vmatpush.msra.mxu0 %v52
  %566 = vmatpush.msra.mxu0 %v49
  %567 = vmatpush.msra.mxu0 %v46
  %568 = vmatpush.msra.mxu0 %v43
  %569 = vmatpush.msra.mxu0 %v40
  %570 = vmatpush.msra.mxu0 %v37
  %571 = vmatpush.msra.mxu0 %v34
  %572 = vmatpush.msra.mxu0 %v31
  %573 = vmatmul.f32.gmra.mxu0 %v547
  %v574 = vpop.f32.mrf.mxu0
  %v575 = vadd.f32 %v88, %v574
  %576 = vdwg.mxu0
  %577 = vmatpush.msra.mxu0 %v77
  %578 = vmatpush.msra.mxu0 %v74
  %579 = vmatpush.msra.mxu0 %v71
  %580 = vmatpush.msra.mxu0 %v68
  %581 = vmatpush.msra.mxu0 %v65
  %582 = vmatpush.msra.mxu0 %v62
  %583 = vmatpush.msra.mxu0 %v59
  %584 = vmatpush.msra.mxu0 %v56
  %585 = vmatpush.msra.mxu0 %v53
  %586 = vmatpush.msra.mxu0 %v50
  %587 = vmatpush.msra.mxu0 %v47
  %588 = vmatpush.msra.mxu0 %v44
  %589 = vmatpush.msra.mxu0 %v41
  %590 = vmatpush.msra.mxu0 %v38
  %591 = vmatpush.msra.mxu0 %v35
  %592 = vmatpush.msra.mxu0 %v32
  %593 = vmatmul.f32.gmra.mxu0 %v547
  %v594 = vpop.f32.mrf.mxu0
  %v595 = vadd.f32 %v89, %v594
  %596 = vdwg.mxu0
  %597 = vmatpush.msra.mxu0 %v78
  %598 = vmatpush.msra.mxu0 %v75
  %599 = vmatpush.msra.mxu0 %v72
  %600 = vmatpush.msra.mxu0 %v69
  %601 = vmatpush.msra.mxu0 %v66
  %602 = vmatpush.msra.mxu0 %v63
  %603 = vmatpush.msra.mxu0 %v60
  %604 = vmatpush.msra.mxu0 %v57
  %605 = vmatpush.msra.mxu0 %v54
  %606 = vmatpush.msra.mxu0 %v51
  %607 = vmatpush.msra.mxu0 %v48
  %608 = vmatpush.msra.mxu0 %v45
  %609 = vmatpush.msra.mxu0 %v42
  %610 = vmatpush.msra.mxu0 %v39
  %611 = vmatpush.msra.mxu0 %v36
  %612 = vmatpush.msra.mxu0 %v33
  %613 = vmatmul.f32.gmra.mxu0 %v547
  %v614 = vpop.f32.mrf.mxu0
  %v615 = vadd.f32 %v90, %v614
  %616 = vdwg.mxu0
  %v617 = vadd.f32 %v554, %v575
  %v618 = vxor.u32 %v617, 2147483648
  %v619 = vmul.f32 %v618, 1.442695
  %v620 = vpow.pop %v619
  %v621 = vadd.f32 %v620, 1.0
  %v622 = vrcp.pop %v621
  %v623 = vmul.f32 %v621, %v622
  %v624 = vsub.f32 1.0, %v623
  %v625 = vmul.f32 %v622, %v624
  %v626 = vadd.f32 %v622, %v625
  %vm627 = vweird.f32 %v621
  %vm628 = vweird.f32 %v622
  %vm629 = vmor %vm627, %vm628
  %v630 = vsel %vm629, %v622, %v626
  %v631 = vand.u32 2147483647, %v621
  %vm632 = vcmp.eq.f32.partialorder %v631, 8.507059e+37
  %v633 = vand.u32 %v621, 2147483648
  %v634 = vor.u32 1.1754944e-38, %v633
  %v635 = vsel %vm632, %v634, %v630
  %v636 = vmul.f32 1.0, %v635
  %v637 = vadd.f32 %v555, %v595
  %v638 = vxor.u32 %v637, 2147483648
  %v639 = vmul.f32 %v638, 1.442695
  %v640 = vpow.pop %v639
  %v641 = vadd.f32 %v640, 1.0
  %v642 = vrcp.pop %v641
  %v643 = vmul.f32 %v641, %v642
  %v644 = vsub.f32 1.0, %v643
  %v645 = vmul.f32 %v642, %v644
  %v646 = vadd.f32 %v642, %v645
  %vm647 = vweird.f32 %v641
  %vm648 = vweird.f32 %v642
  %vm649 = vmor %vm647, %vm648
  %v650 = vsel %vm649, %v642, %v646
  %v651 = vand.u32 2147483647, %v641
  %vm652 = vcmp.eq.f32.partialorder %v651, 8.507059e+37
  %v653 = vand.u32 %v641, 2147483648
  %v654 = vor.u32 1.1754944e-38, %v653
  %v655 = vsel %vm652, %v654, %v650
  %v656 = vmul.f32 1.0, %v655
  %v657 = vmul.f32 %v636, %v615
  %v658 = vadd.f32 %v556, %v657
  %v659 = vtanh.pop %v658
  %v660 = vsub.f32 1.0, %v656
  %v661 = vmul.f32 %v660, %v659
  %v662 = vmul.f32 %v656, %v547
  %v663 = vadd.f32 %v661, %v662
  %s664 = scalar_lea.vmem %s5, 32
  %665 = vst [vmem:[%s664] sm:$0xff] %v663
  %s666 = scalar_lea.vmem %s0, 120
  %v667 = vld [vmem:[%s666] sm:$0xff]
  %v668 = vld [vmem:[%s666 + $0x8] sm:$0xff]
  %v669 = vld [vmem:[%s666 + $0x10] sm:$0xff]
  %v670 = vadd.f32 %v667, %v28
  %v671 = vadd.f32 %v668, %v29
  %v672 = vadd.f32 %v669, %v30
  %673 = vmatpush.msra.mxu0 %v76
  %674 = vmatpush.msra.mxu0 %v73
  %675 = vmatpush.msra.mxu0 %v70
  %676 = vmatpush.msra.mxu0 %v67
  %677 = vmatpush.msra.mxu0 %v64
  %678 = vmatpush.msra.mxu0 %v61
  %679 = vmatpush.msra.mxu0 %v58
  %680 = vmatpush.msra.mxu0 %v55
  %681 = vmatpush.msra.mxu0 %v52
  %682 = vmatpush.msra.mxu0 %v49
  %683 = vmatpush.msra.mxu0 %v46
  %684 = vmatpush.msra.mxu0 %v43
  %685 = vmatpush.msra.mxu0 %v40
  %686 = vmatpush.msra.mxu0 %v37
  %687 = vmatpush.msra.mxu0 %v34
  %688 = vmatpush.msra.mxu0 %v31
  %689 = vmatmul.f32.gmra.mxu0 %v663
  %v690 = vpop.f32.mrf.mxu0
  %v691 = vadd.f32 %v88, %v690
  %692 = vdwg.mxu0
  %693 = vmatpush.msra.mxu0 %v77
  %694 = vmatpush.msra.mxu0 %v74
  %695 = vmatpush.msra.mxu0 %v71
  %696 = vmatpush.msra.mxu0 %v68
  %697 = vmatpush.msra.mxu0 %v65
  %698 = vmatpush.msra.mxu0 %v62
  %699 = vmatpush.msra.mxu0 %v59
  %700 = vmatpush.msra.mxu0 %v56
  %701 = vmatpush.msra.mxu0 %v53
  %702 = vmatpush.msra.mxu0 %v50
  %703 = vmatpush.msra.mxu0 %v47
  %704 = vmatpush.msra.mxu0 %v44
  %705 = vmatpush.msra.mxu0 %v41
  %706 = vmatpush.msra.mxu0 %v38
  %707 = vmatpush.msra.mxu0 %v35
  %708 = vmatpush.msra.mxu0 %v32
  %709 = vmatmul.f32.gmra.mxu0 %v663
  %v710 = vpop.f32.mrf.mxu0
  %v711 = vadd.f32 %v89, %v710
  %712 = vdwg.mxu0
  %713 = vmatpush.msra.mxu0 %v78
  %714 = vmatpush.msra.mxu0 %v75
  %715 = vmatpush.msra.mxu0 %v72
  %716 = vmatpush.msra.mxu0 %v69
  %717 = vmatpush.msra.mxu0 %v66
  %718 = vmatpush.msra.mxu0 %v63
  %719 = vmatpush.msra.mxu0 %v60
  %720 = vmatpush.msra.mxu0 %v57
  %721 = vmatpush.msra.mxu0 %v54
  %722 = vmatpush.msra.mxu0 %v51
  %723 = vmatpush.msra.mxu0 %v48
  %724 = vmatpush.msra.mxu0 %v45
  %725 = vmatpush.msra.mxu0 %v42
  %726 = vmatpush.msra.mxu0 %v39
  %727 = vmatpush.msra.mxu0 %v36
  %728 = vmatpush.msra.mxu0 %v33
  %729 = vmatmul.f32.gmra.mxu0 %v663
  %v730 = vpop.f32.mrf.mxu0
  %v731 = vadd.f32 %v90, %v730
  %732 = vdwg.mxu0
  %v733 = vadd.f32 %v670, %v691
  %v734 = vxor.u32 %v733, 2147483648
  %v735 = vmul.f32 %v734, 1.442695
  %v736 = vpow.pop %v735
  %v737 = vadd.f32 %v736, 1.0
  %v738 = vrcp.pop %v737
  %v739 = vmul.f32 %v737, %v738
  %v740 = vsub.f32 1.0, %v739
  %v741 = vmul.f32 %v738, %v740
  %v742 = vadd.f32 %v738, %v741
  %vm743 = vweird.f32 %v737
  %vm744 = vweird.f32 %v738
  %vm745 = vmor %vm743, %vm744
  %v746 = vsel %vm745, %v738, %v742
  %v747 = vand.u32 2147483647, %v737
  %vm748 = vcmp.eq.f32.partialorder %v747, 8.507059e+37
  %v749 = vand.u32 %v737, 2147483648
  %v750 = vor.u32 1.1754944e-38, %v749
  %v751 = vsel %vm748, %v750, %v746
  %v752 = vmul.f32 1.0, %v751
  %v753 = vadd.f32 %v671, %v711
  %v754 = vxor.u32 %v753, 2147483648
  %v755 = vmul.f32 %v754, 1.442695
  %v756 = vpow.pop %v755
  %v757 = vadd.f32 %v756, 1.0
  %v758 = vrcp.pop %v757
  %v759 = vmul.f32 %v757, %v758
  %v760 = vsub.f32 1.0, %v759
  %v761 = vmul.f32 %v758, %v760
  %v762 = vadd.f32 %v758, %v761
  %vm763 = vweird.f32 %v757
  %vm764 = vweird.f32 %v758
  %vm765 = vmor %vm763, %vm764
  %v766 = vsel %vm765, %v758, %v762
  %v767 = vand.u32 2147483647, %v757
  %vm768 = vcmp.eq.f32.partialorder %v767, 8.507059e+37
  %v769 = vand.u32 %v757, 2147483648
  %v770 = vor.u32 1.1754944e-38, %v769
  %v771 = vsel %vm768, %v770, %v766
  %v772 = vmul.f32 1.0, %v771
  %v773 = vmul.f32 %v752, %v731
  %v774 = vadd.f32 %v672, %v773
  %v775 = vtanh.pop %v774
  %v776 = vsub.f32 1.0, %v772
  %v777 = vmul.f32 %v776, %v775
  %v778 = vmul.f32 %v772, %v663
  %v779 = vadd.f32 %v777, %v778
  %s780 = scalar_lea.vmem %s5, 40
  %781 = vst [vmem:[%s780] sm:$0xff] %v779
  %s782 = scalar_lea.vmem %s0, 144
  %v783 = vld [vmem:[%s782] sm:$0xff]
  %v784 = vld [vmem:[%s782 + $0x8] sm:$0xff]
  %v785 = vld [vmem:[%s782 + $0x10] sm:$0xff]
  %v786 = vadd.f32 %v783, %v28
  %v787 = vadd.f32 %v784, %v29
  %v788 = vadd.f32 %v785, %v30
  %789 = vmatpush.msra.mxu0 %v76
  %790 = vmatpush.msra.mxu0 %v73
  %791 = vmatpush.msra.mxu0 %v70
  %792 = vmatpush.msra.mxu0 %v67
  %793 = vmatpush.msra.mxu0 %v64
  %794 = vmatpush.msra.mxu0 %v61
  %795 = vmatpush.msra.mxu0 %v58
  %796 = vmatpush.msra.mxu0 %v55
  %797 = vmatpush.msra.mxu0 %v52
  %798 = vmatpush.msra.mxu0 %v49
  %799 = vmatpush.msra.mxu0 %v46
  %800 = vmatpush.msra.mxu0 %v43
  %801 = vmatpush.msra.mxu0 %v40
  %802 = vmatpush.msra.mxu0 %v37
  %803 = vmatpush.msra.mxu0 %v34
  %804 = vmatpush.msra.mxu0 %v31
  %805 = vmatmul.f32.gmra.mxu0 %v779
  %v806 = vpop.f32.mrf.mxu0
  %v807 = vadd.f32 %v88, %v806
  %808 = vdwg.mxu0
  %809 = vmatpush.msra.mxu0 %v77
  %810 = vmatpush.msra.mxu0 %v74
  %811 = vmatpush.msra.mxu0 %v71
  %812 = vmatpush.msra.mxu0 %v68
  %813 = vmatpush.msra.mxu0 %v65
  %814 = vmatpush.msra.mxu0 %v62
  %815 = vmatpush.msra.mxu0 %v59
  %816 = vmatpush.msra.mxu0 %v56
  %817 = vmatpush.msra.mxu0 %v53
  %818 = vmatpush.msra.mxu0 %v50
  %819 = vmatpush.msra.mxu0 %v47
  %820 = vmatpush.msra.mxu0 %v44
  %821 = vmatpush.msra.mxu0 %v41
  %822 = vmatpush.msra.mxu0 %v38
  %823 = vmatpush.msra.mxu0 %v35
  %824 = vmatpush.msra.mxu0 %v32
  %825 = vmatmul.f32.gmra.mxu0 %v779
  %v826 = vpop.f32.mrf.mxu0
  %v827 = vadd.f32 %v89, %v826
  %828 = vdwg.mxu0
  %829 = vmatpush.msra.mxu0 %v78
  %830 = vmatpush.msra.mxu0 %v75
  %831 = vmatpush.msra.mxu0 %v72
  %832 = vmatpush.msra.mxu0 %v69
  %833 = vmatpush.msra.mxu0 %v66
  %834 = vmatpush.msra.mxu0 %v63
  %835 = vmatpush.msra.mxu0 %v60
  %836 = vmatpush.msra.mxu0 %v57
  %837 = vmatpush.msra.mxu0 %v54
  %838 = vmatpush.msra.mxu0 %v51
  %839 = vmatpush.msra.mxu0 %v48
  %840 = vmatpush.msra.mxu0 %v45
  %841 = vmatpush.msra.mxu0 %v42
  %842 = vmatpush.msra.mxu0 %v39
  %843 = vmatpush.msra.mxu0 %v36
  %844 = vmatpush.msra.mxu0 %v33
  %845 = vmatmul.f32.gmra.mxu0 %v779
  %v846 = vpop.f32.mrf.mxu0
  %v847 = vadd.f32 %v90, %v846
  %848 = vdwg.mxu0
  %v849 = vadd.f32 %v786, %v807
  %v850 = vxor.u32 %v849, 2147483648
  %v851 = vmul.f32 %v850, 1.442695
  %v852 = vpow.pop %v851
  %v853 = vadd.f32 %v852, 1.0
  %v854 = vrcp.pop %v853
  %v855 = vmul.f32 %v853, %v854
  %v856 = vsub.f32 1.0, %v855
  %v857 = vmul.f32 %v854, %v856
  %v858 = vadd.f32 %v854, %v857
  %vm859 = vweird.f32 %v853
  %vm860 = vweird.f32 %v854
  %vm861 = vmor %vm859, %vm860
  %v862 = vsel %vm861, %v854, %v858
  %v863 = vand.u32 2147483647, %v853
  %vm864 = vcmp.eq.f32.partialorder %v863, 8.507059e+37
  %v865 = vand.u32 %v853, 2147483648
  %v866 = vor.u32 1.1754944e-38, %v865
  %v867 = vsel %vm864, %v866, %v862
  %v868 = vmul.f32 1.0, %v867
  %v869 = vadd.f32 %v787, %v827
  %v870 = vxor.u32 %v869, 2147483648
  %v871 = vmul.f32 %v870, 1.442695
  %v872 = vpow.pop %v871
  %v873 = vadd.f32 %v872, 1.0
  %v874 = vrcp.pop %v873
  %v875 = vmul.f32 %v873, %v874
  %v876 = vsub.f32 1.0, %v875
  %v877 = vmul.f32 %v874, %v876
  %v878 = vadd.f32 %v874, %v877
  %vm879 = vweird.f32 %v873
  %vm880 = vweird.f32 %v874
  %vm881 = vmor %vm879, %vm880
  %v882 = vsel %vm881, %v874, %v878
  %v883 = vand.u32 2147483647, %v873
  %vm884 = vcmp.eq.f32.partialorder %v883, 8.507059e+37
  %v885 = vand.u32 %v873, 2147483648
  %v886 = vor.u32 1.1754944e-38, %v885
  %v887 = vsel %vm884, %v886, %v882
  %v888 = vmul.f32 1.0, %v887
  %v889 = vmul.f32 %v868, %v847
  %v890 = vadd.f32 %v788, %v889
  %v891 = vtanh.pop %v890
  %v892 = vsub.f32 1.0, %v888
  %v893 = vmul.f32 %v892, %v891
  %v894 = vmul.f32 %v888, %v779
  %v895 = vadd.f32 %v893, %v894
  %s896 = scalar_lea.vmem %s5, 48
  %897 = vst [vmem:[%s896] sm:$0xff] %v895
  %s898 = scalar_lea.vmem %s0, 168
  %v899 = vld [vmem:[%s898] sm:$0xff]
  %v900 = vld [vmem:[%s898 + $0x8] sm:$0xff]
  %v901 = vld [vmem:[%s898 + $0x10] sm:$0xff]
  %v902 = vadd.f32 %v899, %v28
  %v903 = vadd.f32 %v900, %v29
  %v904 = vadd.f32 %v901, %v30
  %905 = vmatpush.msra.mxu0 %v76
  %906 = vmatpush.msra.mxu0 %v73
  %907 = vmatpush.msra.mxu0 %v70
  %908 = vmatpush.msra.mxu0 %v67
  %909 = vmatpush.msra.mxu0 %v64
  %910 = vmatpush.msra.mxu0 %v61
  %911 = vmatpush.msra.mxu0 %v58
  %912 = vmatpush.msra.mxu0 %v55
  %913 = vmatpush.msra.mxu0 %v52
  %914 = vmatpush.msra.mxu0 %v49
  %915 = vmatpush.msra.mxu0 %v46
  %916 = vmatpush.msra.mxu0 %v43
  %917 = vmatpush.msra.mxu0 %v40
  %918 = vmatpush.msra.mxu0 %v37
  %919 = vmatpush.msra.mxu0 %v34
  %920 = vmatpush.msra.mxu0 %v31
  %921 = vmatmul.f32.gmra.mxu0 %v895
  %v922 = vpop.f32.mrf.mxu0
  %v923 = vadd.f32 %v88, %v922
  %924 = vdwg.mxu0
  %925 = vmatpush.msra.mxu0 %v77
  %926 = vmatpush.msra.mxu0 %v74
  %927 = vmatpush.msra.mxu0 %v71
  %928 = vmatpush.msra.mxu0 %v68
  %929 = vmatpush.msra.mxu0 %v65
  %930 = vmatpush.msra.mxu0 %v62
  %931 = vmatpush.msra.mxu0 %v59
  %932 = vmatpush.msra.mxu0 %v56
  %933 = vmatpush.msra.mxu0 %v53
  %934 = vmatpush.msra.mxu0 %v50
  %935 = vmatpush.msra.mxu0 %v47
  %936 = vmatpush.msra.mxu0 %v44
  %937 = vmatpush.msra.mxu0 %v41
  %938 = vmatpush.msra.mxu0 %v38
  %939 = vmatpush.msra.mxu0 %v35
  %940 = vmatpush.msra.mxu0 %v32
  %941 = vmatmul.f32.gmra.mxu0 %v895
  %v942 = vpop.f32.mrf.mxu0
  %v943 = vadd.f32 %v89, %v942
  %944 = vdwg.mxu0
  %945 = vmatpush.msra.mxu0 %v78
  %946 = vmatpush.msra.mxu0 %v75
  %947 = vmatpush.msra.mxu0 %v72
  %948 = vmatpush.msra.mxu0 %v69
  %949 = vmatpush.msra.mxu0 %v66
  %950 = vmatpush.msra.mxu0 %v63
  %951 = vmatpush.msra.mxu0 %v60
  %952 = vmatpush.msra.mxu0 %v57
  %953 = vmatpush.msra.mxu0 %v54
  %954 = vmatpush.msra.mxu0 %v51
  %955 = vmatpush.msra.mxu0 %v48
  %956 = vmatpush.msra.mxu0 %v45
  %957 = vmatpush.msra.mxu0 %v42
  %958 = vmatpush.msra.mxu0 %v39
  %959 = vmatpush.msra.mxu0 %v36
  %960 = vmatpush.msra.mxu0 %v33
  %961 = vmatmul.f32.gmra.mxu0 %v895
  %v962 = vpop.f32.mrf.mxu0
  %v963 = vadd.f32 %v90, %v962
  %964 = vdwg.mxu0
  %v965 = vadd.f32 %v902, %v923
  %v966 = vxor.u32 %v965, 2147483648
  %v967 = vmul.f32 %v966, 1.442695
  %v968 = vpow.pop %v967
  %v969 = vadd.f32 %v968, 1.0
  %v970 = vrcp.pop %v969
  %v971 = vmul.f32 %v969, %v970
  %v972 = vsub.f32 1.0, %v971
  %v973 = vmul.f32 %v970, %v972
  %v974 = vadd.f32 %v970, %v973
  %vm975 = vweird.f32 %v969
  %vm976 = vweird.f32 %v970
  %vm977 = vmor %vm975, %vm976
  %v978 = vsel %vm977, %v970, %v974
  %v979 = vand.u32 2147483647, %v969
  %vm980 = vcmp.eq.f32.partialorder %v979, 8.507059e+37
  %v981 = vand.u32 %v969, 2147483648
  %v982 = vor.u32 1.1754944e-38, %v981
  %v983 = vsel %vm980, %v982, %v978
  %v984 = vmul.f32 1.0, %v983
  %v985 = vadd.f32 %v903, %v943
  %v986 = vxor.u32 %v985, 2147483648
  %v987 = vmul.f32 %v986, 1.442695
  %v988 = vpow.pop %v987
  %v989 = vadd.f32 %v988, 1.0
  %v990 = vrcp.pop %v989
  %v991 = vmul.f32 %v989, %v990
  %v992 = vsub.f32 1.0, %v991
  %v993 = vmul.f32 %v990, %v992
  %v994 = vadd.f32 %v990, %v993
  %vm995 = vweird.f32 %v989
  %vm996 = vweird.f32 %v990
  %vm997 = vmor %vm995, %vm996
  %v998 = vsel %vm997, %v990, %v994
  %v999 = vand.u32 2147483647, %v989
  %vm1000 = vcmp.eq.f32.partialorder %v999, 8.507059e+37
  %v1001 = vand.u32 %v989, 2147483648
  %v1002 = vor.u32 1.1754944e-38, %v1001
  %v1003 = vsel %vm1000, %v1002, %v998
  %v1004 = vmul.f32 1.0, %v1003
  %v1005 = vmul.f32 %v984, %v963
  %v1006 = vadd.f32 %v904, %v1005
  %v1007 = vtanh.pop %v1006
  %v1008 = vsub.f32 1.0, %v1004
  %v1009 = vmul.f32 %v1008, %v1007
  %v1010 = vmul.f32 %v1004, %v895
  %v1011 = vadd.f32 %v1009, %v1010
  %s1012 = scalar_lea.vmem %s5, 56
  %1013 = vst [vmem:[%s1012] sm:$0xff] %v1011
  %1014 = vst [vmem:[#allocation2] sm:$0xff] %v1011
  // Predicated region
  $region26: #{encoder_decoder_forward.10} parent=0 // pred_check
    %p1015 = pneg %p22
  $region27: #{encoder_decoder_forward.10} parent=0 // pred_check_branch
    %1017 = sbr.rel (%p1015) target = $region29
  $region28: #{encoder_decoder_forward.10} parent=0 // pred_region
    %1018 = vst [vmem:[%s6] sm:$0xff] %v1011
  $region29: #{encoder_decoder_forward.10} parent=0 // pred_fallthru
    _
  // Predicated region
  $region30: #{encoder_decoder_forward.10} parent=0 // pred_check
    _
  $region31: #{encoder_decoder_forward.10} parent=0 // pred_check_branch
    %1020 = sbr.rel (0) target = $region33
  $region32: #{encoder_decoder_forward.10} parent=0 // pred_region
    _
  $region33: #{encoder_decoder_forward.10} parent=0 // pred_fallthru
    _
  // Predicated region
  $region34: #{encoder_decoder_forward.10} parent=0 // pred_check
    _
  $region35: #{encoder_decoder_forward.10} parent=0 // pred_check_branch
    %1022 = sbr.rel (0) target = $region37
  $region36: #{encoder_decoder_forward.10} parent=0 // pred_region
    _
  $region37: #{encoder_decoder_forward.10} parent=0 // pred_fallthru
    _
  // Predicated region
  $region38: #{encoder_decoder_forward.10} parent=0 // pred_check
    _
  $region39: #{encoder_decoder_forward.10} parent=0 // pred_check_branch
    %1024 = sbr.rel (0) target = $region41
  $region40: #{encoder_decoder_forward.10} parent=0 // pred_region
    _
  $region41: #{encoder_decoder_forward.10} parent=0 // pred_fallthru
    _
  // Predicated region
  $region42: #{encoder_decoder_forward.10} parent=0 // pred_check
    _
  $region43: #{encoder_decoder_forward.10} parent=0 // pred_check_branch
    %1026 = sbr.rel (0) target = $region45
  $region44: #{encoder_decoder_forward.10} parent=0 // pred_region
    _
  $region45: #{encoder_decoder_forward.10} parent=0 // pred_fallthru
    _

// kernel: encoder_decoder_forward.11
$region0: #{encoder_decoder_forward.11}
  #allocation0 [shape = 'u32[]', space=smem, size = 0x4, offset = 0x4, fixed_abs, tag = 'smem constant byte address 0x4 - core index']
  #allocation1 [shape = 'u32[72,128]{1,0:T(1,128)}', space=vmem, size = 0x9000, scoped, tag = 'internal scratch']
  %s0 = inlined_call_operand.vmem [shape: f32[64,128], index: 0, kind: input, shape index: {}]
  %s1 = inlined_call_operand.vmem [shape: f32[128,128], index: 1, kind: input, shape index: {}]
  %s2 = inlined_call_operand.vmem [shape: f32[1,128], index: 2, kind: input, shape index: {}]
  %s3 = inlined_call_operand.vmem [shape: f32[64,128], index: 3, kind: output, shape index: {}]
  %s4 = sld [smem:[#allocation0]]
  $region22: #{encoder_decoder_forward.11} parent=0
    _
  %s6 = ssub.s32 1, %s4
  %s7 = scalar_select 0, %s6, %s4
  // Predicated region
  $region2: #{encoder_decoder_forward.11} parent=0 // pred_check
    _
  $region3: #{encoder_decoder_forward.11} parent=0 // pred_check_branch
    %9 = sbr.rel (0) target = $region5
  $region4: #{encoder_decoder_forward.11} parent=0 // pred_region
    _
  $region5: #{encoder_decoder_forward.11} parent=0 // pred_fallthru
    _
  // Predicated region
  $region6: #{encoder_decoder_forward.11} parent=0 // pred_check
    _
  $region7: #{encoder_decoder_forward.11} parent=0 // pred_check_branch
    %11 = sbr.rel (0) target = $region9
  $region8: #{encoder_decoder_forward.11} parent=0 // pred_region
    _
  $region9: #{encoder_decoder_forward.11} parent=0 // pred_fallthru
    _
  // Predicated region
  $region10: #{encoder_decoder_forward.11} parent=0 // pred_check
    _
  $region11: #{encoder_decoder_forward.11} parent=0 // pred_check_branch
    %13 = sbr.rel (0) target = $region13
  $region12: #{encoder_decoder_forward.11} parent=0 // pred_region
    _
  $region13: #{encoder_decoder_forward.11} parent=0 // pred_fallthru
    _
  %v14 = vld [vmem:[%s0] sm:$0xff]
  %v15 = vld [vmem:[%s0 + $0x8] sm:$0xff]
  %v16 = vld [vmem:[%s0 + $0x10] sm:$0xff]
  %v17 = vld [vmem:[%s0 + $0x18] sm:$0xff]
  %v18 = vld [vmem:[%s0 + $0x20] sm:$0xff]
  %v19 = vld [vmem:[%s0 + $0x28] sm:$0xff]
  %v20 = vld [vmem:[%s0 + $0x30] sm:$0xff]
  %v21 = vld [vmem:[%s0 + $0x38] sm:$0xff]
  %v22 = vld [vmem:[%s1] sm:$0xff]
  %v23 = vld [vmem:[%s1 + $0x8] sm:$0xff]
  %v24 = vld [vmem:[%s1 + $0x10] sm:$0xff]
  %v25 = vld [vmem:[%s1 + $0x18] sm:$0xff]
  %v26 = vld [vmem:[%s1 + $0x20] sm:$0xff]
  %v27 = vld [vmem:[%s1 + $0x28] sm:$0xff]
  %v28 = vld [vmem:[%s1 + $0x30] sm:$0xff]
  %v29 = vld [vmem:[%s1 + $0x38] sm:$0xff]
  %v30 = vld [vmem:[%s1 + $0x40] sm:$0xff]
  %v31 = vld [vmem:[%s1 + $0x48] sm:$0xff]
  %v32 = vld [vmem:[%s1 + $0x50] sm:$0xff]
  %v33 = vld [vmem:[%s1 + $0x58] sm:$0xff]
  %v34 = vld [vmem:[%s1 + $0x60] sm:$0xff]
  %v35 = vld [vmem:[%s1 + $0x68] sm:$0xff]
  %v36 = vld [vmem:[%s1 + $0x70] sm:$0xff]
  %v37 = vld [vmem:[%s1 + $0x78] sm:$0xff]
  %v38 = vld [vmem:[%s2] sm:$0x1]
  %v40 = vperm.slane %v38, 0
  %42 = vmatpush.msra.mxu0 %v37
  %43 = vmatpush.msra.mxu0 %v36
  %44 = vmatpush.msra.mxu0 %v35
  %45 = vmatpush.msra.mxu0 %v34
  %46 = vmatpush.msra.mxu0 %v33
  %47 = vmatpush.msra.mxu0 %v32
  %48 = vmatpush.msra.mxu0 %v31
  %49 = vmatpush.msra.mxu0 %v30
  %50 = vmatpush.msra.mxu0 %v29
  %51 = vmatpush.msra.mxu0 %v28
  %52 = vmatpush.msra.mxu0 %v27
  %53 = vmatpush.msra.mxu0 %v26
  %54 = vmatpush.msra.mxu0 %v25
  %55 = vmatpush.msra.mxu0 %v24
  %56 = vmatpush.msra.mxu0 %v23
  %57 = vmatpush.msra.mxu0 %v22
  %58 = vmatmul.f32.gmra.mxu0 %v14
  %v59 = vpop.f32.mrf.mxu0
  %v60 = vadd.f32 %v40, %v59
  %61 = vmatmul.f32.gmra.mxu0 %v15
  %v62 = vpop.f32.mrf.mxu0
  %v63 = vadd.f32 %v40, %v62
  %64 = vmatmul.f32.gmra.mxu0 %v16
  %v65 = vpop.f32.mrf.mxu0
  %v66 = vadd.f32 %v40, %v65
  %67 = vmatmul.f32.gmra.mxu0 %v17
  %v68 = vpop.f32.mrf.mxu0
  %v69 = vadd.f32 %v40, %v68
  %70 = vmatmul.f32.gmra.mxu0 %v18
  %v71 = vpop.f32.mrf.mxu0
  %v72 = vadd.f32 %v40, %v71
  %73 = vmatmul.f32.gmra.mxu0 %v19
  %v74 = vpop.f32.mrf.mxu0
  %v75 = vadd.f32 %v40, %v74
  %76 = vmatmul.f32.gmra.mxu0 %v20
  %v77 = vpop.f32.mrf.mxu0
  %v78 = vadd.f32 %v40, %v77
  %79 = vmatmul.f32.gmra.mxu0 %v21
  %v80 = vpop.f32.mrf.mxu0
  %v81 = vadd.f32 %v40, %v80
  %82 = vdwg.mxu0
  %83 = vst [vmem:[%s3] sm:$0xff] %v60
  %84 = vst [vmem:[%s3 + $0x8] sm:$0xff] %v63
  %85 = vst [vmem:[%s3 + $0x10] sm:$0xff] %v66
  %86 = vst [vmem:[%s3 + $0x18] sm:$0xff] %v69
  %87 = vst [vmem:[%s3 + $0x20] sm:$0xff] %v72
  %88 = vst [vmem:[%s3 + $0x28] sm:$0xff] %v75
  %89 = vst [vmem:[%s3 + $0x30] sm:$0xff] %v78
  %90 = vst [vmem:[%s3 + $0x38] sm:$0xff] %v81
  // Predicated region
  $region14: #{encoder_decoder_forward.11} parent=0 // pred_check
    _
  $region15: #{encoder_decoder_forward.11} parent=0 // pred_check_branch
    %92 = sbr.rel (0) target = $region17
  $region16: #{encoder_decoder_forward.11} parent=0 // pred_region
    _
  $region17: #{encoder_decoder_forward.11} parent=0 // pred_fallthru
    _
  // Predicated region
  $region18: #{encoder_decoder_forward.11} parent=0 // pred_check
    _
  $region19: #{encoder_decoder_forward.11} parent=0 // pred_check_branch
    %94 = sbr.rel (0) target = $region21
  $region20: #{encoder_decoder_forward.11} parent=0 // pred_region
    _
  $region21: #{encoder_decoder_forward.11} parent=0 // pred_fallthru
    _

</llo_original>
